<compile_context>
chip_gen: v6e
topology: v6e:2x2x1
jax: 0.10.0
libtpu: 0.0.40
codegen_flags: <defaults>
</compile_context>

<pallas_src>
import functools

import numpy as np

import jax
import jax.numpy as jnp
from jax.experimental import pallas as pl
from jax.experimental.pallas import tpu as pltpu

_EPS = 1e-5
_VMEM_LIMIT = 32 * 1024 * 1024


# ---------------------------------------------------------------------------
# Pallas kernel: matmul + fused (pool / instance-norm / residual / ReLU)
# ---------------------------------------------------------------------------
def _fused_conv_kernel(*refs, norm, has_res, relu, pool, pool_first, eps):
    """One (sample, C-tile): y = x @ w on the MXU (bf16 x bf16 -> f32), then a
    fused epilogue entirely in VMEM:
        shortcut branch : pool -> IN
        main branch     : IN -> ReLU [-> pool]
        conv2           : IN -> (+residual) -> ReLU
    x:(M,K) bf16   w:(K,Ct) bf16   pm:(Mo,M) f32   res:(Mo,Ct) bf16
    """
    it = iter(refs)
    x_ref = next(it)
    w_ref = next(it)
    pm_ref = next(it) if pool else None
    g_ref = b_ref = None
    if norm:
        g_ref = next(it)
        b_ref = next(it)
    r_ref = next(it) if has_res else None
    o_ref = next(it)

    y = jnp.dot(x_ref[...], w_ref[...], preferred_element_type=jnp.float32)

    def do_pool(v):
        # 2x2/stride-2 avg pool as a tiny pooling-matrix matmul on the
        # resident f32 tile (4 non-zeros of 0.25 per output row).
        return jnp.dot(pm_ref[...], v, preferred_element_type=jnp.float32)

    def do_norm(v):
        # GroupNorm(C, C): per-sample, per-channel norm over spatial rows.
        # Single-pass moments + folded affine: v * scale + shift.
        inv_m = 1.0 / v.shape[0]
        s1 = jnp.sum(v, axis=0, keepdims=True)
        s2 = jnp.sum(v * v, axis=0, keepdims=True)
        mean = s1 * inv_m
        var = jnp.maximum(s2 * inv_m - mean * mean, 0.0)
        scale = g_ref[...] * jax.lax.rsqrt(var + eps)
        shift = b_ref[...] - mean * scale
        return v * scale + shift

    if pool and pool_first:
        y = do_pool(y)
    if norm:
        y = do_norm(y)
    if has_res:
        y = y + r_ref[...].astype(jnp.float32)
    if relu:
        y = jnp.maximum(y, 0.0)
    if pool and not pool_first:
        y = do_pool(y)
    o_ref[...] = y.astype(o_ref.dtype)


# ---------------------------------------------------------------------------
# pallas_call wrapper
# ---------------------------------------------------------------------------
def fused_conv_matmul(x, w, *, gamma=None, beta=None, residual=None,
                      pool_mat=None, pool_first=False, relu=False,
                      out_dtype=jnp.float32, eps=_EPS):
    """x:(N,M,K) bf16, w:(K,C) bf16 -> (N,Mo,C) out_dtype.

    Grid = (N, C_tiles); each step owns one full sample's rows and one
    >=128-wide channel tile (instance norm / pool / residual are all exact
    under a channel split).
    """
    N, M, K = x.shape
    Kw, C = w.shape
    assert Kw == K
    norm = gamma is not None
    has_res = residual is not None
    pool = pool_mat is not None
    Mo = pool_mat.shape[0] if pool else M

    # Keep channel tiles >= 256 when possible (full MXU width on v6e/v7x);
    # never tile below the full C when C <= 256.
    ct = 256 if (C > 256 and C % 256 == 0) else C
    n_ct = C // ct

    in_specs = [
        pl.BlockSpec((None, M, K), lambda n, c: (n, 0, 0)),
        pl.BlockSpec((K, ct), lambda n, c: (0, c)),
    ]
    args = [x, w]
    if pool:
        in_specs.append(pl.BlockSpec((Mo, M), lambda n, c: (0, 0)))
        args.append(pool_mat)
    if norm:
        in_specs.append(pl.BlockSpec((1, ct), lambda n, c: (0, c)))
        in_specs.append(pl.BlockSpec((1, ct), lambda n, c: (0, c)))
        args.append(gamma.reshape(1, C).astype(jnp.float32))
        args.append(beta.reshape(1, C).astype(jnp.float32))
    if has_res:
        in_specs.append(pl.BlockSpec((None, Mo, ct), lambda n, c: (n, 0, c)))
        args.append(residual)

    kernel = functools.partial(_fused_conv_kernel, norm=norm, has_res=has_res,
                               relu=relu, pool=pool, pool_first=pool_first,
                               eps=eps)
    return pl.pallas_call(
        kernel,
        out_shape=jax.ShapeDtypeStruct((N, Mo, C), out_dtype),
        grid_spec=pltpu.PrefetchScalarGridSpec(
            num_scalar_prefetch=0,
            grid=(N, n_ct),
            in_specs=in_specs,
            out_specs=pl.BlockSpec((None, Mo, ct), lambda n, c: (n, 0, c)),
        ),
        compiler_params=pltpu.CompilerParams(
            dimension_semantics=("parallel", "parallel"),
            vmem_limit_bytes=_VMEM_LIMIT,
        ),
    )(*args)


# ---------------------------------------------------------------------------
# Host-side helpers (layout glue in XLA; all heavy math in Pallas)
# ---------------------------------------------------------------------------
def _pad_lanes(a, axis):
    """Zero-pad `axis` up to a multiple of 128 (lane-dense K)."""
    k = a.shape[axis]
    kp = ((k + 127) // 128) * 128
    if kp == k:
        return a
    pads = [(0, 0)] * a.ndim
    pads[axis] = (0, kp - k)
    return jnp.pad(a, pads)


def _im2col3x3(x):
    """NHWC -> (N, H*W, 9*C) patches for a 3x3/s1/p1 conv."""
    N, H, W, C = x.shape
    xp = jnp.pad(x, ((0, 0), (1, 1), (1, 1), (0, 0)))
    cols = [xp[:, i:i + H, j:j + W, :] for i in range(3) for j in range(3)]
    patches = jnp.stack(cols, axis=3)               # (N, H, W, 9, C)
    return patches.reshape(N, H * W, 9 * C)


def _pool_matrix(H, W):
    """(Ho*Wo, H*W) matrix with four 0.25 entries per row: 2x2/s2 avg pool as
    a left matmul on the row-major (H*W, C) activation tile."""
    Ho, Wo = H // 2, W // 2
    pm = np.zeros((Ho * Wo, H * W), np.float32)
    for ho in range(Ho):
        for wo in range(Wo):
            r = ho * Wo + wo
            base = (2 * ho) * W + 2 * wo
            for d in (0, 1, W, W + 1):
                pm[r, base + d] = 0.25
    return jnp.asarray(pm)


# ---------------------------------------------------------------------------
# BasicBlock_AP forward
# ---------------------------------------------------------------------------
def basic_block_ap_forward(params, x_nchw, stride=1):
    x = jnp.transpose(x_nchw, (0, 2, 3, 1)).astype(jnp.bfloat16)  # NCHW->NHWC
    N, H, W, in_planes = x.shape
    planes = params["w1"].shape[-1]
    has_shortcut = (stride != 1) or (in_planes != planes)
    pool_main = stride != 1
    pool_mat = _pool_matrix(H, W) if (pool_main or has_shortcut) else None
    Ho, Wo = (H // 2, W // 2) if pool_main else (H, W)

    # out = avgpool( relu( IN1( conv1(x) ) ) )         [pool only if stride!=1]
    p1 = _pad_lanes(_im2col3x3(x), axis=2)
    w1 = _pad_lanes(params["w1"].reshape(9 * in_planes, planes)
                    .astype(jnp.bfloat16), axis=0)
    out = fused_conv_matmul(p1, w1, gamma=params["g1"], beta=params["b1"],
                            relu=True,
                            pool_mat=pool_mat if pool_main else None,
                            pool_first=False, out_dtype=jnp.bfloat16)
    out = out.reshape(N, Ho, Wo, planes)

    # shortcut(x) = IN( avgpool( conv1x1(x) ) )   or identity
    if has_shortcut:
        xm = _pad_lanes(x.reshape(N, H * W, in_planes), axis=2)
        wsc = _pad_lanes(params["wsc"].reshape(in_planes, planes)
                         .astype(jnp.bfloat16), axis=0)
        sc = fused_conv_matmul(xm, wsc, gamma=params["gsc"], beta=params["bsc"],
                               pool_mat=pool_mat, pool_first=True,
                               out_dtype=jnp.bfloat16)
    else:
        sc = x.reshape(N, H * W, planes)

    # out = relu( IN2( conv2(out) ) + shortcut )        (fully fused epilogue)
    p2 = _pad_lanes(_im2col3x3(out), axis=2)
    w2 = _pad_lanes(params["w2"].reshape(9 * planes, planes)
                    .astype(jnp.bfloat16), axis=0)
    y = fused_conv_matmul(p2, w2, gamma=params["g2"], beta=params["b2"],
                          residual=sc, relu=True, out_dtype=jnp.float32)
    return jnp.transpose(y.reshape(N, Ho, Wo, planes), (0, 3, 1, 2))  # ->NCHW


# ---------------------------------------------------------------------------
# Pure-JAX reference (for numerical check)
# ---------------------------------------------------------------------------
def ref_forward(params, x_nchw, stride=1, eps=_EPS):
    dn = ("NHWC", "HWIO", "NHWC")
    x = jnp.transpose(x_nchw, (0, 2, 3, 1))

    def conv(y, w, pad):
        return jax.lax.conv_general_dilated(
            y, w, window_strides=(1, 1), padding=((pad, pad), (pad, pad)),
            dimension_numbers=dn)

    def inorm(y, g, b):
        m = jnp.mean(y, axis=(1, 2), keepdims=True)
        v = jnp.mean(jnp.square(y - m), axis=(1, 2), keepdims=True)
        return (y - m) * jax.lax.rsqrt(v + eps) * g + b

    def pool(y):
        return 0.25 * (y[:, 0::2, 0::2, :] + y[:, 0::2, 1::2, :]
                       + y[:, 1::2, 0::2, :] + y[:, 1::2, 1::2, :])

    in_planes, planes = x.shape[-1], params["w1"].shape[-1]
    out = jax.nn.relu(inorm(conv(x, params["w1"], 1), params["g1"], params["b1"]))
    if stride != 1:
        out = pool(out)
    out = inorm(conv(out, params["w2"], 1), params["g2"], params["b2"])
    if stride != 1 or in_planes != planes:
        sc = inorm(pool(conv(x, params["wsc"], 0)), params["gsc"], params["bsc"])
    else:
        sc = x
    return jnp.transpose(jax.nn.relu(out + sc), (0, 3, 1, 2))


# ---------------------------------------------------------------------------
# Main
# ---------------------------------------------------------------------------
if __name__ == "__main__":
    key = jax.random.PRNGKey(0)
    # Downsampling block: stride=2 exercises avg-pool + 1x1-conv shortcut path.
    batch, in_planes, planes, H, W, stride = 2, 64, 128, 16, 16, 2

    keys = jax.random.split(key, 10)

    def init(k, shape, scale=0.05):
        return scale * jax.random.normal(k, shape, dtype=jnp.float32)

    params = {
        "w1": init(keys[0], (3, 3, in_planes, planes)),
        "g1": 1.0 + 0.1 * jax.random.normal(keys[1], (planes,), jnp.float32),
        "b1": 0.1 * jax.random.normal(keys[2], (planes,), jnp.float32),
        "w2": init(keys[3], (3, 3, planes, planes)),
        "g2": 1.0 + 0.1 * jax.random.normal(keys[4], (planes,), jnp.float32),
        "b2": 0.1 * jax.random.normal(keys[5], (planes,), jnp.float32),
        "wsc": init(keys[6], (1, 1, in_planes, planes)),
        "gsc": 1.0 + 0.1 * jax.random.normal(keys[7], (planes,), jnp.float32),
        "bsc": 0.1 * jax.random.normal(keys[8], (planes,), jnp.float32),
    }
    x = jax.random.normal(keys[9], (batch, in_planes, H, W), dtype=jnp.float32)

    fwd = jax.jit(functools.partial(basic_block_ap_forward, stride=stride))
    out = fwd(params, x)
    jax.block_until_ready(out)

    assert out.shape == (batch, planes, H // 2, W // 2)
    assert out.dtype == jnp.float32

    # Numerical check vs. pure-JAX reference (bf16 MXU operands and bf16
    # intermediates -> small tolerance; accumulation/epilogue stay f32).
    ref = ref_forward(params, x, stride=stride)
    err = float(jnp.max(jnp.abs(out - ref)))
    assert err < 0.15, f"max abs error {err}"

    print("KERNEL_OK")
</pallas_src>

<mosaic_0001>
module attributes {stable_mosaic.version = 11 : i64} {
  func.func @_fused_conv_kernel(%arg0: i32, %arg1: i32, %arg2: memref<1x256x640xbf16, #tpu.memory_space<vmem>>, %arg3: memref<640x128xbf16, #tpu.memory_space<vmem>>, %arg4: memref<64x256xf32, #tpu.memory_space<vmem>>, %arg5: memref<1x128xf32, #tpu.memory_space<vmem>>, %arg6: memref<1x128xf32, #tpu.memory_space<vmem>>, %arg7: memref<1x64x128xbf16, #tpu.memory_space<vmem>>) attributes {dimension_semantics = [#tpu.dimension_semantics<parallel>, #tpu.dimension_semantics<parallel>], iteration_bounds = array<i64: 2, 1>, scalar_prefetch = 0 : i64, scratch_operands = 0 : i64, tpu.core_type = #tpu.core_type<tc>, window_params = [{transform_indices = @transform_0, window_bounds = array<i64: 1, 256, 640>}, {transform_indices = @transform_1, window_bounds = array<i64: 640, 128>}, {pipeline_mode = #tpu.pipeline_mode<synchronous>, transform_indices = @transform_2, window_bounds = array<i64: 64, 256>}, {transform_indices = @transform_3, window_bounds = array<i64: 1, 128>}, {transform_indices = @transform_4, window_bounds = array<i64: 1, 128>}, {transform_indices = @transform_5, window_bounds = array<i64: 1, 64, 128>}]} {
    %c0 = arith.constant 0 : index
    %c0_0 = arith.constant 0 : index
    %c0_1 = arith.constant 0 : index
    %0 = vector.load %arg2[%c0, %c0_0, %c0_1] : memref<1x256x640xbf16, #tpu.memory_space<vmem>>, vector<1x256x640xbf16>
    %1 = vector.shape_cast %0 : vector<1x256x640xbf16> to vector<256x640xbf16>
    %c0_2 = arith.constant 0 : index
    %c0_3 = arith.constant 0 : index
    %2 = vector.load %arg3[%c0_2, %c0_3] : memref<640x128xbf16, #tpu.memory_space<vmem>>, vector<640x128xbf16>
    %cst = arith.constant dense<0.000000e+00> : vector<256x128xf32>
    %3 = tpu.matmul %1, %2, %cst {dimension_numbers = #tpu.dot_dimension_numbers<[1], [0], [0], [1], [0, 0, 1, 1], [], []>} : vector<256x640xbf16>, vector<640x128xbf16>, vector<256x128xf32> -> vector<256x128xf32>
    %cst_4 = arith.constant dense<0.000000e+00> : vector<128xf32>
    %4 = vector.multi_reduction <add>, %3, %cst_4 [0] : vector<256x128xf32> to vector<128xf32>
    %5 = vector.shape_cast %4 : vector<128xf32> to vector<1x128xf32>
    %6 = arith.mulf %3, %3 : vector<256x128xf32>
    %cst_5 = arith.constant dense<0.000000e+00> : vector<128xf32>
    %7 = vector.multi_reduction <add>, %6, %cst_5 [0] : vector<256x128xf32> to vector<128xf32>
    %8 = vector.shape_cast %7 : vector<128xf32> to vector<1x128xf32>
    %cst_6 = arith.constant 3.906250e-03 : f32
    %9 = vector.broadcast %cst_6 : f32 to vector<1x128xf32>
    %10 = arith.mulf %5, %9 : vector<1x128xf32>
    %cst_7 = arith.constant 3.906250e-03 : f32
    %11 = vector.broadcast %cst_7 : f32 to vector<1x128xf32>
    %12 = arith.mulf %8, %11 : vector<1x128xf32>
    %13 = arith.mulf %10, %10 : vector<1x128xf32>
    %14 = arith.subf %12, %13 : vector<1x128xf32>
    %cst_8 = arith.constant 0.000000e+00 : f32
    %15 = vector.broadcast %cst_8 : f32 to vector<1x128xf32>
    %16 = arith.maximumf %14, %15 : vector<1x128xf32>
    %c0_9 = arith.constant 0 : index
    %c0_10 = arith.constant 0 : index
    %17 = vector.load %arg5[%c0_9, %c0_10] : memref<1x128xf32, #tpu.memory_space<vmem>>, vector<1x128xf32>
    %cst_11 = arith.constant 9.99999974E-6 : f32
    %18 = vector.broadcast %cst_11 : f32 to vector<1x128xf32>
    %19 = arith.addf %16, %18 : vector<1x128xf32>
    %20 = math.rsqrt %19 : vector<1x128xf32>
    %21 = arith.mulf %17, %20 : vector<1x128xf32>
    %c0_12 = arith.constant 0 : index
    %c0_13 = arith.constant 0 : index
    %22 = vector.load %arg6[%c0_12, %c0_13] : memref<1x128xf32, #tpu.memory_space<vmem>>, vector<1x128xf32>
    %23 = arith.mulf %10, %21 : vector<1x128xf32>
    %24 = arith.subf %22, %23 : vector<1x128xf32>
    %25 = vector.broadcast %21 : vector<1x128xf32> to vector<256x128xf32>
    %26 = arith.mulf %3, %25 : vector<256x128xf32>
    %27 = vector.broadcast %24 : vector<1x128xf32> to vector<256x128xf32>
    %28 = arith.addf %26, %27 : vector<256x128xf32>
    %cst_14 = arith.constant 0.000000e+00 : f32
    %29 = vector.broadcast %cst_14 : f32 to vector<256x128xf32>
    %30 = arith.maximumf %28, %29 : vector<256x128xf32>
    %c0_15 = arith.constant 0 : index
    %c0_16 = arith.constant 0 : index
    %31 = vector.load %arg4[%c0_15, %c0_16] : memref<64x256xf32, #tpu.memory_space<vmem>>, vector<64x256xf32>
    %cst_17 = arith.constant dense<0.000000e+00> : vector<64x128xf32>
    %32 = tpu.matmul %31, %30, %cst_17 {dimension_numbers = #tpu.dot_dimension_numbers<[1], [0], [0], [1], [0, 0, 1, 1], [], []>} : vector<64x256xf32>, vector<256x128xf32>, vector<64x128xf32> -> vector<64x128xf32>
    %33 = arith.truncf %32 : vector<64x128xf32> to vector<64x128xbf16>
    %c0_18 = arith.constant 0 : index
    %c0_19 = arith.constant 0 : index
    %c0_20 = arith.constant 0 : index
    %34 = vector.load %arg7[%c0_18, %c0_19, %c0_20] : memref<1x64x128xbf16, #tpu.memory_space<vmem>>, vector<1x64x128xbf16>
    %35 = vector.shape_cast %34 : vector<1x64x128xbf16> to vector<64x128xbf16>
    %36 = vector.shape_cast %33 : vector<64x128xbf16> to vector<1x64x128xbf16>
    tpu.vector_store %arg7[%c0_18, %c0_19, %c0_20], %36 {strides = array<i32>} : memref<1x64x128xbf16, #tpu.memory_space<vmem>>, vector<1x64x128xbf16>,
    return
  }
  func.func @transform_0(%arg0: i32, %arg1: i32) -> (i32, i32, i32) {
    %c0_i32 = arith.constant 0 : i32
    %c0_i32_0 = arith.constant 0 : i32
    %c0_i32_1 = arith.constant 0 : i32
    return %arg0, %c0_i32, %c0_i32_0 : i32, i32, i32
  }
  func.func @transform_1(%arg0: i32, %arg1: i32) -> (i32, i32) {
    %c0_i32 = arith.constant 0 : i32
    %c0_i32_0 = arith.constant 0 : i32
    return %c0_i32, %arg1 : i32, i32
  }
  func.func @transform_2(%arg0: i32, %arg1: i32) -> (i32, i32) {
    %c0_i32 = arith.constant 0 : i32
    %c0_i32_0 = arith.constant 0 : i32
    %c0_i32_1 = arith.constant 0 : i32
    return %c0_i32, %c0_i32_0 : i32, i32
  }
  func.func @transform_3(%arg0: i32, %arg1: i32) -> (i32, i32) {
    %c0_i32 = arith.constant 0 : i32
    %c0_i32_0 = arith.constant 0 : i32
    return %c0_i32, %arg1 : i32, i32
  }
  func.func @transform_4(%arg0: i32, %arg1: i32) -> (i32, i32) {
    %c0_i32 = arith.constant 0 : i32
    %c0_i32_0 = arith.constant 0 : i32
    return %c0_i32, %arg1 : i32, i32
  }
  func.func @transform_5(%arg0: i32, %arg1: i32) -> (i32, i32, i32) {
    %c0_i32 = arith.constant 0 : i32
    %c0_i32_0 = arith.constant 0 : i32
    return %arg0, %c0_i32, %arg1 : i32, i32, i32
  }
}

module attributes {stable_mosaic.version = 11 : i64} {
  func.func @_fused_conv_kernel(%arg0: i32, %arg1: i32, %arg2: memref<1x256x128xbf16, #tpu.memory_space<vmem>>, %arg3: memref<128x128xbf16, #tpu.memory_space<vmem>>, %arg4: memref<64x256xf32, #tpu.memory_space<vmem>>, %arg5: memref<1x128xf32, #tpu.memory_space<vmem>>, %arg6: memref<1x128xf32, #tpu.memory_space<vmem>>, %arg7: memref<1x64x128xbf16, #tpu.memory_space<vmem>>) attributes {dimension_semantics = [#tpu.dimension_semantics<parallel>, #tpu.dimension_semantics<parallel>], iteration_bounds = array<i64: 2, 1>, scalar_prefetch = 0 : i64, scratch_operands = 0 : i64, tpu.core_type = #tpu.core_type<tc>, window_params = [{transform_indices = @transform_0, window_bounds = array<i64: 1, 256, 128>}, {transform_indices = @transform_1, window_bounds = array<i64: 128, 128>}, {pipeline_mode = #tpu.pipeline_mode<synchronous>, transform_indices = @transform_2, window_bounds = array<i64: 64, 256>}, {transform_indices = @transform_3, window_bounds = array<i64: 1, 128>}, {transform_indices = @transform_4, window_bounds = array<i64: 1, 128>}, {transform_indices = @transform_5, window_bounds = array<i64: 1, 64, 128>}]} {
    %c0 = arith.constant 0 : index
    %c0_0 = arith.constant 0 : index
    %c0_1 = arith.constant 0 : index
    %0 = vector.load %arg2[%c0, %c0_0, %c0_1] : memref<1x256x128xbf16, #tpu.memory_space<vmem>>, vector<1x256x128xbf16>
    %1 = vector.shape_cast %0 : vector<1x256x128xbf16> to vector<256x128xbf16>
    %c0_2 = arith.constant 0 : index
    %c0_3 = arith.constant 0 : index
    %2 = vector.load %arg3[%c0_2, %c0_3] : memref<128x128xbf16, #tpu.memory_space<vmem>>, vector<128x128xbf16>
    %cst = arith.constant dense<0.000000e+00> : vector<256x128xf32>
    %3 = tpu.matmul %1, %2, %cst {dimension_numbers = #tpu.dot_dimension_numbers<[1], [0], [0], [1], [0, 0, 1, 1], [], []>} : vector<256x128xbf16>, vector<128x128xbf16>, vector<256x128xf32> -> vector<256x128xf32>
    %c0_4 = arith.constant 0 : index
    %c0_5 = arith.constant 0 : index
    %4 = vector.load %arg4[%c0_4, %c0_5] : memref<64x256xf32, #tpu.memory_space<vmem>>, vector<64x256xf32>
    %cst_6 = arith.constant dense<0.000000e+00> : vector<64x128xf32>
    %5 = tpu.matmul %4, %3, %cst_6 {dimension_numbers = #tpu.dot_dimension_numbers<[1], [0], [0], [1], [0, 0, 1, 1], [], []>} : vector<64x256xf32>, vector<256x128xf32>, vector<64x128xf32> -> vector<64x128xf32>
    %cst_7 = arith.constant dense<0.000000e+00> : vector<128xf32>
    %6 = vector.multi_reduction <add>, %5, %cst_7 [0] : vector<64x128xf32> to vector<128xf32>
    %7 = vector.shape_cast %6 : vector<128xf32> to vector<1x128xf32>
    %8 = arith.mulf %5, %5 : vector<64x128xf32>
    %cst_8 = arith.constant dense<0.000000e+00> : vector<128xf32>
    %9 = vector.multi_reduction <add>, %8, %cst_8 [0] : vector<64x128xf32> to vector<128xf32>
    %10 = vector.shape_cast %9 : vector<128xf32> to vector<1x128xf32>
    %cst_9 = arith.constant 1.562500e-02 : f32
    %11 = vector.broadcast %cst_9 : f32 to vector<1x128xf32>
    %12 = arith.mulf %7, %11 : vector<1x128xf32>
    %cst_10 = arith.constant 1.562500e-02 : f32
    %13 = vector.broadcast %cst_10 : f32 to vector<1x128xf32>
    %14 = arith.mulf %10, %13 : vector<1x128xf32>
    %15 = arith.mulf %12, %12 : vector<1x128xf32>
    %16 = arith.subf %14, %15 : vector<1x128xf32>
    %cst_11 = arith.constant 0.000000e+00 : f32
    %17 = vector.broadcast %cst_11 : f32 to vector<1x128xf32>
    %18 = arith.maximumf %16, %17 : vector<1x128xf32>
    %c0_12 = arith.constant 0 : index
    %c0_13 = arith.constant 0 : index
    %19 = vector.load %arg5[%c0_12, %c0_13] : memref<1x128xf32, #tpu.memory_space<vmem>>, vector<1x128xf32>
    %cst_14 = arith.constant 9.99999974E-6 : f32
    %20 = vector.broadcast %cst_14 : f32 to vector<1x128xf32>
    %21 = arith.addf %18, %20 : vector<1x128xf32>
    %22 = math.rsqrt %21 : vector<1x128xf32>
    %23 = arith.mulf %19, %22 : vector<1x128xf32>
    %c0_15 = arith.constant 0 : index
    %c0_16 = arith.constant 0 : index
    %24 = vector.load %arg6[%c0_15, %c0_16] : memref<1x128xf32, #tpu.memory_space<vmem>>, vector<1x128xf32>
    %25 = arith.mulf %12, %23 : vector<1x128xf32>
    %26 = arith.subf %24, %25 : vector<1x128xf32>
    %27 = vector.broadcast %23 : vector<1x128xf32> to vector<64x128xf32>
    %28 = arith.mulf %5, %27 : vector<64x128xf32>
    %29 = vector.broadcast %26 : vector<1x128xf32> to vector<64x128xf32>
    %30 = arith.addf %28, %29 : vector<64x128xf32>
    %31 = arith.truncf %30 : vector<64x128xf32> to vector<64x128xbf16>
    %c0_17 = arith.constant 0 : index
    %c0_18 = arith.constant 0 : index
    %c0_19 = arith.constant 0 : index
    %32 = vector.load %arg7[%c0_17, %c0_18, %c0_19] : memref<1x64x128xbf16, #tpu.memory_space<vmem>>, vector<1x64x128xbf16>
    %33 = vector.shape_cast %32 : vector<1x64x128xbf16> to vector<64x128xbf16>
    %34 = vector.shape_cast %31 : vector<64x128xbf16> to vector<1x64x128xbf16>
    tpu.vector_store %arg7[%c0_17, %c0_18, %c0_19], %34 {strides = array<i32>} : memref<1x64x128xbf16, #tpu.memory_space<vmem>>, vector<1x64x128xbf16>,
    return
  }
  func.func @transform_0(%arg0: i32, %arg1: i32) -> (i32, i32, i32) {
    %c0_i32 = arith.constant 0 : i32
    %c0_i32_0 = arith.constant 0 : i32
    %c0_i32_1 = arith.constant 0 : i32
    return %arg0, %c0_i32, %c0_i32_0 : i32, i32, i32
  }
  func.func @transform_1(%arg0: i32, %arg1: i32) -> (i32, i32) {
    %c0_i32 = arith.constant 0 : i32
    %c0_i32_0 = arith.constant 0 : i32
    return %c0_i32, %arg1 : i32, i32
  }
  func.func @transform_2(%arg0: i32, %arg1: i32) -> (i32, i32) {
    %c0_i32 = arith.constant 0 : i32
    %c0_i32_0 = arith.constant 0 : i32
    %c0_i32_1 = arith.constant 0 : i32
    return %c0_i32, %c0_i32_0 : i32, i32
  }
  func.func @transform_3(%arg0: i32, %arg1: i32) -> (i32, i32) {
    %c0_i32 = arith.constant 0 : i32
    %c0_i32_0 = arith.constant 0 : i32
    return %c0_i32, %arg1 : i32, i32
  }
  func.func @transform_4(%arg0: i32, %arg1: i32) -> (i32, i32) {
    %c0_i32 = arith.constant 0 : i32
    %c0_i32_0 = arith.constant 0 : i32
    return %c0_i32, %arg1 : i32, i32
  }
  func.func @transform_5(%arg0: i32, %arg1: i32) -> (i32, i32, i32) {
    %c0_i32 = arith.constant 0 : i32
    %c0_i32_0 = arith.constant 0 : i32
    return %arg0, %c0_i32, %arg1 : i32, i32, i32
  }
}

module attributes {stable_mosaic.version = 11 : i64} {
  func.func @_fused_conv_kernel(%arg0: i32, %arg1: i32, %arg2: memref<1x64x1152xbf16, #tpu.memory_space<vmem>>, %arg3: memref<1152x128xbf16, #tpu.memory_space<vmem>>, %arg4: memref<1x128xf32, #tpu.memory_space<vmem>>, %arg5: memref<1x128xf32, #tpu.memory_space<vmem>>, %arg6: memref<1x64x128xbf16, #tpu.memory_space<vmem>>, %arg7: memref<1x64x128xf32, #tpu.memory_space<vmem>>) attributes {dimension_semantics = [#tpu.dimension_semantics<parallel>, #tpu.dimension_semantics<parallel>], iteration_bounds = array<i64: 2, 1>, scalar_prefetch = 0 : i64, scratch_operands = 0 : i64, tpu.core_type = #tpu.core_type<tc>, window_params = [{transform_indices = @transform_0, window_bounds = array<i64: 1, 64, 1152>}, {transform_indices = @transform_1, window_bounds = array<i64: 1152, 128>}, {transform_indices = @transform_2, window_bounds = array<i64: 1, 128>}, {transform_indices = @transform_3, window_bounds = array<i64: 1, 128>}, {transform_indices = @transform_4, window_bounds = array<i64: 1, 64, 128>}, {transform_indices = @transform_5, window_bounds = array<i64: 1, 64, 128>}]} {
    %c0 = arith.constant 0 : index
    %c0_0 = arith.constant 0 : index
    %c0_1 = arith.constant 0 : index
    %0 = vector.load %arg2[%c0, %c0_0, %c0_1] : memref<1x64x1152xbf16, #tpu.memory_space<vmem>>, vector<1x64x1152xbf16>
    %1 = vector.shape_cast %0 : vector<1x64x1152xbf16> to vector<64x1152xbf16>
    %c0_2 = arith.constant 0 : index
    %c0_3 = arith.constant 0 : index
    %2 = vector.load %arg3[%c0_2, %c0_3] : memref<1152x128xbf16, #tpu.memory_space<vmem>>, vector<1152x128xbf16>
    %cst = arith.constant dense<0.000000e+00> : vector<64x128xf32>
    %3 = tpu.matmul %1, %2, %cst {dimension_numbers = #tpu.dot_dimension_numbers<[1], [0], [0], [1], [0, 0, 1, 1], [], []>} : vector<64x1152xbf16>, vector<1152x128xbf16>, vector<64x128xf32> -> vector<64x128xf32>
    %cst_4 = arith.constant dense<0.000000e+00> : vector<128xf32>
    %4 = vector.multi_reduction <add>, %3, %cst_4 [0] : vector<64x128xf32> to vector<128xf32>
    %5 = vector.shape_cast %4 : vector<128xf32> to vector<1x128xf32>
    %6 = arith.mulf %3, %3 : vector<64x128xf32>
    %cst_5 = arith.constant dense<0.000000e+00> : vector<128xf32>
    %7 = vector.multi_reduction <add>, %6, %cst_5 [0] : vector<64x128xf32> to vector<128xf32>
    %8 = vector.shape_cast %7 : vector<128xf32> to vector<1x128xf32>
    %cst_6 = arith.constant 1.562500e-02 : f32
    %9 = vector.broadcast %cst_6 : f32 to vector<1x128xf32>
    %10 = arith.mulf %5, %9 : vector<1x128xf32>
    %cst_7 = arith.constant 1.562500e-02 : f32
    %11 = vector.broadcast %cst_7 : f32 to vector<1x128xf32>
    %12 = arith.mulf %8, %11 : vector<1x128xf32>
    %13 = arith.mulf %10, %10 : vector<1x128xf32>
    %14 = arith.subf %12, %13 : vector<1x128xf32>
    %cst_8 = arith.constant 0.000000e+00 : f32
    %15 = vector.broadcast %cst_8 : f32 to vector<1x128xf32>
    %16 = arith.maximumf %14, %15 : vector<1x128xf32>
    %c0_9 = arith.constant 0 : index
    %c0_10 = arith.constant 0 : index
    %17 = vector.load %arg4[%c0_9, %c0_10] : memref<1x128xf32, #tpu.memory_space<vmem>>, vector<1x128xf32>
    %cst_11 = arith.constant 9.99999974E-6 : f32
    %18 = vector.broadcast %cst_11 : f32 to vector<1x128xf32>
    %19 = arith.addf %16, %18 : vector<1x128xf32>
    %20 = math.rsqrt %19 : vector<1x128xf32>
    %21 = arith.mulf %17, %20 : vector<1x128xf32>
    %c0_12 = arith.constant 0 : index
    %c0_13 = arith.constant 0 : index
    %22 = vector.load %arg5[%c0_12, %c0_13] : memref<1x128xf32, #tpu.memory_space<vmem>>, vector<1x128xf32>
    %23 = arith.mulf %10, %21 : vector<1x128xf32>
    %24 = arith.subf %22, %23 : vector<1x128xf32>
    %25 = vector.broadcast %21 : vector<1x128xf32> to vector<64x128xf32>
    %26 = arith.mulf %3, %25 : vector<64x128xf32>
    %27 = vector.broadcast %24 : vector<1x128xf32> to vector<64x128xf32>
    %28 = arith.addf %26, %27 : vector<64x128xf32>
    %c0_14 = arith.constant 0 : index
    %c0_15 = arith.constant 0 : index
    %c0_16 = arith.constant 0 : index
    %29 = vector.load %arg6[%c0_14, %c0_15, %c0_16] : memref<1x64x128xbf16, #tpu.memory_space<vmem>>, vector<1x64x128xbf16>
    %30 = vector.shape_cast %29 : vector<1x64x128xbf16> to vector<64x128xbf16>
    %31 = arith.extf %30 : vector<64x128xbf16> to vector<64x128xf32>
    %32 = arith.addf %28, %31 : vector<64x128xf32>
    %cst_17 = arith.constant 0.000000e+00 : f32
    %33 = vector.broadcast %cst_17 : f32 to vector<64x128xf32>
    %34 = arith.maximumf %32, %33 : vector<64x128xf32>
    %c0_18 = arith.constant 0 : index
    %c0_19 = arith.constant 0 : index
    %c0_20 = arith.constant 0 : index
    %35 = vector.load %arg7[%c0_18, %c0_19, %c0_20] : memref<1x64x128xf32, #tpu.memory_space<vmem>>, vector<1x64x128xf32>
    %36 = vector.shape_cast %35 : vector<1x64x128xf32> to vector<64x128xf32>
    %37 = vector.shape_cast %34 : vector<64x128xf32> to vector<1x64x128xf32>
    tpu.vector_store %arg7[%c0_18, %c0_19, %c0_20], %37 {strides = array<i32>} : memref<1x64x128xf32, #tpu.memory_space<vmem>>, vector<1x64x128xf32>,
    return
  }
  func.func @transform_0(%arg0: i32, %arg1: i32) -> (i32, i32, i32) {
    %c0_i32 = arith.constant 0 : i32
    %c0_i32_0 = arith.constant 0 : i32
    %c0_i32_1 = arith.constant 0 : i32
    return %arg0, %c0_i32, %c0_i32_0 : i32, i32, i32
  }
  func.func @transform_1(%arg0: i32, %arg1: i32) -> (i32, i32) {
    %c0_i32 = arith.constant 0 : i32
    %c0_i32_0 = arith.constant 0 : i32
    return %c0_i32, %arg1 : i32, i32
  }
  func.func @transform_2(%arg0: i32, %arg1: i32) -> (i32, i32) {
    %c0_i32 = arith.constant 0 : i32
    %c0_i32_0 = arith.constant 0 : i32
    return %c0_i32, %arg1 : i32, i32
  }
  func.func @transform_3(%arg0: i32, %arg1: i32) -> (i32, i32) {
    %c0_i32 = arith.constant 0 : i32
    %c0_i32_0 = arith.constant 0 : i32
    return %c0_i32, %arg1 : i32, i32
  }
  func.func @transform_4(%arg0: i32, %arg1: i32) -> (i32, i32, i32) {
    %c0_i32 = arith.constant 0 : i32
    %c0_i32_0 = arith.constant 0 : i32
    return %arg0, %c0_i32, %arg1 : i32, i32, i32
  }
  func.func @transform_5(%arg0: i32, %arg1: i32) -> (i32, i32, i32) {
    %c0_i32 = arith.constant 0 : i32
    %c0_i32_0 = arith.constant 0 : i32
    return %arg0, %c0_i32, %arg1 : i32, i32, i32
  }
}

</mosaic_0001>

<llo_original>
// kernel: basic_block_ap_forward.3
$region0: #{basic_block_ap_forward.3}
  #allocation0 [shape = 'u32[]', space=smem, size = 0x4, offset = 0x4, fixed_abs, tag = 'smem constant byte address 0x4 - core index']
  #allocation1 [shape = 'u32[144,128]{1,0:T(1,128)}', space=vmem, size = 0x12000, scoped, tag = 'internal scratch']
  %s0 = inlined_call_operand.vmem [shape: bf16[2,256,640], index: 0, kind: input, shape index: {}]
  %s1 = inlined_call_operand.vmem [shape: bf16[640,128], index: 1, kind: input, shape index: {}]
  %s2 = inlined_call_operand.vmem [shape: f32[64,256], index: 2, kind: input, shape index: {}]
  %s3 = inlined_call_operand.vmem [shape: f32[1,128], index: 3, kind: input, shape index: {}]
  %s4 = inlined_call_operand.vmem [shape: f32[1,128], index: 4, kind: input, shape index: {}]
  %s5 = inlined_call_operand.vmem [shape: bf16[2,64,128], index: 5, kind: output, shape index: {}]
  %s6 = sld [smem:[#allocation0]]
  $region53: #{basic_block_ap_forward.3} parent=0
    _
  %s8 = ssub.s32 1, %s6
  %s9 = scalar_select 0, %s8, %s6
  loop: start=0, step=1, limit=4
  $region2: #{basic_block_ap_forward.3} parent=0 // loop_pre_header
    _
  $region3: #{basic_block_ap_forward.3} parent=0 // loop_header
    %s11 = sphi 0, %s15
    %p12 = scmp.ge.s32.totalorder %s11, 4
    %s18 = sphi 0, %s30
    %s19 = sphi 0, %s26
    %s20 = sphi 0, %s18
    %s21 = sphi 0, %s19
    %s22 = sphi 0, %s20
    %s23 = sphi 0, %s21
    %s33 = sphi 0, %s35
    %s36 = sphi 0, %s33
    %s37 = sphi 0, %s36
    %s53 = sphi 0, %s37
    %s59 = sphi 0, %s61
    %s62 = sphi 0, %s59
    %s63 = sphi 0, %s62
    %s79 = sphi 0, %s63
    %s83 = sphi 0, %s83
    %s85 = sphi 0, %s83
    %s86 = sphi 0, %s85
    %s100 = sphi 0, %s86
    %s106 = sphi 0, %s108
    %s109 = sphi 0, %s106
    %s110 = sphi 0, %s109
    %s126 = sphi 0, %s110
    %s132 = sphi 0, %s134
    %s135 = sphi 0, %s132
    %s136 = sphi 0, %s135
    %s152 = sphi 0, %s136
    %s160 = sphi 0, %s162
    %s163 = sphi 0, %s160
    %s164 = sphi 0, %s163
    %s180 = sphi 0, %s164
  $region4: #{basic_block_ap_forward.3} parent=0 // loop_header_branch
    %14 = sbr.rel (%p12) target = $region8
  $region5: #{basic_block_ap_forward.3} parent=0 // loop_body
    %s16 = ssub.s32 %s11, 1
    %s17 = ssub.s32 %s11, 2
    %s24 = sadd.s32 1, %s19
    %p25 = scmp.ge.s32.totalorder %s24, 1
    %s26 = scalar_select %p25, 0, %s24
    %s27 = sadd.s32 1, %s18
    %s28 = scalar_select %p25, %s27, %s18
    %p29 = scmp.ge.s32.totalorder %s28, 2
    %s30 = scalar_select %p29, 0, %s28
    %s31 = ssub.s32 %s18, %s30
    %p32 = scmp.eq.s32.totalorder %s31, 0
    %s34 = sadd.s32 %s33, 1
    %s35 = scalar_select %p32, %s33, %s34
    %p38 = pneg %p32
    %p39 = scmp.eq.s32.totalorder %s11, 1
    %p40 = por %p38, %p39
    %p41 = scmp.ne.s32.totalorder %s33, %s36
    %p42 = scmp.eq.s32.totalorder %s11, 0
    %p43 = por %p41, %p42
    %p44 = scmp.ne.s32.totalorder %s33, %s36
    %p45 = scmp.eq.s32.totalorder %s16, 1
    %p46 = por %p44, %p45
    %p47 = scmp.ne.s32.totalorder %s36, %s37
    %p48 = scmp.eq.s32.totalorder %s16, 0
    %p49 = por %p47, %p48
    %p50 = scmp.ne.s32.totalorder %s36, %s37
    %p51 = scmp.eq.s32.totalorder %s17, 1
    %p52 = por %p50, %p51
    %p54 = scmp.ne.s32.totalorder %s37, %s53
    %p55 = scmp.eq.s32.totalorder %s17, 0
    %p56 = por %p54, %p55
    %s57 = ssub.s32 %s19, %s26
    %p58 = scmp.eq.s32.totalorder %s57, 0
    %s60 = sadd.s32 %s59, 1
    %s61 = scalar_select %p58, %s59, %s60
    %p64 = pneg %p58
    %p65 = scmp.eq.s32.totalorder %s11, 1
    %p66 = por %p64, %p65
    %p67 = scmp.ne.s32.totalorder %s59, %s62
    %p68 = scmp.eq.s32.totalorder %s11, 0
    %p69 = por %p67, %p68
    %p70 = scmp.ne.s32.totalorder %s59, %s62
    %p71 = scmp.eq.s32.totalorder %s16, 1
    %p72 = por %p70, %p71
    %p73 = scmp.ne.s32.totalorder %s62, %s63
    %p74 = scmp.eq.s32.totalorder %s16, 0
    %p75 = por %p73, %p74
    %p76 = scmp.ne.s32.totalorder %s62, %s63
    %p77 = scmp.eq.s32.totalorder %s17, 1
    %p78 = por %p76, %p77
    %p80 = scmp.ne.s32.totalorder %s63, %s79
    %p81 = scmp.eq.s32.totalorder %s17, 0
    %p82 = por %p80, %p81
    %s84 = sadd.s32 %s83, 1
    %p87 = scmp.eq.s32.totalorder %s11, 1
    %p88 = scmp.ne.s32.totalorder %s83, %s85
    %p89 = scmp.eq.s32.totalorder %s11, 0
    %p90 = por %p88, %p89
    %p91 = scmp.ne.s32.totalorder %s83, %s85
    %p92 = scmp.eq.s32.totalorder %s16, 1
    %p93 = por %p91, %p92
    %p94 = scmp.ne.s32.totalorder %s85, %s86
    %p95 = scmp.eq.s32.totalorder %s16, 0
    %p96 = por %p94, %p95
    %p97 = scmp.ne.s32.totalorder %s85, %s86
    %p98 = scmp.eq.s32.totalorder %s17, 1
    %p99 = por %p97, %p98
    %p101 = scmp.ne.s32.totalorder %s86, %s100
    %p102 = scmp.eq.s32.totalorder %s17, 0
    %p103 = por %p101, %p102
    %s104 = ssub.s32 %s19, %s26
    %p105 = scmp.eq.s32.totalorder %s104, 0
    %s107 = sadd.s32 %s106, 1
    %s108 = scalar_select %p105, %s106, %s107
    %p111 = pneg %p105
    %p112 = scmp.eq.s32.totalorder %s11, 1
    %p113 = por %p111, %p112
    %p114 = scmp.ne.s32.totalorder %s106, %s109
    %p115 = scmp.eq.s32.totalorder %s11, 0
    %p116 = por %p114, %p115
    %p117 = scmp.ne.s32.totalorder %s106, %s109
    %p118 = scmp.eq.s32.totalorder %s16, 1
    %p119 = por %p117, %p118
    %p120 = scmp.ne.s32.totalorder %s109, %s110
    %p121 = scmp.eq.s32.totalorder %s16, 0
    %p122 = por %p120, %p121
    %p123 = scmp.ne.s32.totalorder %s109, %s110
    %p124 = scmp.eq.s32.totalorder %s17, 1
    %p125 = por %p123, %p124
    %p127 = scmp.ne.s32.totalorder %s110, %s126
    %p128 = scmp.eq.s32.totalorder %s17, 0
    %p129 = por %p127, %p128
    %s130 = ssub.s32 %s19, %s26
    %p131 = scmp.eq.s32.totalorder %s130, 0
    %s133 = sadd.s32 %s132, 1
    %s134 = scalar_select %p131, %s132, %s133
    %p137 = pneg %p131
    %p138 = scmp.eq.s32.totalorder %s11, 1
    %p139 = por %p137, %p138
    %p140 = scmp.ne.s32.totalorder %s132, %s135
    %p141 = scmp.eq.s32.totalorder %s11, 0
    %p142 = por %p140, %p141
    %p143 = scmp.ne.s32.totalorder %s132, %s135
    %p144 = scmp.eq.s32.totalorder %s16, 1
    %p145 = por %p143, %p144
    %p146 = scmp.ne.s32.totalorder %s135, %s136
    %p147 = scmp.eq.s32.totalorder %s16, 0
    %p148 = por %p146, %p147
    %p149 = scmp.ne.s32.totalorder %s135, %s136
    %p150 = scmp.eq.s32.totalorder %s17, 1
    %p151 = por %p149, %p150
    %p153 = scmp.ne.s32.totalorder %s136, %s152
    %p154 = scmp.eq.s32.totalorder %s17, 0
    %p155 = por %p153, %p154
    %s156 = ssub.s32 %s18, %s30
    %s157 = ssub.s32 %s19, %s26
    %s158 = sor.u32 %s156, %s157
    %p159 = scmp.eq.s32.totalorder %s158, 0
    %s161 = sadd.s32 %s160, 1
    %s162 = scalar_select %p159, %s160, %s161
    %p165 = pneg %p159
    %p166 = scmp.eq.s32.totalorder %s11, 1
    %p167 = por %p165, %p166
    %p168 = scmp.ne.s32.totalorder %s160, %s163
    %p169 = scmp.eq.s32.totalorder %s11, 0
    %p170 = por %p168, %p169
    %p171 = scmp.ne.s32.totalorder %s160, %s163
    %p172 = scmp.eq.s32.totalorder %s16, 1
    %p173 = por %p171, %p172
    %p174 = scmp.ne.s32.totalorder %s163, %s164
    %p175 = scmp.eq.s32.totalorder %s16, 0
    %p176 = por %p174, %p175
    %p177 = scmp.ne.s32.totalorder %s163, %s164
    %p178 = scmp.eq.s32.totalorder %s17, 1
    %p179 = por %p177, %p178
    %p181 = scmp.ne.s32.totalorder %s164, %s180
    %p182 = scmp.eq.s32.totalorder %s17, 0
    %p183 = por %p181, %p182
    %p184 = scmp.le.s32.totalorder 1, %s11
    %p185 = scmp.lt.s32.totalorder %s11, 3
    %p186 = pnand %p184, %p185
    %p187 = pneg %p186
    // Predicated region
    $region9: #{basic_block_ap_forward.3} parent=5 // pred_check
      _
    $region10: #{basic_block_ap_forward.3} parent=5 // pred_check_branch
      %189 = sbr.rel (%p186) target = $region12
    $region11: #{basic_block_ap_forward.3} parent=5 // pred_region
      %s190 = ssub.s32 %s11, 1
      // Predicated region
      $region13: #{basic_block_ap_forward.3} parent=11 // pred_check
        %p191 = pneg %p75
      $region14: #{basic_block_ap_forward.3} parent=11 // pred_check_branch
        %193 = sbr.rel (%p191) target = $region16
      $region15: #{basic_block_ap_forward.3} parent=11 // pred_region
        %p194 = scmp.lt.s32.totalorder %s21, 0
        %s195 = scalar_select %p194, %s21, 0
        %s196 = smul.addr %s195, 4
        %s197 = scalar_lea.vmem %s1, %s196
      $region16: #{basic_block_ap_forward.3} parent=11 // pred_fallthru
        _
      // Predicated region
      $region17: #{basic_block_ap_forward.3} parent=11 // pred_check
        %p198 = pneg %p96
      $region18: #{basic_block_ap_forward.3} parent=11 // pred_check_branch
        %200 = sbr.rel (%p198) target = $region20
      $region19: #{basic_block_ap_forward.3} parent=11 // pred_region
        _
      $region20: #{basic_block_ap_forward.3} parent=11 // pred_fallthru
        _
      // Predicated region
      $region21: #{basic_block_ap_forward.3} parent=11 // pred_check
        %p201 = pneg %p122
      $region22: #{basic_block_ap_forward.3} parent=11 // pred_check_branch
        %203 = sbr.rel (%p201) target = $region24
      $region23: #{basic_block_ap_forward.3} parent=11 // pred_region
        %p204 = scmp.lt.s32.totalorder %s21, 0
        %s205 = scalar_select %p204, %s21, 0
        %s206 = scalar_lea.vmem %s3, %s205
      $region24: #{basic_block_ap_forward.3} parent=11 // pred_fallthru
        _
      // Predicated region
      $region25: #{basic_block_ap_forward.3} parent=11 // pred_check
        %p207 = pneg %p148
      $region26: #{basic_block_ap_forward.3} parent=11 // pred_check_branch
        %209 = sbr.rel (%p207) target = $region28
      $region27: #{basic_block_ap_forward.3} parent=11 // pred_region
        %p210 = scmp.lt.s32.totalorder %s21, 0
        %s211 = scalar_select %p210, %s21, 0
        %s212 = scalar_lea.vmem %s4, %s211
      $region28: #{basic_block_ap_forward.3} parent=11 // pred_fallthru
        _
    $region12: #{basic_block_ap_forward.3} parent=5 // pred_fallthru
      _
    %p213 = scmp.lt.s32.totalorder %s11, 2
    // Predicated region
    $region29: #{basic_block_ap_forward.3} parent=5 // pred_check
      %p214 = pneg %p213
    $region30: #{basic_block_ap_forward.3} parent=5 // pred_check_branch
      %216 = sbr.rel (%p214) target = $region32
    $region31: #{basic_block_ap_forward.3} parent=5 // pred_region
      // Predicated region
      $region33: #{basic_block_ap_forward.3} parent=31 // pred_check
        %p217 = pneg %p43
      $region34: #{basic_block_ap_forward.3} parent=31 // pred_check_branch
        %219 = sbr.rel (%p217) target = $region36
      $region35: #{basic_block_ap_forward.3} parent=31 // pred_region
        %p220 = scmp.lt.s32.totalorder %s18, 1
        %s221 = scalar_select %p220, %s18, 1
        %s222 = smul.addr %s221, 160
        %s223 = smul.addr %s222, 4
        %s224 = scalar_lea.vmem %s0, %s223
      $region36: #{basic_block_ap_forward.3} parent=31 // pred_fallthru
        _
    $region32: #{basic_block_ap_forward.3} parent=5 // pred_fallthru
      _
    %p225 = scmp.le.s32.totalorder 1, %s11
    %p226 = scmp.lt.s32.totalorder %s11, 3
    %p227 = pnand %p225, %p226
    %p228 = pneg %p227
    // Predicated region
    $region37: #{basic_block_ap_forward.3} parent=5 // pred_check
      _
    $region38: #{basic_block_ap_forward.3} parent=5 // pred_check_branch
      %230 = sbr.rel (%p227) target = $region40
    $region39: #{basic_block_ap_forward.3} parent=5 // pred_region
      %s231 = ssub.s32 %s11, 1
      %p232 = scmp.lt.s32.totalorder %s20, 1
      %s233 = scalar_select %p232, %s20, 1
      %s234 = smul.addr %s233, 160
      %s235 = smul.addr %s234, 4
      %s236 = scalar_lea.vmem %s0, %s235
      %p237 = pneg %p49
      %p238 = pneg %p46
      %p239 = scmp.lt.s32.totalorder %s21, 0
      %s240 = scalar_select %p239, %s21, 0
      %s241 = smul.addr %s240, 4
      %s242 = scalar_lea.vmem %s1, %s241
      %p243 = pneg %p75
      %p244 = pneg %p72
      %p245 = pneg %p96
      %p246 = pneg %p93
      %p247 = scmp.lt.s32.totalorder %s21, 0
      %s248 = scalar_select %p247, %s21, 0
      %s249 = scalar_lea.vmem %s3, %s248
      %p250 = pneg %p122
      %p251 = pneg %p119
      %p252 = scmp.lt.s32.totalorder %s21, 0
      %s253 = scalar_select %p252, %s21, 0
      %s254 = scalar_lea.vmem %s4, %s253
      %p255 = pneg %p148
      %p256 = pneg %p145
      %p257 = pneg %p176
      %p258 = pneg %p173
      %p259 = scmp.lt.s32.totalorder %s20, 1
      %s260 = scalar_select %p259, %s20, 1
      %p261 = scmp.lt.s32.totalorder %s21, 0
      %s262 = scalar_select %p261, %s21, 0
      %s263 = smul.addr %s260, 8
      %s264 = sadd.s32 %s262, %s263
      %s265 = smul.addr %s264, 4
      %s266 = scalar_lea.vmem %s5, %s265
      %p267 = scmp.lt.s32.totalorder %s20, 1
      %s268 = scalar_select %p267, %s20, 1
      %s269 = smul.addr %s268, 160
      %s270 = smul.addr %s269, 4
      %s271 = scalar_lea.vmem %s0, %s270
      %p272 = scmp.lt.s32.totalorder %s21, 0
      %s273 = scalar_select %p272, %s21, 0
      %s274 = smul.addr %s273, 4
      %s275 = scalar_lea.vmem %s1, %s274
      %p276 = scmp.lt.s32.totalorder %s21, 0
      %s277 = scalar_select %p276, %s21, 0
      %s278 = scalar_lea.vmem %s3, %s277
      %p279 = scmp.lt.s32.totalorder %s21, 0
      %s280 = scalar_select %p279, %s21, 0
      %s281 = scalar_lea.vmem %s4, %s280
      %p282 = scmp.lt.s32.totalorder %s20, 1
      %s283 = scalar_select %p282, %s20, 1
      %p284 = scmp.lt.s32.totalorder %s21, 0
      %s285 = scalar_select %p284, %s21, 0
      %s286 = smul.addr %s283, 8
      %s287 = sadd.s32 %s285, %s286
      %s288 = smul.addr %s287, 4
      %s289 = scalar_lea.vmem %s5, %s288
      %v291 = vld [vmem:[%s271] sm:$0xff]
      %v292 = vld [vmem:[%s271 + $0x8] sm:$0xff]
      %v293 = vld [vmem:[%s271 + $0x10] sm:$0xf]
      %v294 = vld [vmem:[%s271 + $0x14] sm:$0xff]
      %v295 = vld [vmem:[%s271 + $0x1c] sm:$0xff]
      %v296 = vld [vmem:[%s271 + $0x24] sm:$0xf]
      %v297 = vld [vmem:[%s271 + $0x28] sm:$0xff]
      %v298 = vld [vmem:[%s271 + $0x30] sm:$0xff]
      %v299 = vld [vmem:[%s271 + $0x38] sm:$0xf]
      %v300 = vld [vmem:[%s271 + $0x3c] sm:$0xff]
      %v301 = vld [vmem:[%s271 + $0x44] sm:$0xff]
      %v302 = vld [vmem:[%s271 + $0x4c] sm:$0xf]
      %v303 = vld [vmem:[%s271 + $0x50] sm:$0xff]
      %v304 = vld [vmem:[%s271 + $0x58] sm:$0xff]
      %v305 = vld [vmem:[%s271 + $0x60] sm:$0xf]
      %v306 = vld [vmem:[%s271 + $0x64] sm:$0xff]
      %v307 = vld [vmem:[%s271 + $0x6c] sm:$0xff]
      %v308 = vld [vmem:[%s271 + $0x74] sm:$0xf]
      %v309 = vld [vmem:[%s271 + $0x78] sm:$0xff]
      %v310 = vld [vmem:[%s271 + $0x80] sm:$0xff]
      %v311 = vld [vmem:[%s271 + $0x88] sm:$0xf]
      %v312 = vld [vmem:[%s271 + $0x8c] sm:$0xff]
      %v313 = vld [vmem:[%s271 + $0x94] sm:$0xff]
      %v314 = vld [vmem:[%s271 + $0x9c] sm:$0xf]
      %v315 = vld [vmem:[%s271 + $0xa0] sm:$0xff]
      %v316 = vld [vmem:[%s271 + $0xa8] sm:$0xff]
      %v317 = vld [vmem:[%s271 + $0xb0] sm:$0xf]
      %v318 = vld [vmem:[%s271 + $0xb4] sm:$0xff]
      %v319 = vld [vmem:[%s271 + $0xbc] sm:$0xff]
      %v320 = vld [vmem:[%s271 + $0xc4] sm:$0xf]
      %v321 = vld [vmem:[%s271 + $0xc8] sm:$0xff]
      %v322 = vld [vmem:[%s271 + $0xd0] sm:$0xff]
      %v323 = vld [vmem:[%s271 + $0xd8] sm:$0xf]
      %v324 = vld [vmem:[%s271 + $0xdc] sm:$0xff]
      %v325 = vld [vmem:[%s271 + $0xe4] sm:$0xff]
      %v326 = vld [vmem:[%s271 + $0xec] sm:$0xf]
      %v327 = vld [vmem:[%s271 + $0xf0] sm:$0xff]
      %v328 = vld [vmem:[%s271 + $0xf8] sm:$0xff]
      %v329 = vld [vmem:[%s271 + $0x100] sm:$0xf]
      %v330 = vld [vmem:[%s271 + $0x104] sm:$0xff]
      %v331 = vld [vmem:[%s271 + $0x10c] sm:$0xff]
      %v332 = vld [vmem:[%s271 + $0x114] sm:$0xf]
      %v333 = vld [vmem:[%s271 + $0x118] sm:$0xff]
      %v334 = vld [vmem:[%s271 + $0x120] sm:$0xff]
      %v335 = vld [vmem:[%s271 + $0x128] sm:$0xf]
      %v336 = vld [vmem:[%s271 + $0x12c] sm:$0xff]
      %v337 = vld [vmem:[%s271 + $0x134] sm:$0xff]
      %v338 = vld [vmem:[%s271 + $0x13c] sm:$0xf]
      %v339 = vld [vmem:[%s271 + $0x140] sm:$0xff]
      %v340 = vld [vmem:[%s271 + $0x148] sm:$0xff]
      %v341 = vld [vmem:[%s271 + $0x150] sm:$0xf]
      %v342 = vld [vmem:[%s271 + $0x154] sm:$0xff]
      %v343 = vld [vmem:[%s271 + $0x15c] sm:$0xff]
      %v344 = vld [vmem:[%s271 + $0x164] sm:$0xf]
      %v345 = vld [vmem:[%s271 + $0x168] sm:$0xff]
      %v346 = vld [vmem:[%s271 + $0x170] sm:$0xff]
      %v347 = vld [vmem:[%s271 + $0x178] sm:$0xf]
      %v348 = vld [vmem:[%s271 + $0x17c] sm:$0xff]
      %v349 = vld [vmem:[%s271 + $0x184] sm:$0xff]
      %v350 = vld [vmem:[%s271 + $0x18c] sm:$0xf]
      %v351 = vld [vmem:[%s271 + $0x190] sm:$0xff]
      %v352 = vld [vmem:[%s271 + $0x198] sm:$0xff]
      %v353 = vld [vmem:[%s271 + $0x1a0] sm:$0xf]
      %v354 = vld [vmem:[%s271 + $0x1a4] sm:$0xff]
      %v355 = vld [vmem:[%s271 + $0x1ac] sm:$0xff]
      %v356 = vld [vmem:[%s271 + $0x1b4] sm:$0xf]
      %v357 = vld [vmem:[%s271 + $0x1b8] sm:$0xff]
      %v358 = vld [vmem:[%s271 + $0x1c0] sm:$0xff]
      %v359 = vld [vmem:[%s271 + $0x1c8] sm:$0xf]
      %v360 = vld [vmem:[%s271 + $0x1cc] sm:$0xff]
      %v361 = vld [vmem:[%s271 + $0x1d4] sm:$0xff]
      %v362 = vld [vmem:[%s271 + $0x1dc] sm:$0xf]
      %v363 = vld [vmem:[%s271 + $0x1e0] sm:$0xff]
      %v364 = vld [vmem:[%s271 + $0x1e8] sm:$0xff]
      %v365 = vld [vmem:[%s271 + $0x1f0] sm:$0xf]
      %v366 = vld [vmem:[%s271 + $0x1f4] sm:$0xff]
      %v367 = vld [vmem:[%s271 + $0x1fc] sm:$0xff]
      %v368 = vld [vmem:[%s271 + $0x204] sm:$0xf]
      %v369 = vld [vmem:[%s271 + $0x208] sm:$0xff]
      %v370 = vld [vmem:[%s271 + $0x210] sm:$0xff]
      %v371 = vld [vmem:[%s271 + $0x218] sm:$0xf]
      %v372 = vld [vmem:[%s271 + $0x21c] sm:$0xff]
      %v373 = vld [vmem:[%s271 + $0x224] sm:$0xff]
      %v374 = vld [vmem:[%s271 + $0x22c] sm:$0xf]
      %v375 = vld [vmem:[%s271 + $0x230] sm:$0xff]
      %v376 = vld [vmem:[%s271 + $0x238] sm:$0xff]
      %v377 = vld [vmem:[%s271 + $0x240] sm:$0xf]
      %v378 = vld [vmem:[%s271 + $0x244] sm:$0xff]
      %v379 = vld [vmem:[%s271 + $0x24c] sm:$0xff]
      %v380 = vld [vmem:[%s271 + $0x254] sm:$0xf]
      %v381 = vld [vmem:[%s271 + $0x258] sm:$0xff]
      %v382 = vld [vmem:[%s271 + $0x260] sm:$0xff]
      %v383 = vld [vmem:[%s271 + $0x268] sm:$0xf]
      %v384 = vld [vmem:[%s271 + $0x26c] sm:$0xff]
      %v385 = vld [vmem:[%s271 + $0x274] sm:$0xff]
      %v386 = vld [vmem:[%s271 + $0x27c] sm:$0xf]
      %v387 = vld [vmem:[%s275] sm:$0xf]
      %v388 = vld [vmem:[%s275 + $0x4] sm:$0xf]
      %v389 = vld [vmem:[%s275 + $0x8] sm:$0xf]
      %v390 = vld [vmem:[%s275 + $0xc] sm:$0xf]
      %v391 = vld [vmem:[%s275 + $0x10] sm:$0xf]
      %v392 = vld [vmem:[%s275 + $0x14] sm:$0xf]
      %v393 = vld [vmem:[%s275 + $0x18] sm:$0xf]
      %v394 = vld [vmem:[%s275 + $0x1c] sm:$0xf]
      %v395 = vld [vmem:[%s275 + $0x20] sm:$0xf]
      %v396 = vld [vmem:[%s275 + $0x24] sm:$0xf]
      %v397 = vld [vmem:[%s275 + $0x28] sm:$0xf]
      %v398 = vld [vmem:[%s275 + $0x2c] sm:$0xf]
      %v399 = vld [vmem:[%s275 + $0x30] sm:$0xf]
      %v400 = vld [vmem:[%s275 + $0x34] sm:$0xf]
      %v401 = vld [vmem:[%s275 + $0x38] sm:$0xf]
      %v402 = vld [vmem:[%s275 + $0x3c] sm:$0xf]
      %v403 = vld [vmem:[%s275 + $0x40] sm:$0xf]
      %v404 = vld [vmem:[%s275 + $0x44] sm:$0xf]
      %v405 = vld [vmem:[%s275 + $0x48] sm:$0xf]
      %v406 = vld [vmem:[%s275 + $0x4c] sm:$0xf]
      %v407 = vld [vmem:[%s275 + $0x50] sm:$0xf]
      %v408 = vld [vmem:[%s275 + $0x54] sm:$0xf]
      %v409 = vld [vmem:[%s275 + $0x58] sm:$0xf]
      %v410 = vld [vmem:[%s275 + $0x5c] sm:$0xf]
      %v411 = vld [vmem:[%s275 + $0x60] sm:$0xf]
      %v412 = vld [vmem:[%s275 + $0x64] sm:$0xf]
      %v413 = vld [vmem:[%s275 + $0x68] sm:$0xf]
      %v414 = vld [vmem:[%s275 + $0x6c] sm:$0xf]
      %v415 = vld [vmem:[%s275 + $0x70] sm:$0xf]
      %v416 = vld [vmem:[%s275 + $0x74] sm:$0xf]
      %v417 = vld [vmem:[%s275 + $0x78] sm:$0xf]
      %v418 = vld [vmem:[%s275 + $0x7c] sm:$0xf]
      %v419 = vld [vmem:[%s275 + $0x80] sm:$0xf]
      %v420 = vld [vmem:[%s275 + $0x84] sm:$0xf]
      %v421 = vld [vmem:[%s275 + $0x88] sm:$0xf]
      %v422 = vld [vmem:[%s275 + $0x8c] sm:$0xf]
      %v423 = vld [vmem:[%s275 + $0x90] sm:$0xf]
      %v424 = vld [vmem:[%s275 + $0x94] sm:$0xf]
      %v425 = vld [vmem:[%s275 + $0x98] sm:$0xf]
      %v426 = vld [vmem:[%s275 + $0x9c] sm:$0xf]
      %v427 = vld [vmem:[%s275 + $0xa0] sm:$0xf]
      %v428 = vld [vmem:[%s275 + $0xa4] sm:$0xf]
      %v429 = vld [vmem:[%s275 + $0xa8] sm:$0xf]
      %v430 = vld [vmem:[%s275 + $0xac] sm:$0xf]
      %v431 = vld [vmem:[%s275 + $0xb0] sm:$0xf]
      %v432 = vld [vmem:[%s275 + $0xb4] sm:$0xf]
      %v433 = vld [vmem:[%s275 + $0xb8] sm:$0xf]
      %v434 = vld [vmem:[%s275 + $0xbc] sm:$0xf]
      %v435 = vld [vmem:[%s275 + $0xc0] sm:$0xf]
      %v436 = vld [vmem:[%s275 + $0xc4] sm:$0xf]
      %v437 = vld [vmem:[%s275 + $0xc8] sm:$0xf]
      %v438 = vld [vmem:[%s275 + $0xcc] sm:$0xf]
      %v439 = vld [vmem:[%s275 + $0xd0] sm:$0xf]
      %v440 = vld [vmem:[%s275 + $0xd4] sm:$0xf]
      %v441 = vld [vmem:[%s275 + $0xd8] sm:$0xf]
      %v442 = vld [vmem:[%s275 + $0xdc] sm:$0xf]
      %v443 = vld [vmem:[%s275 + $0xe0] sm:$0xf]
      %v444 = vld [vmem:[%s275 + $0xe4] sm:$0xf]
      %v445 = vld [vmem:[%s275 + $0xe8] sm:$0xf]
      %v446 = vld [vmem:[%s275 + $0xec] sm:$0xf]
      %v447 = vld [vmem:[%s275 + $0xf0] sm:$0xf]
      %v448 = vld [vmem:[%s275 + $0xf4] sm:$0xf]
      %v449 = vld [vmem:[%s275 + $0xf8] sm:$0xf]
      %v450 = vld [vmem:[%s275 + $0xfc] sm:$0xf]
      %v451 = vld [vmem:[%s275 + $0x100] sm:$0xf]
      %v452 = vld [vmem:[%s275 + $0x104] sm:$0xf]
      %v453 = vld [vmem:[%s275 + $0x108] sm:$0xf]
      %v454 = vld [vmem:[%s275 + $0x10c] sm:$0xf]
      %v455 = vld [vmem:[%s275 + $0x110] sm:$0xf]
      %v456 = vld [vmem:[%s275 + $0x114] sm:$0xf]
      %v457 = vld [vmem:[%s275 + $0x118] sm:$0xf]
      %v458 = vld [vmem:[%s275 + $0x11c] sm:$0xf]
      %v459 = vld [vmem:[%s275 + $0x120] sm:$0xf]
      %v460 = vld [vmem:[%s275 + $0x124] sm:$0xf]
      %v461 = vld [vmem:[%s275 + $0x128] sm:$0xf]
      %v462 = vld [vmem:[%s275 + $0x12c] sm:$0xf]
      %v463 = vld [vmem:[%s275 + $0x130] sm:$0xf]
      %v464 = vld [vmem:[%s275 + $0x134] sm:$0xf]
      %v465 = vld [vmem:[%s275 + $0x138] sm:$0xf]
      %v466 = vld [vmem:[%s275 + $0x13c] sm:$0xf]
      %v563 = vunpack.c.l.b16 %v291
      %v564 = vunpack.c.h.b16 %v291
      %v565 = vunpack.c.l.b16 %v292
      %v566 = vunpack.c.h.b16 %v292
      %v567 = vunpack.c.l.b16 %v293
      %v568 = vunpack.c.l.b16 %v294
      %v569 = vunpack.c.h.b16 %v294
      %v570 = vunpack.c.l.b16 %v295
      %v571 = vunpack.c.h.b16 %v295
      %v572 = vunpack.c.l.b16 %v296
      %v573 = vunpack.c.l.b16 %v297
      %v574 = vunpack.c.h.b16 %v297
      %v575 = vunpack.c.l.b16 %v298
      %v576 = vunpack.c.h.b16 %v298
      %v577 = vunpack.c.l.b16 %v299
      %v578 = vunpack.c.l.b16 %v300
      %v579 = vunpack.c.h.b16 %v300
      %v580 = vunpack.c.l.b16 %v301
      %v581 = vunpack.c.h.b16 %v301
      %v582 = vunpack.c.l.b16 %v302
      %v583 = vunpack.c.l.b16 %v303
      %v584 = vunpack.c.h.b16 %v303
      %v585 = vunpack.c.l.b16 %v304
      %v586 = vunpack.c.h.b16 %v304
      %v587 = vunpack.c.l.b16 %v305
      %v588 = vunpack.c.l.b16 %v306
      %v589 = vunpack.c.h.b16 %v306
      %v590 = vunpack.c.l.b16 %v307
      %v591 = vunpack.c.h.b16 %v307
      %v592 = vunpack.c.l.b16 %v308
      %v593 = vunpack.c.l.b16 %v309
      %v594 = vunpack.c.h.b16 %v309
      %v595 = vunpack.c.l.b16 %v310
      %v596 = vunpack.c.h.b16 %v310
      %v597 = vunpack.c.l.b16 %v311
      %v598 = vunpack.c.l.b16 %v312
      %v599 = vunpack.c.h.b16 %v312
      %v600 = vunpack.c.l.b16 %v313
      %v601 = vunpack.c.h.b16 %v313
      %v602 = vunpack.c.l.b16 %v314
      %v603 = vunpack.c.l.b16 %v315
      %v604 = vunpack.c.h.b16 %v315
      %v605 = vunpack.c.l.b16 %v316
      %v606 = vunpack.c.h.b16 %v316
      %v607 = vunpack.c.l.b16 %v317
      %v608 = vunpack.c.l.b16 %v318
      %v609 = vunpack.c.h.b16 %v318
      %v610 = vunpack.c.l.b16 %v319
      %v611 = vunpack.c.h.b16 %v319
      %v612 = vunpack.c.l.b16 %v320
      %v613 = vunpack.c.l.b16 %v321
      %v614 = vunpack.c.h.b16 %v321
      %v615 = vunpack.c.l.b16 %v322
      %v616 = vunpack.c.h.b16 %v322
      %v617 = vunpack.c.l.b16 %v323
      %v618 = vunpack.c.l.b16 %v324
      %v619 = vunpack.c.h.b16 %v324
      %v620 = vunpack.c.l.b16 %v325
      %v621 = vunpack.c.h.b16 %v325
      %v622 = vunpack.c.l.b16 %v326
      %v623 = vunpack.c.l.b16 %v327
      %v624 = vunpack.c.h.b16 %v327
      %v625 = vunpack.c.l.b16 %v328
      %v626 = vunpack.c.h.b16 %v328
      %v627 = vunpack.c.l.b16 %v329
      %v628 = vunpack.c.l.b16 %v330
      %v629 = vunpack.c.h.b16 %v330
      %v630 = vunpack.c.l.b16 %v331
      %v631 = vunpack.c.h.b16 %v331
      %v632 = vunpack.c.l.b16 %v332
      %v633 = vunpack.c.l.b16 %v333
      %v634 = vunpack.c.h.b16 %v333
      %v635 = vunpack.c.l.b16 %v334
      %v636 = vunpack.c.h.b16 %v334
      %v637 = vunpack.c.l.b16 %v335
      %v638 = vunpack.c.l.b16 %v336
      %v639 = vunpack.c.h.b16 %v336
      %v640 = vunpack.c.l.b16 %v337
      %v641 = vunpack.c.h.b16 %v337
      %v642 = vunpack.c.l.b16 %v338
      %v643 = vunpack.c.l.b16 %v339
      %v644 = vunpack.c.h.b16 %v339
      %v645 = vunpack.c.l.b16 %v340
      %v646 = vunpack.c.h.b16 %v340
      %v647 = vunpack.c.l.b16 %v341
      %v648 = vunpack.c.l.b16 %v342
      %v649 = vunpack.c.h.b16 %v342
      %v650 = vunpack.c.l.b16 %v343
      %v651 = vunpack.c.h.b16 %v343
      %v652 = vunpack.c.l.b16 %v344
      %v653 = vunpack.c.l.b16 %v345
      %v654 = vunpack.c.h.b16 %v345
      %v655 = vunpack.c.l.b16 %v346
      %v656 = vunpack.c.h.b16 %v346
      %v657 = vunpack.c.l.b16 %v347
      %v658 = vunpack.c.l.b16 %v348
      %v659 = vunpack.c.h.b16 %v348
      %v660 = vunpack.c.l.b16 %v349
      %v661 = vunpack.c.h.b16 %v349
      %v662 = vunpack.c.l.b16 %v350
      %v663 = vunpack.c.l.b16 %v351
      %v664 = vunpack.c.h.b16 %v351
      %v665 = vunpack.c.l.b16 %v352
      %v666 = vunpack.c.h.b16 %v352
      %v667 = vunpack.c.l.b16 %v353
      %v668 = vunpack.c.l.b16 %v354
      %v669 = vunpack.c.h.b16 %v354
      %v670 = vunpack.c.l.b16 %v355
      %v671 = vunpack.c.h.b16 %v355
      %v672 = vunpack.c.l.b16 %v356
      %v673 = vunpack.c.l.b16 %v357
      %v674 = vunpack.c.h.b16 %v357
      %v675 = vunpack.c.l.b16 %v358
      %v676 = vunpack.c.h.b16 %v358
      %v677 = vunpack.c.l.b16 %v359
      %v678 = vunpack.c.l.b16 %v360
      %v679 = vunpack.c.h.b16 %v360
      %v680 = vunpack.c.l.b16 %v361
      %v681 = vunpack.c.h.b16 %v361
      %v682 = vunpack.c.l.b16 %v362
      %v683 = vunpack.c.l.b16 %v363
      %v684 = vunpack.c.h.b16 %v363
      %v685 = vunpack.c.l.b16 %v364
      %v686 = vunpack.c.h.b16 %v364
      %v687 = vunpack.c.l.b16 %v365
      %v688 = vunpack.c.l.b16 %v366
      %v689 = vunpack.c.h.b16 %v366
      %v690 = vunpack.c.l.b16 %v367
      %v691 = vunpack.c.h.b16 %v367
      %v692 = vunpack.c.l.b16 %v368
      %v693 = vunpack.c.l.b16 %v369
      %v694 = vunpack.c.h.b16 %v369
      %v695 = vunpack.c.l.b16 %v370
      %v696 = vunpack.c.h.b16 %v370
      %v697 = vunpack.c.l.b16 %v371
      %v698 = vunpack.c.l.b16 %v372
      %v699 = vunpack.c.h.b16 %v372
      %v700 = vunpack.c.l.b16 %v373
      %v701 = vunpack.c.h.b16 %v373
      %v702 = vunpack.c.l.b16 %v374
      %v703 = vunpack.c.l.b16 %v375
      %v704 = vunpack.c.h.b16 %v375
      %v705 = vunpack.c.l.b16 %v376
      %v706 = vunpack.c.h.b16 %v376
      %v707 = vunpack.c.l.b16 %v377
      %v708 = vunpack.c.l.b16 %v378
      %v709 = vunpack.c.h.b16 %v378
      %v710 = vunpack.c.l.b16 %v379
      %v711 = vunpack.c.h.b16 %v379
      %v712 = vunpack.c.l.b16 %v380
      %v713 = vunpack.c.l.b16 %v381
      %v714 = vunpack.c.h.b16 %v381
      %v715 = vunpack.c.l.b16 %v382
      %v716 = vunpack.c.h.b16 %v382
      %v717 = vunpack.c.l.b16 %v383
      %v718 = vunpack.c.l.b16 %v384
      %v719 = vunpack.c.h.b16 %v384
      %v720 = vunpack.c.l.b16 %v385
      %v721 = vunpack.c.h.b16 %v385
      %v722 = vunpack.c.l.b16 %v386
      %v723 = vpack.c.b16 %v568, %v563
      %v724 = vpack.c.b16 %v569, %v564
      %v725 = vpack.c.b16 %v570, %v565
      %v726 = vpack.c.b16 %v571, %v566
      %v727 = vpack.c.b16 %v572, %v567
      %v728 = vpack.c.b16 %v578, %v573
      %v729 = vpack.c.b16 %v579, %v574
      %v730 = vpack.c.b16 %v580, %v575
      %v731 = vpack.c.b16 %v581, %v576
      %v732 = vpack.c.b16 %v582, %v577
      %v733 = vpack.c.b16 %v588, %v583
      %v734 = vpack.c.b16 %v589, %v584
      %v735 = vpack.c.b16 %v590, %v585
      %v736 = vpack.c.b16 %v591, %v586
      %v737 = vpack.c.b16 %v592, %v587
      %v738 = vpack.c.b16 %v598, %v593
      %v739 = vpack.c.b16 %v599, %v594
      %v740 = vpack.c.b16 %v600, %v595
      %v741 = vpack.c.b16 %v601, %v596
      %v742 = vpack.c.b16 %v602, %v597
      %v743 = vpack.c.b16 %v608, %v603
      %v744 = vpack.c.b16 %v609, %v604
      %v745 = vpack.c.b16 %v610, %v605
      %v746 = vpack.c.b16 %v611, %v606
      %v747 = vpack.c.b16 %v612, %v607
      %v748 = vpack.c.b16 %v618, %v613
      %v749 = vpack.c.b16 %v619, %v614
      %v750 = vpack.c.b16 %v620, %v615
      %v751 = vpack.c.b16 %v621, %v616
      %v752 = vpack.c.b16 %v622, %v617
      %v753 = vpack.c.b16 %v628, %v623
      %v754 = vpack.c.b16 %v629, %v624
      %v755 = vpack.c.b16 %v630, %v625
      %v756 = vpack.c.b16 %v631, %v626
      %v757 = vpack.c.b16 %v632, %v627
      %v758 = vpack.c.b16 %v638, %v633
      %v759 = vpack.c.b16 %v639, %v634
      %v760 = vpack.c.b16 %v640, %v635
      %v761 = vpack.c.b16 %v641, %v636
      %v762 = vpack.c.b16 %v642, %v637
      %v763 = vpack.c.b16 %v648, %v643
      %v764 = vpack.c.b16 %v649, %v644
      %v765 = vpack.c.b16 %v650, %v645
      %v766 = vpack.c.b16 %v651, %v646
      %v767 = vpack.c.b16 %v652, %v647
      %v768 = vpack.c.b16 %v658, %v653
      %v769 = vpack.c.b16 %v659, %v654
      %v770 = vpack.c.b16 %v660, %v655
      %v771 = vpack.c.b16 %v661, %v656
      %v772 = vpack.c.b16 %v662, %v657
      %v773 = vpack.c.b16 %v668, %v663
      %v774 = vpack.c.b16 %v669, %v664
      %v775 = vpack.c.b16 %v670, %v665
      %v776 = vpack.c.b16 %v671, %v666
      %v777 = vpack.c.b16 %v672, %v667
      %v778 = vpack.c.b16 %v678, %v673
      %v779 = vpack.c.b16 %v679, %v674
      %v780 = vpack.c.b16 %v680, %v675
      %v781 = vpack.c.b16 %v681, %v676
      %v782 = vpack.c.b16 %v682, %v677
      %v783 = vpack.c.b16 %v688, %v683
      %v784 = vpack.c.b16 %v689, %v684
      %v785 = vpack.c.b16 %v690, %v685
      %v786 = vpack.c.b16 %v691, %v686
      %v787 = vpack.c.b16 %v692, %v687
      %v788 = vpack.c.b16 %v698, %v693
      %v789 = vpack.c.b16 %v699, %v694
      %v790 = vpack.c.b16 %v700, %v695
      %v791 = vpack.c.b16 %v701, %v696
      %v792 = vpack.c.b16 %v702, %v697
      %v793 = vpack.c.b16 %v708, %v703
      %v794 = vpack.c.b16 %v709, %v704
      %v795 = vpack.c.b16 %v710, %v705
      %v796 = vpack.c.b16 %v711, %v706
      %v797 = vpack.c.b16 %v712, %v707
      %v798 = vpack.c.b16 %v718, %v713
      %v799 = vpack.c.b16 %v719, %v714
      %v800 = vpack.c.b16 %v720, %v715
      %v801 = vpack.c.b16 %v721, %v716
      %v802 = vpack.c.b16 %v722, %v717
      %v963 = vunpack.c.l.b16 %v387
      %v964 = vunpack.c.l.b16 %v388
      %v965 = vunpack.c.l.b16 %v389
      %v966 = vunpack.c.l.b16 %v390
      %v967 = vunpack.c.l.b16 %v391
      %v968 = vunpack.c.l.b16 %v392
      %v969 = vunpack.c.l.b16 %v393
      %v970 = vunpack.c.l.b16 %v394
      %v971 = vunpack.c.l.b16 %v395
      %v972 = vunpack.c.l.b16 %v396
      %v973 = vunpack.c.l.b16 %v397
      %v974 = vunpack.c.l.b16 %v398
      %v975 = vunpack.c.l.b16 %v399
      %v976 = vunpack.c.l.b16 %v400
      %v977 = vunpack.c.l.b16 %v401
      %v978 = vunpack.c.l.b16 %v402
      %v979 = vunpack.c.l.b16 %v403
      %v980 = vunpack.c.l.b16 %v404
      %v981 = vunpack.c.l.b16 %v405
      %v982 = vunpack.c.l.b16 %v406
      %v983 = vunpack.c.l.b16 %v407
      %v984 = vunpack.c.l.b16 %v408
      %v985 = vunpack.c.l.b16 %v409
      %v986 = vunpack.c.l.b16 %v410
      %v987 = vunpack.c.l.b16 %v411
      %v988 = vunpack.c.l.b16 %v412
      %v989 = vunpack.c.l.b16 %v413
      %v990 = vunpack.c.l.b16 %v414
      %v991 = vunpack.c.l.b16 %v415
      %v992 = vunpack.c.l.b16 %v416
      %v993 = vunpack.c.l.b16 %v417
      %v994 = vunpack.c.l.b16 %v418
      %v995 = vunpack.c.l.b16 %v419
      %v996 = vunpack.c.l.b16 %v420
      %v997 = vunpack.c.l.b16 %v421
      %v998 = vunpack.c.l.b16 %v422
      %v999 = vunpack.c.l.b16 %v423
      %v1000 = vunpack.c.l.b16 %v424
      %v1001 = vunpack.c.l.b16 %v425
      %v1002 = vunpack.c.l.b16 %v426
      %v1003 = vunpack.c.l.b16 %v427
      %v1004 = vunpack.c.l.b16 %v428
      %v1005 = vunpack.c.l.b16 %v429
      %v1006 = vunpack.c.l.b16 %v430
      %v1007 = vunpack.c.l.b16 %v431
      %v1008 = vunpack.c.l.b16 %v432
      %v1009 = vunpack.c.l.b16 %v433
      %v1010 = vunpack.c.l.b16 %v434
      %v1011 = vunpack.c.l.b16 %v435
      %v1012 = vunpack.c.l.b16 %v436
      %v1013 = vunpack.c.l.b16 %v437
      %v1014 = vunpack.c.l.b16 %v438
      %v1015 = vunpack.c.l.b16 %v439
      %v1016 = vunpack.c.l.b16 %v440
      %v1017 = vunpack.c.l.b16 %v441
      %v1018 = vunpack.c.l.b16 %v442
      %v1019 = vunpack.c.l.b16 %v443
      %v1020 = vunpack.c.l.b16 %v444
      %v1021 = vunpack.c.l.b16 %v445
      %v1022 = vunpack.c.l.b16 %v446
      %v1023 = vunpack.c.l.b16 %v447
      %v1024 = vunpack.c.l.b16 %v448
      %v1025 = vunpack.c.l.b16 %v449
      %v1026 = vunpack.c.l.b16 %v450
      %v1027 = vunpack.c.l.b16 %v451
      %v1028 = vunpack.c.l.b16 %v452
      %v1029 = vunpack.c.l.b16 %v453
      %v1030 = vunpack.c.l.b16 %v454
      %v1031 = vunpack.c.l.b16 %v455
      %v1032 = vunpack.c.l.b16 %v456
      %v1033 = vunpack.c.l.b16 %v457
      %v1034 = vunpack.c.l.b16 %v458
      %v1035 = vunpack.c.l.b16 %v459
      %v1036 = vunpack.c.l.b16 %v460
      %v1037 = vunpack.c.l.b16 %v461
      %v1038 = vunpack.c.l.b16 %v462
      %v1039 = vunpack.c.l.b16 %v463
      %v1040 = vunpack.c.l.b16 %v464
      %v1041 = vunpack.c.l.b16 %v465
      %v1042 = vunpack.c.l.b16 %v466
      %v1043 = vpack.c.b16 %v964, %v963
      %v1044 = vpack.c.b16 %v966, %v965
      %v1045 = vpack.c.b16 %v968, %v967
      %v1046 = vpack.c.b16 %v970, %v969
      %v1047 = vpack.c.b16 %v972, %v971
      %v1048 = vpack.c.b16 %v974, %v973
      %v1049 = vpack.c.b16 %v976, %v975
      %v1050 = vpack.c.b16 %v978, %v977
      %v1051 = vpack.c.b16 %v980, %v979
      %v1052 = vpack.c.b16 %v982, %v981
      %v1053 = vpack.c.b16 %v984, %v983
      %v1054 = vpack.c.b16 %v986, %v985
      %v1055 = vpack.c.b16 %v988, %v987
      %v1056 = vpack.c.b16 %v990, %v989
      %v1057 = vpack.c.b16 %v992, %v991
      %v1058 = vpack.c.b16 %v994, %v993
      %v1059 = vpack.c.b16 %v996, %v995
      %v1060 = vpack.c.b16 %v998, %v997
      %v1061 = vpack.c.b16 %v1000, %v999
      %v1062 = vpack.c.b16 %v1002, %v1001
      %v1063 = vpack.c.b16 %v1004, %v1003
      %v1064 = vpack.c.b16 %v1006, %v1005
      %v1065 = vpack.c.b16 %v1008, %v1007
      %v1066 = vpack.c.b16 %v1010, %v1009
      %v1067 = vpack.c.b16 %v1012, %v1011
      %v1068 = vpack.c.b16 %v1014, %v1013
      %v1069 = vpack.c.b16 %v1016, %v1015
      %v1070 = vpack.c.b16 %v1018, %v1017
      %v1071 = vpack.c.b16 %v1020, %v1019
      %v1072 = vpack.c.b16 %v1022, %v1021
      %v1073 = vpack.c.b16 %v1024, %v1023
      %v1074 = vpack.c.b16 %v1026, %v1025
      %v1075 = vpack.c.b16 %v1028, %v1027
      %v1076 = vpack.c.b16 %v1030, %v1029
      %v1077 = vpack.c.b16 %v1032, %v1031
      %v1078 = vpack.c.b16 %v1034, %v1033
      %v1079 = vpack.c.b16 %v1036, %v1035
      %v1080 = vpack.c.b16 %v1038, %v1037
      %v1081 = vpack.c.b16 %v1040, %v1039
      %v1082 = vpack.c.b16 %v1042, %v1041
      %1123 = vmatprep.subr.bf16.mxu0 0
      %1124 = vmatpush1.bf16.msra.mxu0 %v1050
      %1125 = vmatprep.subr.bf16.mxu0 0
      %1126 = vmatpush1.bf16.msra.mxu0 %v1049
      %1127 = vmatprep.subr.bf16.mxu0 0
      %1128 = vmatpush1.bf16.msra.mxu0 %v1048
      %1129 = vmatprep.subr.bf16.mxu0 0
      %1130 = vmatpush1.bf16.msra.mxu0 %v1047
      %1131 = vmatprep.subr.bf16.mxu0 0
      %1132 = vmatpush1.bf16.msra.mxu0 %v1046
      %1133 = vmatprep.subr.bf16.mxu0 0
      %1134 = vmatpush1.bf16.msra.mxu0 %v1045
      %1135 = vmatprep.subr.bf16.mxu0 0
      %1136 = vmatpush1.bf16.msra.mxu0 %v1044
      %1137 = vmatprep.subr.bf16.mxu0 0
      %1138 = vmatpush1.bf16.msra.mxu0 %v1043
      %1139 = vmatprep.subr.bf16.mxu0 0
      %1140 = vmatpush2.bf16.msra.mxu0 %v1058
      %1141 = vmatprep.subr.bf16.mxu0 0
      %1142 = vmatpush2.bf16.msra.mxu0 %v1057
      %1143 = vmatprep.subr.bf16.mxu0 0
      %1144 = vmatpush2.bf16.msra.mxu0 %v1056
      %1145 = vmatprep.subr.bf16.mxu0 0
      %1146 = vmatpush2.bf16.msra.mxu0 %v1055
      %1147 = vmatprep.subr.bf16.mxu0 0
      %1148 = vmatpush2.bf16.msra.mxu0 %v1054
      %1149 = vmatprep.subr.bf16.mxu0 0
      %1150 = vmatpush2.bf16.msra.mxu0 %v1053
      %1151 = vmatprep.subr.bf16.mxu0 0
      %1152 = vmatpush2.bf16.msra.mxu0 %v1052
      %1153 = vmatprep.subr.bf16.mxu0 0
      %1154 = vmatpush2.bf16.msra.mxu0 %v1051
      %1155 = vmatprep.mubr.bf16.mxu0 %v724
      %1156 = vmatmul.mubr.bf16.gmra.mxu0 %v723
      %v1157 = vpop.f32.mrf.mxu0
      %v1158 = vadd.f32 0.0, %v1157
      %v1159 = vpop.f32.mrf.mxu0
      %v1160 = vpop.f32.mrf.mxu0
      %v1161 = vadd.f32 0.0, %v1160
      %v1162 = vpop.f32.mrf.mxu0
      %1163 = vmatprep.mubr.bf16.mxu0 %v729
      %1164 = vmatmul.mubr.bf16.gmra.mxu0 %v728
      %v1165 = vpop.f32.mrf.mxu0
      %v1166 = vadd.f32 0.0, %v1165
      %v1167 = vpop.f32.mrf.mxu0
      %v1168 = vpop.f32.mrf.mxu0
      %v1169 = vadd.f32 0.0, %v1168
      %v1170 = vpop.f32.mrf.mxu0
      %1171 = vmatprep.mubr.bf16.mxu0 %v734
      %1172 = vmatmul.mubr.bf16.gmra.mxu0 %v733
      %v1173 = vpop.f32.mrf.mxu0
      %v1174 = vadd.f32 0.0, %v1173
      %v1175 = vpop.f32.mrf.mxu0
      %v1176 = vpop.f32.mrf.mxu0
      %v1177 = vadd.f32 0.0, %v1176
      %v1178 = vpop.f32.mrf.mxu0
      %1179 = vmatprep.mubr.bf16.mxu0 %v739
      %1180 = vmatmul.mubr.bf16.gmra.mxu0 %v738
      %v1181 = vpop.f32.mrf.mxu0
      %v1182 = vadd.f32 0.0, %v1181
      %v1183 = vpop.f32.mrf.mxu0
      %v1184 = vpop.f32.mrf.mxu0
      %v1185 = vadd.f32 0.0, %v1184
      %v1186 = vpop.f32.mrf.mxu0
      %1187 = vmatprep.mubr.bf16.mxu0 %v744
      %1188 = vmatmul.mubr.bf16.gmra.mxu0 %v743
      %v1189 = vpop.f32.mrf.mxu0
      %v1190 = vadd.f32 0.0, %v1189
      %v1191 = vpop.f32.mrf.mxu0
      %v1192 = vpop.f32.mrf.mxu0
      %v1193 = vadd.f32 0.0, %v1192
      %v1194 = vpop.f32.mrf.mxu0
      %1195 = vmatprep.mubr.bf16.mxu0 %v749
      %1196 = vmatmul.mubr.bf16.gmra.mxu0 %v748
      %v1197 = vpop.f32.mrf.mxu0
      %v1198 = vadd.f32 0.0, %v1197
      %v1199 = vpop.f32.mrf.mxu0
      %v1200 = vpop.f32.mrf.mxu0
      %v1201 = vadd.f32 0.0, %v1200
      %v1202 = vpop.f32.mrf.mxu0
      %1203 = vmatprep.mubr.bf16.mxu0 %v754
      %1204 = vmatmul.mubr.bf16.gmra.mxu0 %v753
      %v1205 = vpop.f32.mrf.mxu0
      %v1206 = vadd.f32 0.0, %v1205
      %v1207 = vpop.f32.mrf.mxu0
      %v1208 = vpop.f32.mrf.mxu0
      %v1209 = vadd.f32 0.0, %v1208
      %v1210 = vpop.f32.mrf.mxu0
      %1211 = vmatprep.mubr.bf16.mxu0 %v759
      %1212 = vmatmul.mubr.bf16.gmra.mxu0 %v758
      %v1213 = vpop.f32.mrf.mxu0
      %v1214 = vadd.f32 0.0, %v1213
      %v1215 = vpop.f32.mrf.mxu0
      %v1216 = vpop.f32.mrf.mxu0
      %v1217 = vadd.f32 0.0, %v1216
      %v1218 = vpop.f32.mrf.mxu0
      %1219 = vmatprep.mubr.bf16.mxu0 %v764
      %1220 = vmatmul.mubr.bf16.gmra.mxu0 %v763
      %v1221 = vpop.f32.mrf.mxu0
      %v1222 = vadd.f32 0.0, %v1221
      %v1223 = vpop.f32.mrf.mxu0
      %v1224 = vpop.f32.mrf.mxu0
      %v1225 = vadd.f32 0.0, %v1224
      %v1226 = vpop.f32.mrf.mxu0
      %1227 = vmatprep.mubr.bf16.mxu0 %v769
      %1228 = vmatmul.mubr.bf16.gmra.mxu0 %v768
      %v1229 = vpop.f32.mrf.mxu0
      %v1230 = vadd.f32 0.0, %v1229
      %v1231 = vpop.f32.mrf.mxu0
      %v1232 = vpop.f32.mrf.mxu0
      %v1233 = vadd.f32 0.0, %v1232
      %v1234 = vpop.f32.mrf.mxu0
      %1235 = vmatprep.mubr.bf16.mxu0 %v774
      %1236 = vmatmul.mubr.bf16.gmra.mxu0 %v773
      %v1237 = vpop.f32.mrf.mxu0
      %v1238 = vadd.f32 0.0, %v1237
      %v1239 = vpop.f32.mrf.mxu0
      %v1240 = vpop.f32.mrf.mxu0
      %v1241 = vadd.f32 0.0, %v1240
      %v1242 = vpop.f32.mrf.mxu0
      %1243 = vmatprep.mubr.bf16.mxu0 %v779
      %1244 = vmatmul.mubr.bf16.gmra.mxu0 %v778
      %v1245 = vpop.f32.mrf.mxu0
      %v1246 = vadd.f32 0.0, %v1245
      %v1247 = vpop.f32.mrf.mxu0
      %v1248 = vpop.f32.mrf.mxu0
      %v1249 = vadd.f32 0.0, %v1248
      %v1250 = vpop.f32.mrf.mxu0
      %1251 = vmatprep.mubr.bf16.mxu0 %v784
      %1252 = vmatmul.mubr.bf16.gmra.mxu0 %v783
      %v1253 = vpop.f32.mrf.mxu0
      %v1254 = vadd.f32 0.0, %v1253
      %v1255 = vpop.f32.mrf.mxu0
      %v1256 = vpop.f32.mrf.mxu0
      %v1257 = vadd.f32 0.0, %v1256
      %v1258 = vpop.f32.mrf.mxu0
      %1259 = vmatprep.mubr.bf16.mxu0 %v789
      %1260 = vmatmul.mubr.bf16.gmra.mxu0 %v788
      %v1261 = vpop.f32.mrf.mxu0
      %v1262 = vadd.f32 0.0, %v1261
      %v1263 = vpop.f32.mrf.mxu0
      %v1264 = vpop.f32.mrf.mxu0
      %v1265 = vadd.f32 0.0, %v1264
      %v1266 = vpop.f32.mrf.mxu0
      %1267 = vmatprep.mubr.bf16.mxu0 %v794
      %1268 = vmatmul.mubr.bf16.gmra.mxu0 %v793
      %v1269 = vpop.f32.mrf.mxu0
      %v1270 = vadd.f32 0.0, %v1269
      %v1271 = vpop.f32.mrf.mxu0
      %v1272 = vpop.f32.mrf.mxu0
      %v1273 = vadd.f32 0.0, %v1272
      %v1274 = vpop.f32.mrf.mxu0
      %1275 = vmatprep.mubr.bf16.mxu0 %v799
      %1276 = vmatmul.mubr.bf16.gmra.mxu0 %v798
      %v1277 = vpop.f32.mrf.mxu0
      %v1278 = vadd.f32 0.0, %v1277
      %v1279 = vpop.f32.mrf.mxu0
      %v1280 = vpop.f32.mrf.mxu0
      %v1281 = vadd.f32 0.0, %v1280
      %v1282 = vpop.f32.mrf.mxu0
      %1283 = vdwg.mxu0
      %1284 = vmatprep.subr.bf16.mxu0 0
      %1285 = vmatpush1.bf16.msra.mxu0 %v1066
      %1286 = vmatprep.subr.bf16.mxu0 0
      %1287 = vmatpush1.bf16.msra.mxu0 %v1065
      %1288 = vmatprep.subr.bf16.mxu0 0
      %1289 = vmatpush1.bf16.msra.mxu0 %v1064
      %1290 = vmatprep.subr.bf16.mxu0 0
      %1291 = vmatpush1.bf16.msra.mxu0 %v1063
      %1292 = vmatprep.subr.bf16.mxu0 0
      %1293 = vmatpush1.bf16.msra.mxu0 %v1062
      %1294 = vmatprep.subr.bf16.mxu0 0
      %1295 = vmatpush1.bf16.msra.mxu0 %v1061
      %1296 = vmatprep.subr.bf16.mxu0 0
      %1297 = vmatpush1.bf16.msra.mxu0 %v1060
      %1298 = vmatprep.subr.bf16.mxu0 0
      %1299 = vmatpush1.bf16.msra.mxu0 %v1059
      %1300 = vmatprep.subr.bf16.mxu0 0
      %1301 = vmatpush2.bf16.msra.mxu0 %v1074
      %1302 = vmatprep.subr.bf16.mxu0 0
      %1303 = vmatpush2.bf16.msra.mxu0 %v1073
      %1304 = vmatprep.subr.bf16.mxu0 0
      %1305 = vmatpush2.bf16.msra.mxu0 %v1072
      %1306 = vmatprep.subr.bf16.mxu0 0
      %1307 = vmatpush2.bf16.msra.mxu0 %v1071
      %1308 = vmatprep.subr.bf16.mxu0 0
      %1309 = vmatpush2.bf16.msra.mxu0 %v1070
      %1310 = vmatprep.subr.bf16.mxu0 0
      %1311 = vmatpush2.bf16.msra.mxu0 %v1069
      %1312 = vmatprep.subr.bf16.mxu0 0
      %1313 = vmatpush2.bf16.msra.mxu0 %v1068
      %1314 = vmatprep.subr.bf16.mxu0 0
      %1315 = vmatpush2.bf16.msra.mxu0 %v1067
      %1316 = vmatprep.mubr.bf16.mxu0 %v726
      %1317 = vmatmul.mubr.bf16.gmra.mxu0 %v725
      %v1318 = vpop.f32.mrf.mxu0
      %v1319 = vadd.f32 %v1158, %v1318
      %v1320 = vpop.f32.mrf.mxu0
      %v1321 = vpop.f32.mrf.mxu0
      %v1322 = vadd.f32 %v1161, %v1321
      %v1323 = vpop.f32.mrf.mxu0
      %1324 = vmatprep.mubr.bf16.mxu0 %v731
      %1325 = vmatmul.mubr.bf16.gmra.mxu0 %v730
      %v1326 = vpop.f32.mrf.mxu0
      %v1327 = vadd.f32 %v1166, %v1326
      %v1328 = vpop.f32.mrf.mxu0
      %v1329 = vpop.f32.mrf.mxu0
      %v1330 = vadd.f32 %v1169, %v1329
      %v1331 = vpop.f32.mrf.mxu0
      %1332 = vmatprep.mubr.bf16.mxu0 %v736
      %1333 = vmatmul.mubr.bf16.gmra.mxu0 %v735
      %v1334 = vpop.f32.mrf.mxu0
      %v1335 = vadd.f32 %v1174, %v1334
      %v1336 = vpop.f32.mrf.mxu0
      %v1337 = vpop.f32.mrf.mxu0
      %v1338 = vadd.f32 %v1177, %v1337
      %v1339 = vpop.f32.mrf.mxu0
      %1340 = vmatprep.mubr.bf16.mxu0 %v741
      %1341 = vmatmul.mubr.bf16.gmra.mxu0 %v740
      %v1342 = vpop.f32.mrf.mxu0
      %v1343 = vadd.f32 %v1182, %v1342
      %v1344 = vpop.f32.mrf.mxu0
      %v1345 = vpop.f32.mrf.mxu0
      %v1346 = vadd.f32 %v1185, %v1345
      %v1347 = vpop.f32.mrf.mxu0
      %1348 = vmatprep.mubr.bf16.mxu0 %v746
      %1349 = vmatmul.mubr.bf16.gmra.mxu0 %v745
      %v1350 = vpop.f32.mrf.mxu0
      %v1351 = vadd.f32 %v1190, %v1350
      %v1352 = vpop.f32.mrf.mxu0
      %v1353 = vpop.f32.mrf.mxu0
      %v1354 = vadd.f32 %v1193, %v1353
      %v1355 = vpop.f32.mrf.mxu0
      %1356 = vmatprep.mubr.bf16.mxu0 %v751
      %1357 = vmatmul.mubr.bf16.gmra.mxu0 %v750
      %v1358 = vpop.f32.mrf.mxu0
      %v1359 = vadd.f32 %v1198, %v1358
      %v1360 = vpop.f32.mrf.mxu0
      %v1361 = vpop.f32.mrf.mxu0
      %v1362 = vadd.f32 %v1201, %v1361
      %v1363 = vpop.f32.mrf.mxu0
      %1364 = vmatprep.mubr.bf16.mxu0 %v756
      %1365 = vmatmul.mubr.bf16.gmra.mxu0 %v755
      %v1366 = vpop.f32.mrf.mxu0
      %v1367 = vadd.f32 %v1206, %v1366
      %v1368 = vpop.f32.mrf.mxu0
      %v1369 = vpop.f32.mrf.mxu0
      %v1370 = vadd.f32 %v1209, %v1369
      %v1371 = vpop.f32.mrf.mxu0
      %1372 = vmatprep.mubr.bf16.mxu0 %v761
      %1373 = vmatmul.mubr.bf16.gmra.mxu0 %v760
      %v1374 = vpop.f32.mrf.mxu0
      %v1375 = vadd.f32 %v1214, %v1374
      %v1376 = vpop.f32.mrf.mxu0
      %v1377 = vpop.f32.mrf.mxu0
      %v1378 = vadd.f32 %v1217, %v1377
      %v1379 = vpop.f32.mrf.mxu0
      %1380 = vmatprep.mubr.bf16.mxu0 %v766
      %1381 = vmatmul.mubr.bf16.gmra.mxu0 %v765
      %v1382 = vpop.f32.mrf.mxu0
      %v1383 = vadd.f32 %v1222, %v1382
      %v1384 = vpop.f32.mrf.mxu0
      %v1385 = vpop.f32.mrf.mxu0
      %v1386 = vadd.f32 %v1225, %v1385
      %v1387 = vpop.f32.mrf.mxu0
      %1388 = vmatprep.mubr.bf16.mxu0 %v771
      %1389 = vmatmul.mubr.bf16.gmra.mxu0 %v770
      %v1390 = vpop.f32.mrf.mxu0
      %v1391 = vadd.f32 %v1230, %v1390
      %v1392 = vpop.f32.mrf.mxu0
      %v1393 = vpop.f32.mrf.mxu0
      %v1394 = vadd.f32 %v1233, %v1393
      %v1395 = vpop.f32.mrf.mxu0
      %1396 = vmatprep.mubr.bf16.mxu0 %v776
      %1397 = vmatmul.mubr.bf16.gmra.mxu0 %v775
      %v1398 = vpop.f32.mrf.mxu0
      %v1399 = vadd.f32 %v1238, %v1398
      %v1400 = vpop.f32.mrf.mxu0
      %v1401 = vpop.f32.mrf.mxu0
      %v1402 = vadd.f32 %v1241, %v1401
      %v1403 = vpop.f32.mrf.mxu0
      %1404 = vmatprep.mubr.bf16.mxu0 %v781
      %1405 = vmatmul.mubr.bf16.gmra.mxu0 %v780
      %v1406 = vpop.f32.mrf.mxu0
      %v1407 = vadd.f32 %v1246, %v1406
      %v1408 = vpop.f32.mrf.mxu0
      %v1409 = vpop.f32.mrf.mxu0
      %v1410 = vadd.f32 %v1249, %v1409
      %v1411 = vpop.f32.mrf.mxu0
      %1412 = vmatprep.mubr.bf16.mxu0 %v786
      %1413 = vmatmul.mubr.bf16.gmra.mxu0 %v785
      %v1414 = vpop.f32.mrf.mxu0
      %v1415 = vadd.f32 %v1254, %v1414
      %v1416 = vpop.f32.mrf.mxu0
      %v1417 = vpop.f32.mrf.mxu0
      %v1418 = vadd.f32 %v1257, %v1417
      %v1419 = vpop.f32.mrf.mxu0
      %1420 = vmatprep.mubr.bf16.mxu0 %v791
      %1421 = vmatmul.mubr.bf16.gmra.mxu0 %v790
      %v1422 = vpop.f32.mrf.mxu0
      %v1423 = vadd.f32 %v1262, %v1422
      %v1424 = vpop.f32.mrf.mxu0
      %v1425 = vpop.f32.mrf.mxu0
      %v1426 = vadd.f32 %v1265, %v1425
      %v1427 = vpop.f32.mrf.mxu0
      %1428 = vmatprep.mubr.bf16.mxu0 %v796
      %1429 = vmatmul.mubr.bf16.gmra.mxu0 %v795
      %v1430 = vpop.f32.mrf.mxu0
      %v1431 = vadd.f32 %v1270, %v1430
      %v1432 = vpop.f32.mrf.mxu0
      %v1433 = vpop.f32.mrf.mxu0
      %v1434 = vadd.f32 %v1273, %v1433
      %v1435 = vpop.f32.mrf.mxu0
      %1436 = vmatprep.mubr.bf16.mxu0 %v801
      %1437 = vmatmul.mubr.bf16.gmra.mxu0 %v800
      %v1438 = vpop.f32.mrf.mxu0
      %v1439 = vadd.f32 %v1278, %v1438
      %v1440 = vpop.f32.mrf.mxu0
      %v1441 = vpop.f32.mrf.mxu0
      %v1442 = vadd.f32 %v1281, %v1441
      %v1443 = vpop.f32.mrf.mxu0
      %1444 = vdwg.mxu0
      %1445 = vmatprep.subr.bf16.mxu0 0
      %1446 = vmatpush1.bf16.msra.mxu0 %v1082
      %1447 = vmatprep.subr.bf16.mxu0 0
      %1448 = vmatpush1.bf16.msra.mxu0 %v1081
      %1449 = vmatprep.subr.bf16.mxu0 0
      %1450 = vmatpush1.bf16.msra.mxu0 %v1080
      %1451 = vmatprep.subr.bf16.mxu0 0
      %1452 = vmatpush1.bf16.msra.mxu0 %v1079
      %1453 = vmatprep.subr.bf16.mxu0 0
      %1454 = vmatpush1.bf16.msra.mxu0 %v1078
      %1455 = vmatprep.subr.bf16.mxu0 0
      %1456 = vmatpush1.bf16.msra.mxu0 %v1077
      %1457 = vmatprep.subr.bf16.mxu0 0
      %1458 = vmatpush1.bf16.msra.mxu0 %v1076
      %1459 = vmatprep.subr.bf16.mxu0 0
      %1460 = vmatpush1.bf16.msra.mxu0 %v1075
      %1461 = vmatprep.subr.bf16.mxu0 0
      %1462 = vmatpush2.bf16.msra.mxu0 0
      %1463 = vmatprep.subr.bf16.mxu0 0
      %1464 = vmatpush2.bf16.msra.mxu0 0
      %1465 = vmatprep.subr.bf16.mxu0 0
      %1466 = vmatpush2.bf16.msra.mxu0 0
      %1467 = vmatprep.subr.bf16.mxu0 0
      %1468 = vmatpush2.bf16.msra.mxu0 0
      %1469 = vmatprep.subr.bf16.mxu0 0
      %1470 = vmatpush2.bf16.msra.mxu0 0
      %1471 = vmatprep.subr.bf16.mxu0 0
      %1472 = vmatpush2.bf16.msra.mxu0 0
      %1473 = vmatprep.subr.bf16.mxu0 0
      %1474 = vmatpush2.bf16.msra.mxu0 0
      %1475 = vmatprep.subr.bf16.mxu0 0
      %1476 = vmatpush2.bf16.msra.mxu0 0
      %1477 = vmatprep.mubr.bf16.mxu0 0
      %1478 = vmatmul.mubr.bf16.gmra.mxu0 %v727
      %v1479 = vpop.f32.mrf.mxu0
      %v1480 = vadd.f32 %v1319, %v1479
      %v1481 = vpop.f32.mrf.mxu0
      %v1482 = vpop.f32.mrf.mxu0
      %v1483 = vadd.f32 %v1322, %v1482
      %v1484 = vpop.f32.mrf.mxu0
      %1485 = vmatprep.mubr.bf16.mxu0 0
      %1486 = vmatmul.mubr.bf16.gmra.mxu0 %v732
      %v1487 = vpop.f32.mrf.mxu0
      %v1488 = vadd.f32 %v1327, %v1487
      %v1489 = vpop.f32.mrf.mxu0
      %v1490 = vpop.f32.mrf.mxu0
      %v1491 = vadd.f32 %v1330, %v1490
      %v1492 = vpop.f32.mrf.mxu0
      %1493 = vmatprep.mubr.bf16.mxu0 0
      %1494 = vmatmul.mubr.bf16.gmra.mxu0 %v737
      %v1495 = vpop.f32.mrf.mxu0
      %v1496 = vadd.f32 %v1335, %v1495
      %v1497 = vpop.f32.mrf.mxu0
      %v1498 = vpop.f32.mrf.mxu0
      %v1499 = vadd.f32 %v1338, %v1498
      %v1500 = vpop.f32.mrf.mxu0
      %1501 = vmatprep.mubr.bf16.mxu0 0
      %1502 = vmatmul.mubr.bf16.gmra.mxu0 %v742
      %v1503 = vpop.f32.mrf.mxu0
      %v1504 = vadd.f32 %v1343, %v1503
      %v1505 = vpop.f32.mrf.mxu0
      %v1506 = vpop.f32.mrf.mxu0
      %v1507 = vadd.f32 %v1346, %v1506
      %v1508 = vpop.f32.mrf.mxu0
      %1509 = vmatprep.mubr.bf16.mxu0 0
      %1510 = vmatmul.mubr.bf16.gmra.mxu0 %v747
      %v1511 = vpop.f32.mrf.mxu0
      %v1512 = vadd.f32 %v1351, %v1511
      %v1513 = vpop.f32.mrf.mxu0
      %v1514 = vpop.f32.mrf.mxu0
      %v1515 = vadd.f32 %v1354, %v1514
      %v1516 = vpop.f32.mrf.mxu0
      %1517 = vmatprep.mubr.bf16.mxu0 0
      %1518 = vmatmul.mubr.bf16.gmra.mxu0 %v752
      %v1519 = vpop.f32.mrf.mxu0
      %v1520 = vadd.f32 %v1359, %v1519
      %v1521 = vpop.f32.mrf.mxu0
      %v1522 = vpop.f32.mrf.mxu0
      %v1523 = vadd.f32 %v1362, %v1522
      %v1524 = vpop.f32.mrf.mxu0
      %1525 = vmatprep.mubr.bf16.mxu0 0
      %1526 = vmatmul.mubr.bf16.gmra.mxu0 %v757
      %v1527 = vpop.f32.mrf.mxu0
      %v1528 = vadd.f32 %v1367, %v1527
      %v1529 = vpop.f32.mrf.mxu0
      %v1530 = vpop.f32.mrf.mxu0
      %v1531 = vadd.f32 %v1370, %v1530
      %v1532 = vpop.f32.mrf.mxu0
      %1533 = vmatprep.mubr.bf16.mxu0 0
      %1534 = vmatmul.mubr.bf16.gmra.mxu0 %v762
      %v1535 = vpop.f32.mrf.mxu0
      %v1536 = vadd.f32 %v1375, %v1535
      %v1537 = vpop.f32.mrf.mxu0
      %v1538 = vpop.f32.mrf.mxu0
      %v1539 = vadd.f32 %v1378, %v1538
      %v1540 = vpop.f32.mrf.mxu0
      %1541 = vmatprep.mubr.bf16.mxu0 0
      %1542 = vmatmul.mubr.bf16.gmra.mxu0 %v767
      %v1543 = vpop.f32.mrf.mxu0
      %v1544 = vadd.f32 %v1383, %v1543
      %v1545 = vpop.f32.mrf.mxu0
      %v1546 = vpop.f32.mrf.mxu0
      %v1547 = vadd.f32 %v1386, %v1546
      %v1548 = vpop.f32.mrf.mxu0
      %1549 = vmatprep.mubr.bf16.mxu0 0
      %1550 = vmatmul.mubr.bf16.gmra.mxu0 %v772
      %v1551 = vpop.f32.mrf.mxu0
      %v1552 = vadd.f32 %v1391, %v1551
      %v1553 = vpop.f32.mrf.mxu0
      %v1554 = vpop.f32.mrf.mxu0
      %v1555 = vadd.f32 %v1394, %v1554
      %v1556 = vpop.f32.mrf.mxu0
      %1557 = vmatprep.mubr.bf16.mxu0 0
      %1558 = vmatmul.mubr.bf16.gmra.mxu0 %v777
      %v1559 = vpop.f32.mrf.mxu0
      %v1560 = vadd.f32 %v1399, %v1559
      %v1561 = vpop.f32.mrf.mxu0
      %v1562 = vpop.f32.mrf.mxu0
      %v1563 = vadd.f32 %v1402, %v1562
      %v1564 = vpop.f32.mrf.mxu0
      %1565 = vmatprep.mubr.bf16.mxu0 0
      %1566 = vmatmul.mubr.bf16.gmra.mxu0 %v782
      %v1567 = vpop.f32.mrf.mxu0
      %v1568 = vadd.f32 %v1407, %v1567
      %v1569 = vpop.f32.mrf.mxu0
      %v1570 = vpop.f32.mrf.mxu0
      %v1571 = vadd.f32 %v1410, %v1570
      %v1572 = vpop.f32.mrf.mxu0
      %1573 = vmatprep.mubr.bf16.mxu0 0
      %1574 = vmatmul.mubr.bf16.gmra.mxu0 %v787
      %v1575 = vpop.f32.mrf.mxu0
      %v1576 = vadd.f32 %v1415, %v1575
      %v1577 = vpop.f32.mrf.mxu0
      %v1578 = vpop.f32.mrf.mxu0
      %v1579 = vadd.f32 %v1418, %v1578
      %v1580 = vpop.f32.mrf.mxu0
      %1581 = vmatprep.mubr.bf16.mxu0 0
      %1582 = vmatmul.mubr.bf16.gmra.mxu0 %v792
      %v1583 = vpop.f32.mrf.mxu0
      %v1584 = vadd.f32 %v1423, %v1583
      %v1585 = vpop.f32.mrf.mxu0
      %v1586 = vpop.f32.mrf.mxu0
      %v1587 = vadd.f32 %v1426, %v1586
      %v1588 = vpop.f32.mrf.mxu0
      %1589 = vmatprep.mubr.bf16.mxu0 0
      %1590 = vmatmul.mubr.bf16.gmra.mxu0 %v797
      %v1591 = vpop.f32.mrf.mxu0
      %v1592 = vadd.f32 %v1431, %v1591
      %v1593 = vpop.f32.mrf.mxu0
      %v1594 = vpop.f32.mrf.mxu0
      %v1595 = vadd.f32 %v1434, %v1594
      %v1596 = vpop.f32.mrf.mxu0
      %1597 = vmatprep.mubr.bf16.mxu0 0
      %1598 = vmatmul.mubr.bf16.gmra.mxu0 %v802
      %v1599 = vpop.f32.mrf.mxu0
      %v1600 = vadd.f32 %v1439, %v1599
      %v1601 = vpop.f32.mrf.mxu0
      %v1602 = vpop.f32.mrf.mxu0
      %v1603 = vadd.f32 %v1442, %v1602
      %v1604 = vpop.f32.mrf.mxu0
      %1605 = vdwg.mxu0
      %v1606 = vadd.f32 %v1480, %v1483
      %v1607 = vadd.f32 %v1606, %v1488
      %v1608 = vadd.f32 %v1607, %v1491
      %v1609 = vadd.f32 %v1608, %v1496
      %v1610 = vadd.f32 %v1609, %v1499
      %v1611 = vadd.f32 %v1610, %v1504
      %v1612 = vadd.f32 %v1611, %v1507
      %v1613 = vadd.f32 %v1612, %v1512
      %v1614 = vadd.f32 %v1613, %v1515
      %v1615 = vadd.f32 %v1614, %v1520
      %v1616 = vadd.f32 %v1615, %v1523
      %v1617 = vadd.f32 %v1616, %v1528
      %v1618 = vadd.f32 %v1617, %v1531
      %v1619 = vadd.f32 %v1618, %v1536
      %v1620 = vadd.f32 %v1619, %v1539
      %v1621 = vadd.f32 %v1620, %v1544
      %v1622 = vadd.f32 %v1621, %v1547
      %v1623 = vadd.f32 %v1622, %v1552
      %v1624 = vadd.f32 %v1623, %v1555
      %v1625 = vadd.f32 %v1624, %v1560
      %v1626 = vadd.f32 %v1625, %v1563
      %v1627 = vadd.f32 %v1626, %v1568
      %v1628 = vadd.f32 %v1627, %v1571
      %v1629 = vadd.f32 %v1628, %v1576
      %v1630 = vadd.f32 %v1629, %v1579
      %v1631 = vadd.f32 %v1630, %v1584
      %v1632 = vadd.f32 %v1631, %v1587
      %v1633 = vadd.f32 %v1632, %v1592
      %v1634 = vadd.f32 %v1633, %v1595
      %v1635 = vadd.f32 %v1634, %v1600
      %v1636 = vadd.f32 %v1635, %v1603
      %v1637 = vrot.slane %v1636, 4
      %v1638 = vadd.f32 %v1636, %v1637
      %v1639 = vrot.slane %v1638, 2
      %v1640 = vadd.f32 %v1638, %v1639
      %v1641 = vrot.slane %v1640, 1
      %v1642 = vadd.f32 %v1640, %v1641
      %v1643 = vmul.f32 %v1480, %v1480
      %v1644 = vmul.f32 %v1483, %v1483
      %v1645 = vmul.f32 %v1488, %v1488
      %v1646 = vmul.f32 %v1491, %v1491
      %v1647 = vmul.f32 %v1496, %v1496
      %v1648 = vmul.f32 %v1499, %v1499
      %v1649 = vmul.f32 %v1504, %v1504
      %v1650 = vmul.f32 %v1507, %v1507
      %v1651 = vmul.f32 %v1512, %v1512
      %v1652 = vmul.f32 %v1515, %v1515
      %v1653 = vmul.f32 %v1520, %v1520
      %v1654 = vmul.f32 %v1523, %v1523
      %v1655 = vmul.f32 %v1528, %v1528
      %v1656 = vmul.f32 %v1531, %v1531
      %v1657 = vmul.f32 %v1536, %v1536
      %v1658 = vmul.f32 %v1539, %v1539
      %v1659 = vmul.f32 %v1544, %v1544
      %v1660 = vmul.f32 %v1547, %v1547
      %v1661 = vmul.f32 %v1552, %v1552
      %v1662 = vmul.f32 %v1555, %v1555
      %v1663 = vmul.f32 %v1560, %v1560
      %v1664 = vmul.f32 %v1563, %v1563
      %v1665 = vmul.f32 %v1568, %v1568
      %v1666 = vmul.f32 %v1571, %v1571
      %v1667 = vmul.f32 %v1576, %v1576
      %v1668 = vmul.f32 %v1579, %v1579
      %v1669 = vmul.f32 %v1584, %v1584
      %v1670 = vmul.f32 %v1587, %v1587
      %v1671 = vmul.f32 %v1592, %v1592
      %v1672 = vmul.f32 %v1595, %v1595
      %v1673 = vmul.f32 %v1600, %v1600
      %v1674 = vmul.f32 %v1603, %v1603
      %v1675 = vadd.f32 %v1643, %v1644
      %v1676 = vadd.f32 %v1675, %v1645
      %v1677 = vadd.f32 %v1676, %v1646
      %v1678 = vadd.f32 %v1677, %v1647
      %v1679 = vadd.f32 %v1678, %v1648
      %v1680 = vadd.f32 %v1679, %v1649
      %v1681 = vadd.f32 %v1680, %v1650
      %v1682 = vadd.f32 %v1681, %v1651
      %v1683 = vadd.f32 %v1682, %v1652
      %v1684 = vadd.f32 %v1683, %v1653
      %v1685 = vadd.f32 %v1684, %v1654
      %v1686 = vadd.f32 %v1685, %v1655
      %v1687 = vadd.f32 %v1686, %v1656
      %v1688 = vadd.f32 %v1687, %v1657
      %v1689 = vadd.f32 %v1688, %v1658
      %v1690 = vadd.f32 %v1689, %v1659
      %v1691 = vadd.f32 %v1690, %v1660
      %v1692 = vadd.f32 %v1691, %v1661
      %v1693 = vadd.f32 %v1692, %v1662
      %v1694 = vadd.f32 %v1693, %v1663
      %v1695 = vadd.f32 %v1694, %v1664
      %v1696 = vadd.f32 %v1695, %v1665
      %v1697 = vadd.f32 %v1696, %v1666
      %v1698 = vadd.f32 %v1697, %v1667
      %v1699 = vadd.f32 %v1698, %v1668
      %v1700 = vadd.f32 %v1699, %v1669
      %v1701 = vadd.f32 %v1700, %v1670
      %v1702 = vadd.f32 %v1701, %v1671
      %v1703 = vadd.f32 %v1702, %v1672
      %v1704 = vadd.f32 %v1703, %v1673
      %v1705 = vadd.f32 %v1704, %v1674
      %v1706 = vrot.slane %v1705, 4
      %v1707 = vadd.f32 %v1705, %v1706
      %v1708 = vrot.slane %v1707, 2
      %v1709 = vadd.f32 %v1707, %v1708
      %v1710 = vrot.slane %v1709, 1
      %v1711 = vadd.f32 %v1709, %v1710
      %v1712 = vmul.f32 %v1642, 0.00390625
      %v1713 = vmul.f32 %v1711, 0.00390625
      %v1714 = vmul.f32 %v1712, %v1712
      %v1715 = vsub.f32 %v1713, %v1714
      %v1716 = vmax.f32 %v1715, 0.0
      %v1717 = vld [vmem:[%s278] sm:$0x1]
      %v1718 = vadd.f32 %v1716, 1e-05
      %v1719 = vrsqrt.pop %v1718
      %v1720 = vmul.f32 %v1717, %v1719
      %v1721 = vld [vmem:[%s281] sm:$0x1]
      %v1722 = vmul.f32 %v1712, %v1720
      %v1723 = vsub.f32 %v1721, %v1722
      %v1725 = vlaneseq
      %v1726 = vshrl.u32 %v1725, 7
      %v1727 = vsub.s32 0, %v1726
      %v1728 = vrot.slane %v1720, %v1727
      %v1730 = vmul.f32 %v1480, %v1728
      %v1731 = vmul.f32 %v1483, %v1728
      %v1732 = vmul.f32 %v1488, %v1728
      %v1733 = vmul.f32 %v1491, %v1728
      %v1734 = vmul.f32 %v1496, %v1728
      %v1735 = vmul.f32 %v1499, %v1728
      %v1736 = vmul.f32 %v1504, %v1728
      %v1737 = vmul.f32 %v1507, %v1728
      %v1738 = vmul.f32 %v1512, %v1728
      %v1739 = vmul.f32 %v1515, %v1728
      %v1740 = vmul.f32 %v1520, %v1728
      %v1741 = vmul.f32 %v1523, %v1728
      %v1742 = vmul.f32 %v1528, %v1728
      %v1743 = vmul.f32 %v1531, %v1728
      %v1744 = vmul.f32 %v1536, %v1728
      %v1745 = vmul.f32 %v1539, %v1728
      %v1746 = vmul.f32 %v1544, %v1728
      %v1747 = vmul.f32 %v1547, %v1728
      %v1748 = vmul.f32 %v1552, %v1728
      %v1749 = vmul.f32 %v1555, %v1728
      %v1750 = vmul.f32 %v1560, %v1728
      %v1751 = vmul.f32 %v1563, %v1728
      %v1752 = vmul.f32 %v1568, %v1728
      %v1753 = vmul.f32 %v1571, %v1728
      %v1754 = vmul.f32 %v1576, %v1728
      %v1755 = vmul.f32 %v1579, %v1728
      %v1756 = vmul.f32 %v1584, %v1728
      %v1757 = vmul.f32 %v1587, %v1728
      %v1758 = vmul.f32 %v1592, %v1728
      %v1759 = vmul.f32 %v1595, %v1728
      %v1760 = vmul.f32 %v1600, %v1728
      %v1761 = vmul.f32 %v1603, %v1728
      %v1763 = vlaneseq
      %v1764 = vshrl.u32 %v1763, 7
      %v1765 = vsub.s32 0, %v1764
      %v1766 = vrot.slane %v1723, %v1765
      %v1768 = vadd.f32 %v1730, %v1766
      %v1769 = vadd.f32 %v1731, %v1766
      %v1770 = vadd.f32 %v1732, %v1766
      %v1771 = vadd.f32 %v1733, %v1766
      %v1772 = vadd.f32 %v1734, %v1766
      %v1773 = vadd.f32 %v1735, %v1766
      %v1774 = vadd.f32 %v1736, %v1766
      %v1775 = vadd.f32 %v1737, %v1766
      %v1776 = vadd.f32 %v1738, %v1766
      %v1777 = vadd.f32 %v1739, %v1766
      %v1778 = vadd.f32 %v1740, %v1766
      %v1779 = vadd.f32 %v1741, %v1766
      %v1780 = vadd.f32 %v1742, %v1766
      %v1781 = vadd.f32 %v1743, %v1766
      %v1782 = vadd.f32 %v1744, %v1766
      %v1783 = vadd.f32 %v1745, %v1766
      %v1784 = vadd.f32 %v1746, %v1766
      %v1785 = vadd.f32 %v1747, %v1766
      %v1786 = vadd.f32 %v1748, %v1766
      %v1787 = vadd.f32 %v1749, %v1766
      %v1788 = vadd.f32 %v1750, %v1766
      %v1789 = vadd.f32 %v1751, %v1766
      %v1790 = vadd.f32 %v1752, %v1766
      %v1791 = vadd.f32 %v1753, %v1766
      %v1792 = vadd.f32 %v1754, %v1766
      %v1793 = vadd.f32 %v1755, %v1766
      %v1794 = vadd.f32 %v1756, %v1766
      %v1795 = vadd.f32 %v1757, %v1766
      %v1796 = vadd.f32 %v1758, %v1766
      %v1797 = vadd.f32 %v1759, %v1766
      %v1798 = vadd.f32 %v1760, %v1766
      %v1799 = vadd.f32 %v1761, %v1766
      %v1800 = vmax.f32 %v1768, 0.0
      %v1801 = vmax.f32 %v1769, 0.0
      %v1802 = vmax.f32 %v1770, 0.0
      %v1803 = vmax.f32 %v1771, 0.0
      %v1804 = vmax.f32 %v1772, 0.0
      %v1805 = vmax.f32 %v1773, 0.0
      %v1806 = vmax.f32 %v1774, 0.0
      %v1807 = vmax.f32 %v1775, 0.0
      %v1808 = vmax.f32 %v1776, 0.0
      %v1809 = vmax.f32 %v1777, 0.0
      %v1810 = vmax.f32 %v1778, 0.0
      %v1811 = vmax.f32 %v1779, 0.0
      %v1812 = vmax.f32 %v1780, 0.0
      %v1813 = vmax.f32 %v1781, 0.0
      %v1814 = vmax.f32 %v1782, 0.0
      %v1815 = vmax.f32 %v1783, 0.0
      %v1816 = vmax.f32 %v1784, 0.0
      %v1817 = vmax.f32 %v1785, 0.0
      %v1818 = vmax.f32 %v1786, 0.0
      %v1819 = vmax.f32 %v1787, 0.0
      %v1820 = vmax.f32 %v1788, 0.0
      %v1821 = vmax.f32 %v1789, 0.0
      %v1822 = vmax.f32 %v1790, 0.0
      %v1823 = vmax.f32 %v1791, 0.0
      %v1824 = vmax.f32 %v1792, 0.0
      %v1825 = vmax.f32 %v1793, 0.0
      %v1826 = vmax.f32 %v1794, 0.0
      %v1827 = vmax.f32 %v1795, 0.0
      %v1828 = vmax.f32 %v1796, 0.0
      %v1829 = vmax.f32 %v1797, 0.0
      %v1830 = vmax.f32 %v1798, 0.0
      %v1831 = vmax.f32 %v1799, 0.0
      %v1832 = vld [vmem:[%s2] sm:$0xff]
      %v1833 = vld [vmem:[%s2 + $0x8] sm:$0xff]
      %v1834 = vld [vmem:[%s2 + $0x10] sm:$0xff]
      %v1835 = vld [vmem:[%s2 + $0x18] sm:$0xff]
      %v1836 = vld [vmem:[%s2 + $0x20] sm:$0xff]
      %v1837 = vld [vmem:[%s2 + $0x28] sm:$0xff]
      %v1838 = vld [vmem:[%s2 + $0x30] sm:$0xff]
      %v1839 = vld [vmem:[%s2 + $0x38] sm:$0xff]
      %v1840 = vld [vmem:[%s2 + $0x40] sm:$0xff]
      %v1841 = vld [vmem:[%s2 + $0x48] sm:$0xff]
      %v1842 = vld [vmem:[%s2 + $0x50] sm:$0xff]
      %v1843 = vld [vmem:[%s2 + $0x58] sm:$0xff]
      %v1844 = vld [vmem:[%s2 + $0x60] sm:$0xff]
      %v1845 = vld [vmem:[%s2 + $0x68] sm:$0xff]
      %v1846 = vld [vmem:[%s2 + $0x70] sm:$0xff]
      %v1847 = vld [vmem:[%s2 + $0x78] sm:$0xff]
      %1848 = vmatprep.subr.mxu0 0.0
      %1849 = vmatpush1.msra.mxu0 %v1815
      %1850 = vmatprep.subr.mxu0 0.0
      %1851 = vmatpush1.msra.mxu0 %v1814
      %1852 = vmatprep.subr.mxu0 0.0
      %1853 = vmatpush1.msra.mxu0 %v1813
      %1854 = vmatprep.subr.mxu0 0.0
      %1855 = vmatpush1.msra.mxu0 %v1812
      %1856 = vmatprep.subr.mxu0 0.0
      %1857 = vmatpush1.msra.mxu0 %v1811
      %1858 = vmatprep.subr.mxu0 0.0
      %1859 = vmatpush1.msra.mxu0 %v1810
      %1860 = vmatprep.subr.mxu0 0.0
      %1861 = vmatpush1.msra.mxu0 %v1809
      %1862 = vmatprep.subr.mxu0 0.0
      %1863 = vmatpush1.msra.mxu0 %v1808
      %1864 = vmatprep.subr.mxu0 0.0
      %1865 = vmatpush1.msra.mxu0 %v1807
      %1866 = vmatprep.subr.mxu0 0.0
      %1867 = vmatpush1.msra.mxu0 %v1806
      %1868 = vmatprep.subr.mxu0 0.0
      %1869 = vmatpush1.msra.mxu0 %v1805
      %1870 = vmatprep.subr.mxu0 0.0
      %1871 = vmatpush1.msra.mxu0 %v1804
      %1872 = vmatprep.subr.mxu0 0.0
      %1873 = vmatpush1.msra.mxu0 %v1803
      %1874 = vmatprep.subr.mxu0 0.0
      %1875 = vmatpush1.msra.mxu0 %v1802
      %1876 = vmatprep.subr.mxu0 0.0
      %1877 = vmatpush1.msra.mxu0 %v1801
      %1878 = vmatprep.subr.mxu0 0.0
      %1879 = vmatpush1.msra.mxu0 %v1800
      %1880 = vmatprep.subr.mxu0 0.0
      %1881 = vmatpush2.msra.mxu0 %v1831
      %1882 = vmatprep.subr.mxu0 0.0
      %1883 = vmatpush2.msra.mxu0 %v1830
      %1884 = vmatprep.subr.mxu0 0.0
      %1885 = vmatpush2.msra.mxu0 %v1829
      %1886 = vmatprep.subr.mxu0 0.0
      %1887 = vmatpush2.msra.mxu0 %v1828
      %1888 = vmatprep.subr.mxu0 0.0
      %1889 = vmatpush2.msra.mxu0 %v1827
      %1890 = vmatprep.subr.mxu0 0.0
      %1891 = vmatpush2.msra.mxu0 %v1826
      %1892 = vmatprep.subr.mxu0 0.0
      %1893 = vmatpush2.msra.mxu0 %v1825
      %1894 = vmatprep.subr.mxu0 0.0
      %1895 = vmatpush2.msra.mxu0 %v1824
      %1896 = vmatprep.subr.mxu0 0.0
      %1897 = vmatpush2.msra.mxu0 %v1823
      %1898 = vmatprep.subr.mxu0 0.0
      %1899 = vmatpush2.msra.mxu0 %v1822
      %1900 = vmatprep.subr.mxu0 0.0
      %1901 = vmatpush2.msra.mxu0 %v1821
      %1902 = vmatprep.subr.mxu0 0.0
      %1903 = vmatpush2.msra.mxu0 %v1820
      %1904 = vmatprep.subr.mxu0 0.0
      %1905 = vmatpush2.msra.mxu0 %v1819
      %1906 = vmatprep.subr.mxu0 0.0
      %1907 = vmatpush2.msra.mxu0 %v1818
      %1908 = vmatprep.subr.mxu0 0.0
      %1909 = vmatpush2.msra.mxu0 %v1817
      %1910 = vmatprep.subr.mxu0 0.0
      %1911 = vmatpush2.msra.mxu0 %v1816
      %1912 = vmatprep.mubr.f32.mxu0 %v1833
      %1913 = vmatmul.mubr.f32.gmra.mxu0 %v1832
      %v1914 = vpop.f32.mrf.mxu0
      %v1915 = vadd.f32 0.0, %v1914
      %v1916 = vpop.f32.mrf.mxu0
      %1917 = vmatprep.mubr.f32.mxu0 %v1835
      %1918 = vmatmul.mubr.f32.gmra.mxu0 %v1834
      %v1919 = vpop.f32.mrf.mxu0
      %v1920 = vadd.f32 0.0, %v1919
      %v1921 = vpop.f32.mrf.mxu0
      %1922 = vmatprep.mubr.f32.mxu0 %v1837
      %1923 = vmatmul.mubr.f32.gmra.mxu0 %v1836
      %v1924 = vpop.f32.mrf.mxu0
      %v1925 = vadd.f32 0.0, %v1924
      %v1926 = vpop.f32.mrf.mxu0
      %1927 = vmatprep.mubr.f32.mxu0 %v1839
      %1928 = vmatmul.mubr.f32.gmra.mxu0 %v1838
      %v1929 = vpop.f32.mrf.mxu0
      %v1930 = vadd.f32 0.0, %v1929
      %v1931 = vpop.f32.mrf.mxu0
      %1932 = vmatprep.mubr.f32.mxu0 %v1841
      %1933 = vmatmul.mubr.f32.gmra.mxu0 %v1840
      %v1934 = vpop.f32.mrf.mxu0
      %v1935 = vadd.f32 0.0, %v1934
      %v1936 = vpop.f32.mrf.mxu0
      %1937 = vmatprep.mubr.f32.mxu0 %v1843
      %1938 = vmatmul.mubr.f32.gmra.mxu0 %v1842
      %v1939 = vpop.f32.mrf.mxu0
      %v1940 = vadd.f32 0.0, %v1939
      %v1941 = vpop.f32.mrf.mxu0
      %1942 = vmatprep.mubr.f32.mxu0 %v1845
      %1943 = vmatmul.mubr.f32.gmra.mxu0 %v1844
      %v1944 = vpop.f32.mrf.mxu0
      %v1945 = vadd.f32 0.0, %v1944
      %v1946 = vpop.f32.mrf.mxu0
      %1947 = vmatprep.mubr.f32.mxu0 %v1847
      %1948 = vmatmul.mubr.f32.gmra.mxu0 %v1846
      %v1949 = vpop.f32.mrf.mxu0
      %v1950 = vadd.f32 0.0, %v1949
      %v1951 = vpop.f32.mrf.mxu0
      %1952 = vdwg.mxu0
      %v1953 = vpack.c.bf16 %v1920, %v1915
      %v1954 = vpack.c.bf16 %v1930, %v1925
      %v1955 = vpack.c.bf16 %v1940, %v1935
      %v1956 = vpack.c.bf16 %v1950, %v1945
      %v1961 = vunpack.c.l.b16 %v1953
      %v1962 = vunpack.c.h.b16 %v1953
      %v1963 = vunpack.c.l.b16 %v1954
      %v1964 = vunpack.c.h.b16 %v1954
      %v1965 = vunpack.c.l.b16 %v1955
      %v1966 = vunpack.c.h.b16 %v1955
      %v1967 = vunpack.c.l.b16 %v1956
      %v1968 = vunpack.c.h.b16 %v1956
      %v1969 = vpack.c.b16 %v1961, %v1961
      %v1970 = vpack.c.b16 %v1962, %v1962
      %v1971 = vpack.c.b16 %v1963, %v1963
      %v1972 = vpack.c.b16 %v1964, %v1964
      %v1973 = vpack.c.b16 %v1965, %v1965
      %v1974 = vpack.c.b16 %v1966, %v1966
      %v1975 = vpack.c.b16 %v1967, %v1967
      %v1976 = vpack.c.b16 %v1968, %v1968
      %1985 = vst [vmem:[%s289] sm:$0xf] %v1969
      %1986 = vst [vmem:[%s289 + $0x4] sm:$0xf] %v1970
      %1987 = vst [vmem:[%s289 + $0x8] sm:$0xf] %v1971
      %1988 = vst [vmem:[%s289 + $0xc] sm:$0xf] %v1972
      %1989 = vst [vmem:[%s289 + $0x10] sm:$0xf] %v1973
      %1990 = vst [vmem:[%s289 + $0x14] sm:$0xf] %v1974
      %1991 = vst [vmem:[%s289 + $0x18] sm:$0xf] %v1975
      %1992 = vst [vmem:[%s289 + $0x1c] sm:$0xf] %v1976
      %p1993 = scmp.lt.s32.totalorder %s20, 1
      %s1994 = scalar_select %p1993, %s20, 1
      %p1995 = scmp.lt.s32.totalorder %s21, 0
      %s1996 = scalar_select %p1995, %s21, 0
      %s1997 = smul.addr %s1994, 8
      %s1998 = sadd.s32 %s1996, %s1997
      %s1999 = smul.addr %s1998, 4
      %s2000 = scalar_lea.vmem %s5, %s1999
      // Predicated region
      $region41: #{basic_block_ap_forward.3} parent=39 // pred_check
        %p2001 = pneg %p173
      $region42: #{basic_block_ap_forward.3} parent=39 // pred_check_branch
        %2003 = sbr.rel (%p2001) target = $region44
      $region43: #{basic_block_ap_forward.3} parent=39 // pred_region
        _
      $region44: #{basic_block_ap_forward.3} parent=39 // pred_fallthru
        _
    $region40: #{basic_block_ap_forward.3} parent=5 // pred_fallthru
      _
    %p2004 = scmp.le.s32.totalorder 2, %s11
    // Predicated region
    $region45: #{basic_block_ap_forward.3} parent=5 // pred_check
      %p2005 = pneg %p2004
    $region46: #{basic_block_ap_forward.3} parent=5 // pred_check_branch
      %2007 = sbr.rel (%p2005) target = $region48
    $region47: #{basic_block_ap_forward.3} parent=5 // pred_region
      %s2008 = ssub.s32 %s11, 2
      // Predicated region
      $region49: #{basic_block_ap_forward.3} parent=47 // pred_check
        %p2009 = pneg %p179
      $region50: #{basic_block_ap_forward.3} parent=47 // pred_check_branch
        %2011 = sbr.rel (%p2009) target = $region52
      $region51: #{basic_block_ap_forward.3} parent=47 // pred_region
        %p2012 = scmp.lt.s32.totalorder %s22, 1
        %s2013 = scalar_select %p2012, %s22, 1
        %p2014 = scmp.lt.s32.totalorder %s23, 0
        %s2015 = scalar_select %p2014, %s23, 0
        %s2016 = smul.addr %s2013, 8
        %s2017 = sadd.s32 %s2015, %s2016
        %s2018 = smul.addr %s2017, 4
        %s2019 = scalar_lea.vmem %s5, %s2018
      $region52: #{basic_block_ap_forward.3} parent=47 // pred_fallthru
        _
    $region48: #{basic_block_ap_forward.3} parent=5 // pred_fallthru
      _
  $region6: #{basic_block_ap_forward.3} parent=0 // loop_footer
    %s15 = sadd.s32 1, %s11
  $region7: #{basic_block_ap_forward.3} parent=0 // loop_footer_branch
    %10 = sbr.rel target = $region3
  $region8: #{basic_block_ap_forward.3} parent=0 // loop_exit
    _

// kernel: basic_block_ap_forward.4
$region0: #{basic_block_ap_forward.4}
  #allocation0 [shape = 'u32[]', space=smem, size = 0x4, offset = 0x4, fixed_abs, tag = 'smem constant byte address 0x4 - core index']
  #allocation1 [shape = 'u32[144,128]{1,0:T(1,128)}', space=vmem, size = 0x12000, scoped, tag = 'internal scratch']
  %s0 = inlined_call_operand.vmem [shape: bf16[2,256,128], index: 0, kind: input, shape index: {}]
  %s1 = inlined_call_operand.vmem [shape: bf16[128,128], index: 1, kind: input, shape index: {}]
  %s2 = inlined_call_operand.vmem [shape: f32[64,256], index: 2, kind: input, shape index: {}]
  %s3 = inlined_call_operand.vmem [shape: f32[1,128], index: 3, kind: input, shape index: {}]
  %s4 = inlined_call_operand.vmem [shape: f32[1,128], index: 4, kind: input, shape index: {}]
  %s5 = inlined_call_operand.vmem [shape: bf16[2,64,128], index: 5, kind: output, shape index: {}]
  %s6 = sld [smem:[#allocation0]]
  $region53: #{basic_block_ap_forward.4} parent=0
    _
  %s8 = ssub.s32 1, %s6
  %s9 = scalar_select 0, %s8, %s6
  loop: start=0, step=1, limit=4
  $region2: #{basic_block_ap_forward.4} parent=0 // loop_pre_header
    _
  $region3: #{basic_block_ap_forward.4} parent=0 // loop_header
    %s11 = sphi 0, %s15
    %p12 = scmp.ge.s32.totalorder %s11, 4
    %s18 = sphi 0, %s30
    %s19 = sphi 0, %s26
    %s20 = sphi 0, %s18
    %s21 = sphi 0, %s19
    %s22 = sphi 0, %s20
    %s23 = sphi 0, %s21
    %s33 = sphi 0, %s35
    %s36 = sphi 0, %s33
    %s37 = sphi 0, %s36
    %s53 = sphi 0, %s37
    %s59 = sphi 0, %s61
    %s62 = sphi 0, %s59
    %s63 = sphi 0, %s62
    %s79 = sphi 0, %s63
    %s83 = sphi 0, %s83
    %s85 = sphi 0, %s83
    %s86 = sphi 0, %s85
    %s100 = sphi 0, %s86
    %s106 = sphi 0, %s108
    %s109 = sphi 0, %s106
    %s110 = sphi 0, %s109
    %s126 = sphi 0, %s110
    %s132 = sphi 0, %s134
    %s135 = sphi 0, %s132
    %s136 = sphi 0, %s135
    %s152 = sphi 0, %s136
    %s160 = sphi 0, %s162
    %s163 = sphi 0, %s160
    %s164 = sphi 0, %s163
    %s180 = sphi 0, %s164
  $region4: #{basic_block_ap_forward.4} parent=0 // loop_header_branch
    %14 = sbr.rel (%p12) target = $region8
  $region5: #{basic_block_ap_forward.4} parent=0 // loop_body
    %s16 = ssub.s32 %s11, 1
    %s17 = ssub.s32 %s11, 2
    %s24 = sadd.s32 1, %s19
    %p25 = scmp.ge.s32.totalorder %s24, 1
    %s26 = scalar_select %p25, 0, %s24
    %s27 = sadd.s32 1, %s18
    %s28 = scalar_select %p25, %s27, %s18
    %p29 = scmp.ge.s32.totalorder %s28, 2
    %s30 = scalar_select %p29, 0, %s28
    %s31 = ssub.s32 %s18, %s30
    %p32 = scmp.eq.s32.totalorder %s31, 0
    %s34 = sadd.s32 %s33, 1
    %s35 = scalar_select %p32, %s33, %s34
    %p38 = pneg %p32
    %p39 = scmp.eq.s32.totalorder %s11, 1
    %p40 = por %p38, %p39
    %p41 = scmp.ne.s32.totalorder %s33, %s36
    %p42 = scmp.eq.s32.totalorder %s11, 0
    %p43 = por %p41, %p42
    %p44 = scmp.ne.s32.totalorder %s33, %s36
    %p45 = scmp.eq.s32.totalorder %s16, 1
    %p46 = por %p44, %p45
    %p47 = scmp.ne.s32.totalorder %s36, %s37
    %p48 = scmp.eq.s32.totalorder %s16, 0
    %p49 = por %p47, %p48
    %p50 = scmp.ne.s32.totalorder %s36, %s37
    %p51 = scmp.eq.s32.totalorder %s17, 1
    %p52 = por %p50, %p51
    %p54 = scmp.ne.s32.totalorder %s37, %s53
    %p55 = scmp.eq.s32.totalorder %s17, 0
    %p56 = por %p54, %p55
    %s57 = ssub.s32 %s19, %s26
    %p58 = scmp.eq.s32.totalorder %s57, 0
    %s60 = sadd.s32 %s59, 1
    %s61 = scalar_select %p58, %s59, %s60
    %p64 = pneg %p58
    %p65 = scmp.eq.s32.totalorder %s11, 1
    %p66 = por %p64, %p65
    %p67 = scmp.ne.s32.totalorder %s59, %s62
    %p68 = scmp.eq.s32.totalorder %s11, 0
    %p69 = por %p67, %p68
    %p70 = scmp.ne.s32.totalorder %s59, %s62
    %p71 = scmp.eq.s32.totalorder %s16, 1
    %p72 = por %p70, %p71
    %p73 = scmp.ne.s32.totalorder %s62, %s63
    %p74 = scmp.eq.s32.totalorder %s16, 0
    %p75 = por %p73, %p74
    %p76 = scmp.ne.s32.totalorder %s62, %s63
    %p77 = scmp.eq.s32.totalorder %s17, 1
    %p78 = por %p76, %p77
    %p80 = scmp.ne.s32.totalorder %s63, %s79
    %p81 = scmp.eq.s32.totalorder %s17, 0
    %p82 = por %p80, %p81
    %s84 = sadd.s32 %s83, 1
    %p87 = scmp.eq.s32.totalorder %s11, 1
    %p88 = scmp.ne.s32.totalorder %s83, %s85
    %p89 = scmp.eq.s32.totalorder %s11, 0
    %p90 = por %p88, %p89
    %p91 = scmp.ne.s32.totalorder %s83, %s85
    %p92 = scmp.eq.s32.totalorder %s16, 1
    %p93 = por %p91, %p92
    %p94 = scmp.ne.s32.totalorder %s85, %s86
    %p95 = scmp.eq.s32.totalorder %s16, 0
    %p96 = por %p94, %p95
    %p97 = scmp.ne.s32.totalorder %s85, %s86
    %p98 = scmp.eq.s32.totalorder %s17, 1
    %p99 = por %p97, %p98
    %p101 = scmp.ne.s32.totalorder %s86, %s100
    %p102 = scmp.eq.s32.totalorder %s17, 0
    %p103 = por %p101, %p102
    %s104 = ssub.s32 %s19, %s26
    %p105 = scmp.eq.s32.totalorder %s104, 0
    %s107 = sadd.s32 %s106, 1
    %s108 = scalar_select %p105, %s106, %s107
    %p111 = pneg %p105
    %p112 = scmp.eq.s32.totalorder %s11, 1
    %p113 = por %p111, %p112
    %p114 = scmp.ne.s32.totalorder %s106, %s109
    %p115 = scmp.eq.s32.totalorder %s11, 0
    %p116 = por %p114, %p115
    %p117 = scmp.ne.s32.totalorder %s106, %s109
    %p118 = scmp.eq.s32.totalorder %s16, 1
    %p119 = por %p117, %p118
    %p120 = scmp.ne.s32.totalorder %s109, %s110
    %p121 = scmp.eq.s32.totalorder %s16, 0
    %p122 = por %p120, %p121
    %p123 = scmp.ne.s32.totalorder %s109, %s110
    %p124 = scmp.eq.s32.totalorder %s17, 1
    %p125 = por %p123, %p124
    %p127 = scmp.ne.s32.totalorder %s110, %s126
    %p128 = scmp.eq.s32.totalorder %s17, 0
    %p129 = por %p127, %p128
    %s130 = ssub.s32 %s19, %s26
    %p131 = scmp.eq.s32.totalorder %s130, 0
    %s133 = sadd.s32 %s132, 1
    %s134 = scalar_select %p131, %s132, %s133
    %p137 = pneg %p131
    %p138 = scmp.eq.s32.totalorder %s11, 1
    %p139 = por %p137, %p138
    %p140 = scmp.ne.s32.totalorder %s132, %s135
    %p141 = scmp.eq.s32.totalorder %s11, 0
    %p142 = por %p140, %p141
    %p143 = scmp.ne.s32.totalorder %s132, %s135
    %p144 = scmp.eq.s32.totalorder %s16, 1
    %p145 = por %p143, %p144
    %p146 = scmp.ne.s32.totalorder %s135, %s136
    %p147 = scmp.eq.s32.totalorder %s16, 0
    %p148 = por %p146, %p147
    %p149 = scmp.ne.s32.totalorder %s135, %s136
    %p150 = scmp.eq.s32.totalorder %s17, 1
    %p151 = por %p149, %p150
    %p153 = scmp.ne.s32.totalorder %s136, %s152
    %p154 = scmp.eq.s32.totalorder %s17, 0
    %p155 = por %p153, %p154
    %s156 = ssub.s32 %s18, %s30
    %s157 = ssub.s32 %s19, %s26
    %s158 = sor.u32 %s156, %s157
    %p159 = scmp.eq.s32.totalorder %s158, 0
    %s161 = sadd.s32 %s160, 1
    %s162 = scalar_select %p159, %s160, %s161
    %p165 = pneg %p159
    %p166 = scmp.eq.s32.totalorder %s11, 1
    %p167 = por %p165, %p166
    %p168 = scmp.ne.s32.totalorder %s160, %s163
    %p169 = scmp.eq.s32.totalorder %s11, 0
    %p170 = por %p168, %p169
    %p171 = scmp.ne.s32.totalorder %s160, %s163
    %p172 = scmp.eq.s32.totalorder %s16, 1
    %p173 = por %p171, %p172
    %p174 = scmp.ne.s32.totalorder %s163, %s164
    %p175 = scmp.eq.s32.totalorder %s16, 0
    %p176 = por %p174, %p175
    %p177 = scmp.ne.s32.totalorder %s163, %s164
    %p178 = scmp.eq.s32.totalorder %s17, 1
    %p179 = por %p177, %p178
    %p181 = scmp.ne.s32.totalorder %s164, %s180
    %p182 = scmp.eq.s32.totalorder %s17, 0
    %p183 = por %p181, %p182
    %p184 = scmp.le.s32.totalorder 1, %s11
    %p185 = scmp.lt.s32.totalorder %s11, 3
    %p186 = pnand %p184, %p185
    %p187 = pneg %p186
    // Predicated region
    $region9: #{basic_block_ap_forward.4} parent=5 // pred_check
      _
    $region10: #{basic_block_ap_forward.4} parent=5 // pred_check_branch
      %189 = sbr.rel (%p186) target = $region12
    $region11: #{basic_block_ap_forward.4} parent=5 // pred_region
      %s190 = ssub.s32 %s11, 1
      // Predicated region
      $region13: #{basic_block_ap_forward.4} parent=11 // pred_check
        %p191 = pneg %p75
      $region14: #{basic_block_ap_forward.4} parent=11 // pred_check_branch
        %193 = sbr.rel (%p191) target = $region16
      $region15: #{basic_block_ap_forward.4} parent=11 // pred_region
        %p194 = scmp.lt.s32.totalorder %s21, 0
        %s195 = scalar_select %p194, %s21, 0
        %s196 = smul.addr %s195, 4
        %s197 = scalar_lea.vmem %s1, %s196
      $region16: #{basic_block_ap_forward.4} parent=11 // pred_fallthru
        _
      // Predicated region
      $region17: #{basic_block_ap_forward.4} parent=11 // pred_check
        %p198 = pneg %p96
      $region18: #{basic_block_ap_forward.4} parent=11 // pred_check_branch
        %200 = sbr.rel (%p198) target = $region20
      $region19: #{basic_block_ap_forward.4} parent=11 // pred_region
        _
      $region20: #{basic_block_ap_forward.4} parent=11 // pred_fallthru
        _
      // Predicated region
      $region21: #{basic_block_ap_forward.4} parent=11 // pred_check
        %p201 = pneg %p122
      $region22: #{basic_block_ap_forward.4} parent=11 // pred_check_branch
        %203 = sbr.rel (%p201) target = $region24
      $region23: #{basic_block_ap_forward.4} parent=11 // pred_region
        %p204 = scmp.lt.s32.totalorder %s21, 0
        %s205 = scalar_select %p204, %s21, 0
        %s206 = scalar_lea.vmem %s3, %s205
      $region24: #{basic_block_ap_forward.4} parent=11 // pred_fallthru
        _
      // Predicated region
      $region25: #{basic_block_ap_forward.4} parent=11 // pred_check
        %p207 = pneg %p148
      $region26: #{basic_block_ap_forward.4} parent=11 // pred_check_branch
        %209 = sbr.rel (%p207) target = $region28
      $region27: #{basic_block_ap_forward.4} parent=11 // pred_region
        %p210 = scmp.lt.s32.totalorder %s21, 0
        %s211 = scalar_select %p210, %s21, 0
        %s212 = scalar_lea.vmem %s4, %s211
      $region28: #{basic_block_ap_forward.4} parent=11 // pred_fallthru
        _
    $region12: #{basic_block_ap_forward.4} parent=5 // pred_fallthru
      _
    %p213 = scmp.lt.s32.totalorder %s11, 2
    // Predicated region
    $region29: #{basic_block_ap_forward.4} parent=5 // pred_check
      %p214 = pneg %p213
    $region30: #{basic_block_ap_forward.4} parent=5 // pred_check_branch
      %216 = sbr.rel (%p214) target = $region32
    $region31: #{basic_block_ap_forward.4} parent=5 // pred_region
      // Predicated region
      $region33: #{basic_block_ap_forward.4} parent=31 // pred_check
        %p217 = pneg %p43
      $region34: #{basic_block_ap_forward.4} parent=31 // pred_check_branch
        %219 = sbr.rel (%p217) target = $region36
      $region35: #{basic_block_ap_forward.4} parent=31 // pred_region
        %p220 = scmp.lt.s32.totalorder %s18, 1
        %s221 = scalar_select %p220, %s18, 1
        %s222 = smul.addr %s221, 32
        %s223 = smul.addr %s222, 4
        %s224 = scalar_lea.vmem %s0, %s223
      $region36: #{basic_block_ap_forward.4} parent=31 // pred_fallthru
        _
    $region32: #{basic_block_ap_forward.4} parent=5 // pred_fallthru
      _
    %p225 = scmp.le.s32.totalorder 1, %s11
    %p226 = scmp.lt.s32.totalorder %s11, 3
    %p227 = pnand %p225, %p226
    %p228 = pneg %p227
    // Predicated region
    $region37: #{basic_block_ap_forward.4} parent=5 // pred_check
      _
    $region38: #{basic_block_ap_forward.4} parent=5 // pred_check_branch
      %230 = sbr.rel (%p227) target = $region40
    $region39: #{basic_block_ap_forward.4} parent=5 // pred_region
      %s231 = ssub.s32 %s11, 1
      %p232 = scmp.lt.s32.totalorder %s20, 1
      %s233 = scalar_select %p232, %s20, 1
      %s234 = smul.addr %s233, 32
      %s235 = smul.addr %s234, 4
      %s236 = scalar_lea.vmem %s0, %s235
      %p237 = pneg %p49
      %p238 = pneg %p46
      %p239 = scmp.lt.s32.totalorder %s21, 0
      %s240 = scalar_select %p239, %s21, 0
      %s241 = smul.addr %s240, 4
      %s242 = scalar_lea.vmem %s1, %s241
      %p243 = pneg %p75
      %p244 = pneg %p72
      %p245 = pneg %p96
      %p246 = pneg %p93
      %p247 = scmp.lt.s32.totalorder %s21, 0
      %s248 = scalar_select %p247, %s21, 0
      %s249 = scalar_lea.vmem %s3, %s248
      %p250 = pneg %p122
      %p251 = pneg %p119
      %p252 = scmp.lt.s32.totalorder %s21, 0
      %s253 = scalar_select %p252, %s21, 0
      %s254 = scalar_lea.vmem %s4, %s253
      %p255 = pneg %p148
      %p256 = pneg %p145
      %p257 = pneg %p176
      %p258 = pneg %p173
      %p259 = scmp.lt.s32.totalorder %s20, 1
      %s260 = scalar_select %p259, %s20, 1
      %p261 = scmp.lt.s32.totalorder %s21, 0
      %s262 = scalar_select %p261, %s21, 0
      %s263 = smul.addr %s260, 8
      %s264 = sadd.s32 %s262, %s263
      %s265 = smul.addr %s264, 4
      %s266 = scalar_lea.vmem %s5, %s265
      %p267 = scmp.lt.s32.totalorder %s20, 1
      %s268 = scalar_select %p267, %s20, 1
      %s269 = smul.addr %s268, 32
      %s270 = smul.addr %s269, 4
      %s271 = scalar_lea.vmem %s0, %s270
      %p272 = scmp.lt.s32.totalorder %s21, 0
      %s273 = scalar_select %p272, %s21, 0
      %s274 = smul.addr %s273, 4
      %s275 = scalar_lea.vmem %s1, %s274
      %p276 = scmp.lt.s32.totalorder %s21, 0
      %s277 = scalar_select %p276, %s21, 0
      %s278 = scalar_lea.vmem %s3, %s277
      %p279 = scmp.lt.s32.totalorder %s21, 0
      %s280 = scalar_select %p279, %s21, 0
      %s281 = scalar_lea.vmem %s4, %s280
      %p282 = scmp.lt.s32.totalorder %s20, 1
      %s283 = scalar_select %p282, %s20, 1
      %p284 = scmp.lt.s32.totalorder %s21, 0
      %s285 = scalar_select %p284, %s21, 0
      %s286 = smul.addr %s283, 8
      %s287 = sadd.s32 %s285, %s286
      %s288 = smul.addr %s287, 4
      %s289 = scalar_lea.vmem %s5, %s288
      %v291 = vld [vmem:[%s271] sm:$0xf]
      %v292 = vld [vmem:[%s271 + $0x4] sm:$0xf]
      %v293 = vld [vmem:[%s271 + $0x8] sm:$0xf]
      %v294 = vld [vmem:[%s271 + $0xc] sm:$0xf]
      %v295 = vld [vmem:[%s271 + $0x10] sm:$0xf]
      %v296 = vld [vmem:[%s271 + $0x14] sm:$0xf]
      %v297 = vld [vmem:[%s271 + $0x18] sm:$0xf]
      %v298 = vld [vmem:[%s271 + $0x1c] sm:$0xf]
      %v299 = vld [vmem:[%s271 + $0x20] sm:$0xf]
      %v300 = vld [vmem:[%s271 + $0x24] sm:$0xf]
      %v301 = vld [vmem:[%s271 + $0x28] sm:$0xf]
      %v302 = vld [vmem:[%s271 + $0x2c] sm:$0xf]
      %v303 = vld [vmem:[%s271 + $0x30] sm:$0xf]
      %v304 = vld [vmem:[%s271 + $0x34] sm:$0xf]
      %v305 = vld [vmem:[%s271 + $0x38] sm:$0xf]
      %v306 = vld [vmem:[%s271 + $0x3c] sm:$0xf]
      %v307 = vld [vmem:[%s271 + $0x40] sm:$0xf]
      %v308 = vld [vmem:[%s271 + $0x44] sm:$0xf]
      %v309 = vld [vmem:[%s271 + $0x48] sm:$0xf]
      %v310 = vld [vmem:[%s271 + $0x4c] sm:$0xf]
      %v311 = vld [vmem:[%s271 + $0x50] sm:$0xf]
      %v312 = vld [vmem:[%s271 + $0x54] sm:$0xf]
      %v313 = vld [vmem:[%s271 + $0x58] sm:$0xf]
      %v314 = vld [vmem:[%s271 + $0x5c] sm:$0xf]
      %v315 = vld [vmem:[%s271 + $0x60] sm:$0xf]
      %v316 = vld [vmem:[%s271 + $0x64] sm:$0xf]
      %v317 = vld [vmem:[%s271 + $0x68] sm:$0xf]
      %v318 = vld [vmem:[%s271 + $0x6c] sm:$0xf]
      %v319 = vld [vmem:[%s271 + $0x70] sm:$0xf]
      %v320 = vld [vmem:[%s271 + $0x74] sm:$0xf]
      %v321 = vld [vmem:[%s271 + $0x78] sm:$0xf]
      %v322 = vld [vmem:[%s271 + $0x7c] sm:$0xf]
      %v323 = vld [vmem:[%s275] sm:$0xf]
      %v324 = vld [vmem:[%s275 + $0x4] sm:$0xf]
      %v325 = vld [vmem:[%s275 + $0x8] sm:$0xf]
      %v326 = vld [vmem:[%s275 + $0xc] sm:$0xf]
      %v327 = vld [vmem:[%s275 + $0x10] sm:$0xf]
      %v328 = vld [vmem:[%s275 + $0x14] sm:$0xf]
      %v329 = vld [vmem:[%s275 + $0x18] sm:$0xf]
      %v330 = vld [vmem:[%s275 + $0x1c] sm:$0xf]
      %v331 = vld [vmem:[%s275 + $0x20] sm:$0xf]
      %v332 = vld [vmem:[%s275 + $0x24] sm:$0xf]
      %v333 = vld [vmem:[%s275 + $0x28] sm:$0xf]
      %v334 = vld [vmem:[%s275 + $0x2c] sm:$0xf]
      %v335 = vld [vmem:[%s275 + $0x30] sm:$0xf]
      %v336 = vld [vmem:[%s275 + $0x34] sm:$0xf]
      %v337 = vld [vmem:[%s275 + $0x38] sm:$0xf]
      %v338 = vld [vmem:[%s275 + $0x3c] sm:$0xf]
      %v371 = vunpack.c.l.b16 %v291
      %v372 = vunpack.c.l.b16 %v292
      %v373 = vunpack.c.l.b16 %v293
      %v374 = vunpack.c.l.b16 %v294
      %v375 = vunpack.c.l.b16 %v295
      %v376 = vunpack.c.l.b16 %v296
      %v377 = vunpack.c.l.b16 %v297
      %v378 = vunpack.c.l.b16 %v298
      %v379 = vunpack.c.l.b16 %v299
      %v380 = vunpack.c.l.b16 %v300
      %v381 = vunpack.c.l.b16 %v301
      %v382 = vunpack.c.l.b16 %v302
      %v383 = vunpack.c.l.b16 %v303
      %v384 = vunpack.c.l.b16 %v304
      %v385 = vunpack.c.l.b16 %v305
      %v386 = vunpack.c.l.b16 %v306
      %v387 = vunpack.c.l.b16 %v307
      %v388 = vunpack.c.l.b16 %v308
      %v389 = vunpack.c.l.b16 %v309
      %v390 = vunpack.c.l.b16 %v310
      %v391 = vunpack.c.l.b16 %v311
      %v392 = vunpack.c.l.b16 %v312
      %v393 = vunpack.c.l.b16 %v313
      %v394 = vunpack.c.l.b16 %v314
      %v395 = vunpack.c.l.b16 %v315
      %v396 = vunpack.c.l.b16 %v316
      %v397 = vunpack.c.l.b16 %v317
      %v398 = vunpack.c.l.b16 %v318
      %v399 = vunpack.c.l.b16 %v319
      %v400 = vunpack.c.l.b16 %v320
      %v401 = vunpack.c.l.b16 %v321
      %v402 = vunpack.c.l.b16 %v322
      %v403 = vpack.c.b16 %v372, %v371
      %v404 = vpack.c.b16 %v374, %v373
      %v405 = vpack.c.b16 %v376, %v375
      %v406 = vpack.c.b16 %v378, %v377
      %v407 = vpack.c.b16 %v380, %v379
      %v408 = vpack.c.b16 %v382, %v381
      %v409 = vpack.c.b16 %v384, %v383
      %v410 = vpack.c.b16 %v386, %v385
      %v411 = vpack.c.b16 %v388, %v387
      %v412 = vpack.c.b16 %v390, %v389
      %v413 = vpack.c.b16 %v392, %v391
      %v414 = vpack.c.b16 %v394, %v393
      %v415 = vpack.c.b16 %v396, %v395
      %v416 = vpack.c.b16 %v398, %v397
      %v417 = vpack.c.b16 %v400, %v399
      %v418 = vpack.c.b16 %v402, %v401
      %v451 = vunpack.c.l.b16 %v323
      %v452 = vunpack.c.l.b16 %v324
      %v453 = vunpack.c.l.b16 %v325
      %v454 = vunpack.c.l.b16 %v326
      %v455 = vunpack.c.l.b16 %v327
      %v456 = vunpack.c.l.b16 %v328
      %v457 = vunpack.c.l.b16 %v329
      %v458 = vunpack.c.l.b16 %v330
      %v459 = vunpack.c.l.b16 %v331
      %v460 = vunpack.c.l.b16 %v332
      %v461 = vunpack.c.l.b16 %v333
      %v462 = vunpack.c.l.b16 %v334
      %v463 = vunpack.c.l.b16 %v335
      %v464 = vunpack.c.l.b16 %v336
      %v465 = vunpack.c.l.b16 %v337
      %v466 = vunpack.c.l.b16 %v338
      %v467 = vpack.c.b16 %v452, %v451
      %v468 = vpack.c.b16 %v454, %v453
      %v469 = vpack.c.b16 %v456, %v455
      %v470 = vpack.c.b16 %v458, %v457
      %v471 = vpack.c.b16 %v460, %v459
      %v472 = vpack.c.b16 %v462, %v461
      %v473 = vpack.c.b16 %v464, %v463
      %v474 = vpack.c.b16 %v466, %v465
      %483 = vmatprep.subr.bf16.mxu0 0
      %484 = vmatpush1.bf16.msra.mxu0 %v474
      %485 = vmatprep.subr.bf16.mxu0 0
      %486 = vmatpush1.bf16.msra.mxu0 %v473
      %487 = vmatprep.subr.bf16.mxu0 0
      %488 = vmatpush1.bf16.msra.mxu0 %v472
      %489 = vmatprep.subr.bf16.mxu0 0
      %490 = vmatpush1.bf16.msra.mxu0 %v471
      %491 = vmatprep.subr.bf16.mxu0 0
      %492 = vmatpush1.bf16.msra.mxu0 %v470
      %493 = vmatprep.subr.bf16.mxu0 0
      %494 = vmatpush1.bf16.msra.mxu0 %v469
      %495 = vmatprep.subr.bf16.mxu0 0
      %496 = vmatpush1.bf16.msra.mxu0 %v468
      %497 = vmatprep.subr.bf16.mxu0 0
      %498 = vmatpush1.bf16.msra.mxu0 %v467
      %499 = vmatprep.subr.bf16.mxu0 0
      %500 = vmatpush2.bf16.msra.mxu0 0
      %501 = vmatprep.subr.bf16.mxu0 0
      %502 = vmatpush2.bf16.msra.mxu0 0
      %503 = vmatprep.subr.bf16.mxu0 0
      %504 = vmatpush2.bf16.msra.mxu0 0
      %505 = vmatprep.subr.bf16.mxu0 0
      %506 = vmatpush2.bf16.msra.mxu0 0
      %507 = vmatprep.subr.bf16.mxu0 0
      %508 = vmatpush2.bf16.msra.mxu0 0
      %509 = vmatprep.subr.bf16.mxu0 0
      %510 = vmatpush2.bf16.msra.mxu0 0
      %511 = vmatprep.subr.bf16.mxu0 0
      %512 = vmatpush2.bf16.msra.mxu0 0
      %513 = vmatprep.subr.bf16.mxu0 0
      %514 = vmatpush2.bf16.msra.mxu0 0
      %515 = vmatprep.mubr.bf16.mxu0 0
      %516 = vmatmul.mubr.bf16.gmra.mxu0 %v403
      %v517 = vpop.f32.mrf.mxu0
      %v518 = vadd.f32 0.0, %v517
      %v519 = vpop.f32.mrf.mxu0
      %v520 = vpop.f32.mrf.mxu0
      %v521 = vadd.f32 0.0, %v520
      %v522 = vpop.f32.mrf.mxu0
      %523 = vmatprep.mubr.bf16.mxu0 0
      %524 = vmatmul.mubr.bf16.gmra.mxu0 %v404
      %v525 = vpop.f32.mrf.mxu0
      %v526 = vadd.f32 0.0, %v525
      %v527 = vpop.f32.mrf.mxu0
      %v528 = vpop.f32.mrf.mxu0
      %v529 = vadd.f32 0.0, %v528
      %v530 = vpop.f32.mrf.mxu0
      %531 = vmatprep.mubr.bf16.mxu0 0
      %532 = vmatmul.mubr.bf16.gmra.mxu0 %v405
      %v533 = vpop.f32.mrf.mxu0
      %v534 = vadd.f32 0.0, %v533
      %v535 = vpop.f32.mrf.mxu0
      %v536 = vpop.f32.mrf.mxu0
      %v537 = vadd.f32 0.0, %v536
      %v538 = vpop.f32.mrf.mxu0
      %539 = vmatprep.mubr.bf16.mxu0 0
      %540 = vmatmul.mubr.bf16.gmra.mxu0 %v406
      %v541 = vpop.f32.mrf.mxu0
      %v542 = vadd.f32 0.0, %v541
      %v543 = vpop.f32.mrf.mxu0
      %v544 = vpop.f32.mrf.mxu0
      %v545 = vadd.f32 0.0, %v544
      %v546 = vpop.f32.mrf.mxu0
      %547 = vmatprep.mubr.bf16.mxu0 0
      %548 = vmatmul.mubr.bf16.gmra.mxu0 %v407
      %v549 = vpop.f32.mrf.mxu0
      %v550 = vadd.f32 0.0, %v549
      %v551 = vpop.f32.mrf.mxu0
      %v552 = vpop.f32.mrf.mxu0
      %v553 = vadd.f32 0.0, %v552
      %v554 = vpop.f32.mrf.mxu0
      %555 = vmatprep.mubr.bf16.mxu0 0
      %556 = vmatmul.mubr.bf16.gmra.mxu0 %v408
      %v557 = vpop.f32.mrf.mxu0
      %v558 = vadd.f32 0.0, %v557
      %v559 = vpop.f32.mrf.mxu0
      %v560 = vpop.f32.mrf.mxu0
      %v561 = vadd.f32 0.0, %v560
      %v562 = vpop.f32.mrf.mxu0
      %563 = vmatprep.mubr.bf16.mxu0 0
      %564 = vmatmul.mubr.bf16.gmra.mxu0 %v409
      %v565 = vpop.f32.mrf.mxu0
      %v566 = vadd.f32 0.0, %v565
      %v567 = vpop.f32.mrf.mxu0
      %v568 = vpop.f32.mrf.mxu0
      %v569 = vadd.f32 0.0, %v568
      %v570 = vpop.f32.mrf.mxu0
      %571 = vmatprep.mubr.bf16.mxu0 0
      %572 = vmatmul.mubr.bf16.gmra.mxu0 %v410
      %v573 = vpop.f32.mrf.mxu0
      %v574 = vadd.f32 0.0, %v573
      %v575 = vpop.f32.mrf.mxu0
      %v576 = vpop.f32.mrf.mxu0
      %v577 = vadd.f32 0.0, %v576
      %v578 = vpop.f32.mrf.mxu0
      %579 = vmatprep.mubr.bf16.mxu0 0
      %580 = vmatmul.mubr.bf16.gmra.mxu0 %v411
      %v581 = vpop.f32.mrf.mxu0
      %v582 = vadd.f32 0.0, %v581
      %v583 = vpop.f32.mrf.mxu0
      %v584 = vpop.f32.mrf.mxu0
      %v585 = vadd.f32 0.0, %v584
      %v586 = vpop.f32.mrf.mxu0
      %587 = vmatprep.mubr.bf16.mxu0 0
      %588 = vmatmul.mubr.bf16.gmra.mxu0 %v412
      %v589 = vpop.f32.mrf.mxu0
      %v590 = vadd.f32 0.0, %v589
      %v591 = vpop.f32.mrf.mxu0
      %v592 = vpop.f32.mrf.mxu0
      %v593 = vadd.f32 0.0, %v592
      %v594 = vpop.f32.mrf.mxu0
      %595 = vmatprep.mubr.bf16.mxu0 0
      %596 = vmatmul.mubr.bf16.gmra.mxu0 %v413
      %v597 = vpop.f32.mrf.mxu0
      %v598 = vadd.f32 0.0, %v597
      %v599 = vpop.f32.mrf.mxu0
      %v600 = vpop.f32.mrf.mxu0
      %v601 = vadd.f32 0.0, %v600
      %v602 = vpop.f32.mrf.mxu0
      %603 = vmatprep.mubr.bf16.mxu0 0
      %604 = vmatmul.mubr.bf16.gmra.mxu0 %v414
      %v605 = vpop.f32.mrf.mxu0
      %v606 = vadd.f32 0.0, %v605
      %v607 = vpop.f32.mrf.mxu0
      %v608 = vpop.f32.mrf.mxu0
      %v609 = vadd.f32 0.0, %v608
      %v610 = vpop.f32.mrf.mxu0
      %611 = vmatprep.mubr.bf16.mxu0 0
      %612 = vmatmul.mubr.bf16.gmra.mxu0 %v415
      %v613 = vpop.f32.mrf.mxu0
      %v614 = vadd.f32 0.0, %v613
      %v615 = vpop.f32.mrf.mxu0
      %v616 = vpop.f32.mrf.mxu0
      %v617 = vadd.f32 0.0, %v616
      %v618 = vpop.f32.mrf.mxu0
      %619 = vmatprep.mubr.bf16.mxu0 0
      %620 = vmatmul.mubr.bf16.gmra.mxu0 %v416
      %v621 = vpop.f32.mrf.mxu0
      %v622 = vadd.f32 0.0, %v621
      %v623 = vpop.f32.mrf.mxu0
      %v624 = vpop.f32.mrf.mxu0
      %v625 = vadd.f32 0.0, %v624
      %v626 = vpop.f32.mrf.mxu0
      %627 = vmatprep.mubr.bf16.mxu0 0
      %628 = vmatmul.mubr.bf16.gmra.mxu0 %v417
      %v629 = vpop.f32.mrf.mxu0
      %v630 = vadd.f32 0.0, %v629
      %v631 = vpop.f32.mrf.mxu0
      %v632 = vpop.f32.mrf.mxu0
      %v633 = vadd.f32 0.0, %v632
      %v634 = vpop.f32.mrf.mxu0
      %635 = vmatprep.mubr.bf16.mxu0 0
      %636 = vmatmul.mubr.bf16.gmra.mxu0 %v418
      %v637 = vpop.f32.mrf.mxu0
      %v638 = vadd.f32 0.0, %v637
      %v639 = vpop.f32.mrf.mxu0
      %v640 = vpop.f32.mrf.mxu0
      %v641 = vadd.f32 0.0, %v640
      %v642 = vpop.f32.mrf.mxu0
      %643 = vdwg.mxu0
      %v644 = vld [vmem:[%s2] sm:$0xff]
      %v645 = vld [vmem:[%s2 + $0x8] sm:$0xff]
      %v646 = vld [vmem:[%s2 + $0x10] sm:$0xff]
      %v647 = vld [vmem:[%s2 + $0x18] sm:$0xff]
      %v648 = vld [vmem:[%s2 + $0x20] sm:$0xff]
      %v649 = vld [vmem:[%s2 + $0x28] sm:$0xff]
      %v650 = vld [vmem:[%s2 + $0x30] sm:$0xff]
      %v651 = vld [vmem:[%s2 + $0x38] sm:$0xff]
      %v652 = vld [vmem:[%s2 + $0x40] sm:$0xff]
      %v653 = vld [vmem:[%s2 + $0x48] sm:$0xff]
      %v654 = vld [vmem:[%s2 + $0x50] sm:$0xff]
      %v655 = vld [vmem:[%s2 + $0x58] sm:$0xff]
      %v656 = vld [vmem:[%s2 + $0x60] sm:$0xff]
      %v657 = vld [vmem:[%s2 + $0x68] sm:$0xff]
      %v658 = vld [vmem:[%s2 + $0x70] sm:$0xff]
      %v659 = vld [vmem:[%s2 + $0x78] sm:$0xff]
      %660 = vmatprep.subr.mxu0 0.0
      %661 = vmatpush1.msra.mxu0 %v577
      %662 = vmatprep.subr.mxu0 0.0
      %663 = vmatpush1.msra.mxu0 %v574
      %664 = vmatprep.subr.mxu0 0.0
      %665 = vmatpush1.msra.mxu0 %v569
      %666 = vmatprep.subr.mxu0 0.0
      %667 = vmatpush1.msra.mxu0 %v566
      %668 = vmatprep.subr.mxu0 0.0
      %669 = vmatpush1.msra.mxu0 %v561
      %670 = vmatprep.subr.mxu0 0.0
      %671 = vmatpush1.msra.mxu0 %v558
      %672 = vmatprep.subr.mxu0 0.0
      %673 = vmatpush1.msra.mxu0 %v553
      %674 = vmatprep.subr.mxu0 0.0
      %675 = vmatpush1.msra.mxu0 %v550
      %676 = vmatprep.subr.mxu0 0.0
      %677 = vmatpush1.msra.mxu0 %v545
      %678 = vmatprep.subr.mxu0 0.0
      %679 = vmatpush1.msra.mxu0 %v542
      %680 = vmatprep.subr.mxu0 0.0
      %681 = vmatpush1.msra.mxu0 %v537
      %682 = vmatprep.subr.mxu0 0.0
      %683 = vmatpush1.msra.mxu0 %v534
      %684 = vmatprep.subr.mxu0 0.0
      %685 = vmatpush1.msra.mxu0 %v529
      %686 = vmatprep.subr.mxu0 0.0
      %687 = vmatpush1.msra.mxu0 %v526
      %688 = vmatprep.subr.mxu0 0.0
      %689 = vmatpush1.msra.mxu0 %v521
      %690 = vmatprep.subr.mxu0 0.0
      %691 = vmatpush1.msra.mxu0 %v518
      %692 = vmatprep.subr.mxu0 0.0
      %693 = vmatpush2.msra.mxu0 %v641
      %694 = vmatprep.subr.mxu0 0.0
      %695 = vmatpush2.msra.mxu0 %v638
      %696 = vmatprep.subr.mxu0 0.0
      %697 = vmatpush2.msra.mxu0 %v633
      %698 = vmatprep.subr.mxu0 0.0
      %699 = vmatpush2.msra.mxu0 %v630
      %700 = vmatprep.subr.mxu0 0.0
      %701 = vmatpush2.msra.mxu0 %v625
      %702 = vmatprep.subr.mxu0 0.0
      %703 = vmatpush2.msra.mxu0 %v622
      %704 = vmatprep.subr.mxu0 0.0
      %705 = vmatpush2.msra.mxu0 %v617
      %706 = vmatprep.subr.mxu0 0.0
      %707 = vmatpush2.msra.mxu0 %v614
      %708 = vmatprep.subr.mxu0 0.0
      %709 = vmatpush2.msra.mxu0 %v609
      %710 = vmatprep.subr.mxu0 0.0
      %711 = vmatpush2.msra.mxu0 %v606
      %712 = vmatprep.subr.mxu0 0.0
      %713 = vmatpush2.msra.mxu0 %v601
      %714 = vmatprep.subr.mxu0 0.0
      %715 = vmatpush2.msra.mxu0 %v598
      %716 = vmatprep.subr.mxu0 0.0
      %717 = vmatpush2.msra.mxu0 %v593
      %718 = vmatprep.subr.mxu0 0.0
      %719 = vmatpush2.msra.mxu0 %v590
      %720 = vmatprep.subr.mxu0 0.0
      %721 = vmatpush2.msra.mxu0 %v585
      %722 = vmatprep.subr.mxu0 0.0
      %723 = vmatpush2.msra.mxu0 %v582
      %724 = vmatprep.mubr.f32.mxu0 %v645
      %725 = vmatmul.mubr.f32.gmra.mxu0 %v644
      %v726 = vpop.f32.mrf.mxu0
      %v727 = vadd.f32 0.0, %v726
      %v728 = vpop.f32.mrf.mxu0
      %729 = vmatprep.mubr.f32.mxu0 %v647
      %730 = vmatmul.mubr.f32.gmra.mxu0 %v646
      %v731 = vpop.f32.mrf.mxu0
      %v732 = vadd.f32 0.0, %v731
      %v733 = vpop.f32.mrf.mxu0
      %734 = vmatprep.mubr.f32.mxu0 %v649
      %735 = vmatmul.mubr.f32.gmra.mxu0 %v648
      %v736 = vpop.f32.mrf.mxu0
      %v737 = vadd.f32 0.0, %v736
      %v738 = vpop.f32.mrf.mxu0
      %739 = vmatprep.mubr.f32.mxu0 %v651
      %740 = vmatmul.mubr.f32.gmra.mxu0 %v650
      %v741 = vpop.f32.mrf.mxu0
      %v742 = vadd.f32 0.0, %v741
      %v743 = vpop.f32.mrf.mxu0
      %744 = vmatprep.mubr.f32.mxu0 %v653
      %745 = vmatmul.mubr.f32.gmra.mxu0 %v652
      %v746 = vpop.f32.mrf.mxu0
      %v747 = vadd.f32 0.0, %v746
      %v748 = vpop.f32.mrf.mxu0
      %749 = vmatprep.mubr.f32.mxu0 %v655
      %750 = vmatmul.mubr.f32.gmra.mxu0 %v654
      %v751 = vpop.f32.mrf.mxu0
      %v752 = vadd.f32 0.0, %v751
      %v753 = vpop.f32.mrf.mxu0
      %754 = vmatprep.mubr.f32.mxu0 %v657
      %755 = vmatmul.mubr.f32.gmra.mxu0 %v656
      %v756 = vpop.f32.mrf.mxu0
      %v757 = vadd.f32 0.0, %v756
      %v758 = vpop.f32.mrf.mxu0
      %759 = vmatprep.mubr.f32.mxu0 %v659
      %760 = vmatmul.mubr.f32.gmra.mxu0 %v658
      %v761 = vpop.f32.mrf.mxu0
      %v762 = vadd.f32 0.0, %v761
      %v763 = vpop.f32.mrf.mxu0
      %764 = vdwg.mxu0
      %v765 = vadd.f32 %v727, %v732
      %v766 = vadd.f32 %v765, %v737
      %v767 = vadd.f32 %v766, %v742
      %v768 = vadd.f32 %v767, %v747
      %v769 = vadd.f32 %v768, %v752
      %v770 = vadd.f32 %v769, %v757
      %v771 = vadd.f32 %v770, %v762
      %v772 = vrot.slane %v771, 4
      %v773 = vadd.f32 %v771, %v772
      %v774 = vrot.slane %v773, 2
      %v775 = vadd.f32 %v773, %v774
      %v776 = vrot.slane %v775, 1
      %v777 = vadd.f32 %v775, %v776
      %v778 = vmul.f32 %v727, %v727
      %v779 = vmul.f32 %v732, %v732
      %v780 = vmul.f32 %v737, %v737
      %v781 = vmul.f32 %v742, %v742
      %v782 = vmul.f32 %v747, %v747
      %v783 = vmul.f32 %v752, %v752
      %v784 = vmul.f32 %v757, %v757
      %v785 = vmul.f32 %v762, %v762
      %v786 = vadd.f32 %v778, %v779
      %v787 = vadd.f32 %v786, %v780
      %v788 = vadd.f32 %v787, %v781
      %v789 = vadd.f32 %v788, %v782
      %v790 = vadd.f32 %v789, %v783
      %v791 = vadd.f32 %v790, %v784
      %v792 = vadd.f32 %v791, %v785
      %v793 = vrot.slane %v792, 4
      %v794 = vadd.f32 %v792, %v793
      %v795 = vrot.slane %v794, 2
      %v796 = vadd.f32 %v794, %v795
      %v797 = vrot.slane %v796, 1
      %v798 = vadd.f32 %v796, %v797
      %v799 = vmul.f32 %v777, 0.015625
      %v800 = vmul.f32 %v798, 0.015625
      %v801 = vmul.f32 %v799, %v799
      %v802 = vsub.f32 %v800, %v801
      %v803 = vmax.f32 %v802, 0.0
      %v804 = vld [vmem:[%s278] sm:$0x1]
      %v805 = vadd.f32 %v803, 1e-05
      %v806 = vrsqrt.pop %v805
      %v807 = vmul.f32 %v804, %v806
      %v808 = vld [vmem:[%s281] sm:$0x1]
      %v809 = vmul.f32 %v799, %v807
      %v810 = vsub.f32 %v808, %v809
      %v812 = vlaneseq
      %v813 = vshrl.u32 %v812, 7
      %v814 = vsub.s32 0, %v813
      %v815 = vrot.slane %v807, %v814
      %v817 = vmul.f32 %v727, %v815
      %v818 = vmul.f32 %v732, %v815
      %v819 = vmul.f32 %v737, %v815
      %v820 = vmul.f32 %v742, %v815
      %v821 = vmul.f32 %v747, %v815
      %v822 = vmul.f32 %v752, %v815
      %v823 = vmul.f32 %v757, %v815
      %v824 = vmul.f32 %v762, %v815
      %v826 = vlaneseq
      %v827 = vshrl.u32 %v826, 7
      %v828 = vsub.s32 0, %v827
      %v829 = vrot.slane %v810, %v828
      %v831 = vadd.f32 %v817, %v829
      %v832 = vadd.f32 %v818, %v829
      %v833 = vadd.f32 %v819, %v829
      %v834 = vadd.f32 %v820, %v829
      %v835 = vadd.f32 %v821, %v829
      %v836 = vadd.f32 %v822, %v829
      %v837 = vadd.f32 %v823, %v829
      %v838 = vadd.f32 %v824, %v829
      %v839 = vpack.c.bf16 %v832, %v831
      %v840 = vpack.c.bf16 %v834, %v833
      %v841 = vpack.c.bf16 %v836, %v835
      %v842 = vpack.c.bf16 %v838, %v837
      %v847 = vunpack.c.l.b16 %v839
      %v848 = vunpack.c.h.b16 %v839
      %v849 = vunpack.c.l.b16 %v840
      %v850 = vunpack.c.h.b16 %v840
      %v851 = vunpack.c.l.b16 %v841
      %v852 = vunpack.c.h.b16 %v841
      %v853 = vunpack.c.l.b16 %v842
      %v854 = vunpack.c.h.b16 %v842
      %v855 = vpack.c.b16 %v847, %v847
      %v856 = vpack.c.b16 %v848, %v848
      %v857 = vpack.c.b16 %v849, %v849
      %v858 = vpack.c.b16 %v850, %v850
      %v859 = vpack.c.b16 %v851, %v851
      %v860 = vpack.c.b16 %v852, %v852
      %v861 = vpack.c.b16 %v853, %v853
      %v862 = vpack.c.b16 %v854, %v854
      %871 = vst [vmem:[%s289] sm:$0xf] %v855
      %872 = vst [vmem:[%s289 + $0x4] sm:$0xf] %v856
      %873 = vst [vmem:[%s289 + $0x8] sm:$0xf] %v857
      %874 = vst [vmem:[%s289 + $0xc] sm:$0xf] %v858
      %875 = vst [vmem:[%s289 + $0x10] sm:$0xf] %v859
      %876 = vst [vmem:[%s289 + $0x14] sm:$0xf] %v860
      %877 = vst [vmem:[%s289 + $0x18] sm:$0xf] %v861
      %878 = vst [vmem:[%s289 + $0x1c] sm:$0xf] %v862
      %p879 = scmp.lt.s32.totalorder %s20, 1
      %s880 = scalar_select %p879, %s20, 1
      %p881 = scmp.lt.s32.totalorder %s21, 0
      %s882 = scalar_select %p881, %s21, 0
      %s883 = smul.addr %s880, 8
      %s884 = sadd.s32 %s882, %s883
      %s885 = smul.addr %s884, 4
      %s886 = scalar_lea.vmem %s5, %s885
      // Predicated region
      $region41: #{basic_block_ap_forward.4} parent=39 // pred_check
        %p887 = pneg %p173
      $region42: #{basic_block_ap_forward.4} parent=39 // pred_check_branch
        %889 = sbr.rel (%p887) target = $region44
      $region43: #{basic_block_ap_forward.4} parent=39 // pred_region
        _
      $region44: #{basic_block_ap_forward.4} parent=39 // pred_fallthru
        _
    $region40: #{basic_block_ap_forward.4} parent=5 // pred_fallthru
      _
    %p890 = scmp.le.s32.totalorder 2, %s11
    // Predicated region
    $region45: #{basic_block_ap_forward.4} parent=5 // pred_check
      %p891 = pneg %p890
    $region46: #{basic_block_ap_forward.4} parent=5 // pred_check_branch
      %893 = sbr.rel (%p891) target = $region48
    $region47: #{basic_block_ap_forward.4} parent=5 // pred_region
      %s894 = ssub.s32 %s11, 2
      // Predicated region
      $region49: #{basic_block_ap_forward.4} parent=47 // pred_check
        %p895 = pneg %p179
      $region50: #{basic_block_ap_forward.4} parent=47 // pred_check_branch
        %897 = sbr.rel (%p895) target = $region52
      $region51: #{basic_block_ap_forward.4} parent=47 // pred_region
        %p898 = scmp.lt.s32.totalorder %s22, 1
        %s899 = scalar_select %p898, %s22, 1
        %p900 = scmp.lt.s32.totalorder %s23, 0
        %s901 = scalar_select %p900, %s23, 0
        %s902 = smul.addr %s899, 8
        %s903 = sadd.s32 %s901, %s902
        %s904 = smul.addr %s903, 4
        %s905 = scalar_lea.vmem %s5, %s904
      $region52: #{basic_block_ap_forward.4} parent=47 // pred_fallthru
        _
    $region48: #{basic_block_ap_forward.4} parent=5 // pred_fallthru
      _
  $region6: #{basic_block_ap_forward.4} parent=0 // loop_footer
    %s15 = sadd.s32 1, %s11
  $region7: #{basic_block_ap_forward.4} parent=0 // loop_footer_branch
    %10 = sbr.rel target = $region3
  $region8: #{basic_block_ap_forward.4} parent=0 // loop_exit
    _

// kernel: basic_block_ap_forward.5
$region0: #{basic_block_ap_forward.5}
  #allocation0 [shape = 'u32[]', space=smem, size = 0x4, offset = 0x4, fixed_abs, tag = 'smem constant byte address 0x4 - core index']
  #allocation1 [shape = 'u32[144,128]{1,0:T(1,128)}', space=vmem, size = 0x12000, scoped, tag = 'internal scratch']
  %s0 = inlined_call_operand.vmem [shape: bf16[2,64,1152], index: 0, kind: input, shape index: {}]
  %s1 = inlined_call_operand.vmem [shape: bf16[1152,128], index: 1, kind: input, shape index: {}]
  %s2 = inlined_call_operand.vmem [shape: f32[1,128], index: 2, kind: input, shape index: {}]
  %s3 = inlined_call_operand.vmem [shape: f32[1,128], index: 3, kind: input, shape index: {}]
  %s4 = inlined_call_operand.vmem [shape: bf16[2,64,128], index: 4, kind: input, shape index: {}]
  %s5 = inlined_call_operand.hbm [shape: f32[2,64,128], index: 5, kind: output, shape index: {}]
  %s6 = sld [smem:[#allocation0]]
  $region53: #{basic_block_ap_forward.5} parent=0
    _
  %s8 = ssub.s32 1, %s6
  %s9 = scalar_select 0, %s8, %s6
  $region1: #{basic_block_ap_forward.5} parent=0
    #allocation2 [shape = 'u8[65536]{0}', space=vmem, size = 0x10000, scoped, tag = 'output window, operand 0']
    #allocation3 [shape = 's32[2]{0}', space=sflag, size = 0x8, scoped, tag = 'scoped memory for basic_block_ap_forward.5']
    %10 = vsyncpa [#allocation3], 0
    %s11 = scalar_lea.sflag [#allocation3], 1
    %12 = vsyncpa %s11, 0
    loop: start=0, step=1, limit=4
    $region2: #{basic_block_ap_forward.5} parent=1 // loop_pre_header
      _
    $region3: #{basic_block_ap_forward.5} parent=1 // loop_header
      %s14 = sphi 0, %s18
      %p15 = scmp.ge.s32.totalorder %s14, 4
      %s21 = sphi 0, %s33
      %s22 = sphi 0, %s29
      %s23 = sphi 0, %s21
      %s24 = sphi 0, %s22
      %s25 = sphi 0, %s23
      %s26 = sphi 0, %s24
      %s36 = sphi 0, %s38
      %s39 = sphi 0, %s36
      %s40 = sphi 0, %s39
      %s56 = sphi 0, %s40
      %s62 = sphi 0, %s64
      %s65 = sphi 0, %s62
      %s66 = sphi 0, %s65
      %s82 = sphi 0, %s66
      %s88 = sphi 0, %s90
      %s91 = sphi 0, %s88
      %s92 = sphi 0, %s91
      %s108 = sphi 0, %s92
      %s114 = sphi 0, %s116
      %s117 = sphi 0, %s114
      %s118 = sphi 0, %s117
      %s134 = sphi 0, %s118
      %s142 = sphi 0, %s144
      %s145 = sphi 0, %s142
      %s146 = sphi 0, %s145
      %s162 = sphi 0, %s146
      %s170 = sphi 0, %s172
      %s173 = sphi 0, %s170
      %s174 = sphi 0, %s173
      %s190 = sphi 0, %s174
    $region4: #{basic_block_ap_forward.5} parent=1 // loop_header_branch
      %17 = sbr.rel (%p15) target = $region8
    $region5: #{basic_block_ap_forward.5} parent=1 // loop_body
      %s19 = ssub.s32 %s14, 1
      %s20 = ssub.s32 %s14, 2
      %s27 = sadd.s32 1, %s22
      %p28 = scmp.ge.s32.totalorder %s27, 1
      %s29 = scalar_select %p28, 0, %s27
      %s30 = sadd.s32 1, %s21
      %s31 = scalar_select %p28, %s30, %s21
      %p32 = scmp.ge.s32.totalorder %s31, 2
      %s33 = scalar_select %p32, 0, %s31
      %s34 = ssub.s32 %s21, %s33
      %p35 = scmp.eq.s32.totalorder %s34, 0
      %s37 = sadd.s32 %s36, 1
      %s38 = scalar_select %p35, %s36, %s37
      %p41 = pneg %p35
      %p42 = scmp.eq.s32.totalorder %s14, 1
      %p43 = por %p41, %p42
      %p44 = scmp.ne.s32.totalorder %s36, %s39
      %p45 = scmp.eq.s32.totalorder %s14, 0
      %p46 = por %p44, %p45
      %p47 = scmp.ne.s32.totalorder %s36, %s39
      %p48 = scmp.eq.s32.totalorder %s19, 1
      %p49 = por %p47, %p48
      %p50 = scmp.ne.s32.totalorder %s39, %s40
      %p51 = scmp.eq.s32.totalorder %s19, 0
      %p52 = por %p50, %p51
      %p53 = scmp.ne.s32.totalorder %s39, %s40
      %p54 = scmp.eq.s32.totalorder %s20, 1
      %p55 = por %p53, %p54
      %p57 = scmp.ne.s32.totalorder %s40, %s56
      %p58 = scmp.eq.s32.totalorder %s20, 0
      %p59 = por %p57, %p58
      %s60 = ssub.s32 %s22, %s29
      %p61 = scmp.eq.s32.totalorder %s60, 0
      %s63 = sadd.s32 %s62, 1
      %s64 = scalar_select %p61, %s62, %s63
      %p67 = pneg %p61
      %p68 = scmp.eq.s32.totalorder %s14, 1
      %p69 = por %p67, %p68
      %p70 = scmp.ne.s32.totalorder %s62, %s65
      %p71 = scmp.eq.s32.totalorder %s14, 0
      %p72 = por %p70, %p71
      %p73 = scmp.ne.s32.totalorder %s62, %s65
      %p74 = scmp.eq.s32.totalorder %s19, 1
      %p75 = por %p73, %p74
      %p76 = scmp.ne.s32.totalorder %s65, %s66
      %p77 = scmp.eq.s32.totalorder %s19, 0
      %p78 = por %p76, %p77
      %p79 = scmp.ne.s32.totalorder %s65, %s66
      %p80 = scmp.eq.s32.totalorder %s20, 1
      %p81 = por %p79, %p80
      %p83 = scmp.ne.s32.totalorder %s66, %s82
      %p84 = scmp.eq.s32.totalorder %s20, 0
      %p85 = por %p83, %p84
      %s86 = ssub.s32 %s22, %s29
      %p87 = scmp.eq.s32.totalorder %s86, 0
      %s89 = sadd.s32 %s88, 1
      %s90 = scalar_select %p87, %s88, %s89
      %p93 = pneg %p87
      %p94 = scmp.eq.s32.totalorder %s14, 1
      %p95 = por %p93, %p94
      %p96 = scmp.ne.s32.totalorder %s88, %s91
      %p97 = scmp.eq.s32.totalorder %s14, 0
      %p98 = por %p96, %p97
      %p99 = scmp.ne.s32.totalorder %s88, %s91
      %p100 = scmp.eq.s32.totalorder %s19, 1
      %p101 = por %p99, %p100
      %p102 = scmp.ne.s32.totalorder %s91, %s92
      %p103 = scmp.eq.s32.totalorder %s19, 0
      %p104 = por %p102, %p103
      %p105 = scmp.ne.s32.totalorder %s91, %s92
      %p106 = scmp.eq.s32.totalorder %s20, 1
      %p107 = por %p105, %p106
      %p109 = scmp.ne.s32.totalorder %s92, %s108
      %p110 = scmp.eq.s32.totalorder %s20, 0
      %p111 = por %p109, %p110
      %s112 = ssub.s32 %s22, %s29
      %p113 = scmp.eq.s32.totalorder %s112, 0
      %s115 = sadd.s32 %s114, 1
      %s116 = scalar_select %p113, %s114, %s115
      %p119 = pneg %p113
      %p120 = scmp.eq.s32.totalorder %s14, 1
      %p121 = por %p119, %p120
      %p122 = scmp.ne.s32.totalorder %s114, %s117
      %p123 = scmp.eq.s32.totalorder %s14, 0
      %p124 = por %p122, %p123
      %p125 = scmp.ne.s32.totalorder %s114, %s117
      %p126 = scmp.eq.s32.totalorder %s19, 1
      %p127 = por %p125, %p126
      %p128 = scmp.ne.s32.totalorder %s117, %s118
      %p129 = scmp.eq.s32.totalorder %s19, 0
      %p130 = por %p128, %p129
      %p131 = scmp.ne.s32.totalorder %s117, %s118
      %p132 = scmp.eq.s32.totalorder %s20, 1
      %p133 = por %p131, %p132
      %p135 = scmp.ne.s32.totalorder %s118, %s134
      %p136 = scmp.eq.s32.totalorder %s20, 0
      %p137 = por %p135, %p136
      %s138 = ssub.s32 %s21, %s33
      %s139 = ssub.s32 %s22, %s29
      %s140 = sor.u32 %s138, %s139
      %p141 = scmp.eq.s32.totalorder %s140, 0
      %s143 = sadd.s32 %s142, 1
      %s144 = scalar_select %p141, %s142, %s143
      %p147 = pneg %p141
      %p148 = scmp.eq.s32.totalorder %s14, 1
      %p149 = por %p147, %p148
      %p150 = scmp.ne.s32.totalorder %s142, %s145
      %p151 = scmp.eq.s32.totalorder %s14, 0
      %p152 = por %p150, %p151
      %p153 = scmp.ne.s32.totalorder %s142, %s145
      %p154 = scmp.eq.s32.totalorder %s19, 1
      %p155 = por %p153, %p154
      %p156 = scmp.ne.s32.totalorder %s145, %s146
      %p157 = scmp.eq.s32.totalorder %s19, 0
      %p158 = por %p156, %p157
      %p159 = scmp.ne.s32.totalorder %s145, %s146
      %p160 = scmp.eq.s32.totalorder %s20, 1
      %p161 = por %p159, %p160
      %p163 = scmp.ne.s32.totalorder %s146, %s162
      %p164 = scmp.eq.s32.totalorder %s20, 0
      %p165 = por %p163, %p164
      %s166 = ssub.s32 %s21, %s33
      %s167 = ssub.s32 %s22, %s29
      %s168 = sor.u32 %s166, %s167
      %p169 = scmp.eq.s32.totalorder %s168, 0
      %s171 = sadd.s32 %s170, 1
      %s172 = scalar_select %p169, %s170, %s171
      %p175 = pneg %p169
      %p176 = scmp.eq.s32.totalorder %s14, 1
      %p177 = por %p175, %p176
      %p178 = scmp.ne.s32.totalorder %s170, %s173
      %p179 = scmp.eq.s32.totalorder %s14, 0
      %p180 = por %p178, %p179
      %p181 = scmp.ne.s32.totalorder %s170, %s173
      %p182 = scmp.eq.s32.totalorder %s19, 1
      %p183 = por %p181, %p182
      %p184 = scmp.ne.s32.totalorder %s173, %s174
      %p185 = scmp.eq.s32.totalorder %s19, 0
      %p186 = por %p184, %p185
      %p187 = scmp.ne.s32.totalorder %s173, %s174
      %p188 = scmp.eq.s32.totalorder %s20, 1
      %p189 = por %p187, %p188
      %p191 = scmp.ne.s32.totalorder %s174, %s190
      %p192 = scmp.eq.s32.totalorder %s20, 0
      %p193 = por %p191, %p192
      %p194 = scmp.le.s32.totalorder 1, %s14
      %p195 = scmp.lt.s32.totalorder %s14, 3
      %p196 = pnand %p194, %p195
      %p197 = pneg %p196
      // Predicated region
      $region9: #{basic_block_ap_forward.5} parent=5 // pred_check
        _
      $region10: #{basic_block_ap_forward.5} parent=5 // pred_check_branch
        %199 = sbr.rel (%p196) target = $region12
      $region11: #{basic_block_ap_forward.5} parent=5 // pred_region
        %s200 = ssub.s32 %s14, 1
        // Predicated region
        $region13: #{basic_block_ap_forward.5} parent=11 // pred_check
          %p201 = pneg %p78
        $region14: #{basic_block_ap_forward.5} parent=11 // pred_check_branch
          %203 = sbr.rel (%p201) target = $region16
        $region15: #{basic_block_ap_forward.5} parent=11 // pred_region
          %p204 = scmp.lt.s32.totalorder %s24, 0
          %s205 = scalar_select %p204, %s24, 0
          %s206 = smul.addr %s205, 4
          %s207 = scalar_lea.vmem %s1, %s206
        $region16: #{basic_block_ap_forward.5} parent=11 // pred_fallthru
          _
        // Predicated region
        $region17: #{basic_block_ap_forward.5} parent=11 // pred_check
          %p208 = pneg %p104
        $region18: #{basic_block_ap_forward.5} parent=11 // pred_check_branch
          %210 = sbr.rel (%p208) target = $region20
        $region19: #{basic_block_ap_forward.5} parent=11 // pred_region
          %p211 = scmp.lt.s32.totalorder %s24, 0
          %s212 = scalar_select %p211, %s24, 0
          %s213 = scalar_lea.vmem %s2, %s212
        $region20: #{basic_block_ap_forward.5} parent=11 // pred_fallthru
          _
        // Predicated region
        $region21: #{basic_block_ap_forward.5} parent=11 // pred_check
          %p214 = pneg %p130
        $region22: #{basic_block_ap_forward.5} parent=11 // pred_check_branch
          %216 = sbr.rel (%p214) target = $region24
        $region23: #{basic_block_ap_forward.5} parent=11 // pred_region
          %p217 = scmp.lt.s32.totalorder %s24, 0
          %s218 = scalar_select %p217, %s24, 0
          %s219 = scalar_lea.vmem %s3, %s218
        $region24: #{basic_block_ap_forward.5} parent=11 // pred_fallthru
          _
      $region12: #{basic_block_ap_forward.5} parent=5 // pred_fallthru
        _
      %p220 = scmp.lt.s32.totalorder %s14, 2
      // Predicated region
      $region25: #{basic_block_ap_forward.5} parent=5 // pred_check
        %p221 = pneg %p220
      $region26: #{basic_block_ap_forward.5} parent=5 // pred_check_branch
        %223 = sbr.rel (%p221) target = $region28
      $region27: #{basic_block_ap_forward.5} parent=5 // pred_region
        // Predicated region
        $region29: #{basic_block_ap_forward.5} parent=27 // pred_check
          %p224 = pneg %p46
        $region30: #{basic_block_ap_forward.5} parent=27 // pred_check_branch
          %226 = sbr.rel (%p224) target = $region32
        $region31: #{basic_block_ap_forward.5} parent=27 // pred_region
          %p227 = scmp.lt.s32.totalorder %s21, 1
          %s228 = scalar_select %p227, %s21, 1
          %s229 = smul.addr %s228, 72
          %s230 = smul.addr %s229, 4
          %s231 = scalar_lea.vmem %s0, %s230
        $region32: #{basic_block_ap_forward.5} parent=27 // pred_fallthru
          _
        // Predicated region
        $region33: #{basic_block_ap_forward.5} parent=27 // pred_check
          %p232 = pneg %p152
        $region34: #{basic_block_ap_forward.5} parent=27 // pred_check_branch
          %234 = sbr.rel (%p232) target = $region36
        $region35: #{basic_block_ap_forward.5} parent=27 // pred_region
          %p235 = scmp.lt.s32.totalorder %s21, 1
          %s236 = scalar_select %p235, %s21, 1
          %p237 = scmp.lt.s32.totalorder %s22, 0
          %s238 = scalar_select %p237, %s22, 0
          %s239 = smul.addr %s236, 8
          %s240 = sadd.s32 %s238, %s239
          %s241 = smul.addr %s240, 4
          %s242 = scalar_lea.vmem %s4, %s241
        $region36: #{basic_block_ap_forward.5} parent=27 // pred_fallthru
          _
      $region28: #{basic_block_ap_forward.5} parent=5 // pred_fallthru
        _
      %p243 = scmp.le.s32.totalorder 1, %s14
      %p244 = scmp.lt.s32.totalorder %s14, 3
      %p245 = pnand %p243, %p244
      %p246 = pneg %p245
      // Predicated region
      $region37: #{basic_block_ap_forward.5} parent=5 // pred_check
        _
      $region38: #{basic_block_ap_forward.5} parent=5 // pred_check_branch
        %248 = sbr.rel (%p245) target = $region40
      $region39: #{basic_block_ap_forward.5} parent=5 // pred_region
        %s249 = ssub.s32 %s14, 1
        %p250 = scmp.lt.s32.totalorder %s23, 1
        %s251 = scalar_select %p250, %s23, 1
        %s252 = smul.addr %s251, 72
        %s253 = smul.addr %s252, 4
        %s254 = scalar_lea.vmem %s0, %s253
        %p255 = pneg %p52
        %p256 = pneg %p49
        %p257 = scmp.lt.s32.totalorder %s24, 0
        %s258 = scalar_select %p257, %s24, 0
        %s259 = smul.addr %s258, 4
        %s260 = scalar_lea.vmem %s1, %s259
        %p261 = pneg %p78
        %p262 = pneg %p75
        %p263 = scmp.lt.s32.totalorder %s24, 0
        %s264 = scalar_select %p263, %s24, 0
        %s265 = scalar_lea.vmem %s2, %s264
        %p266 = pneg %p104
        %p267 = pneg %p101
        %p268 = scmp.lt.s32.totalorder %s24, 0
        %s269 = scalar_select %p268, %s24, 0
        %s270 = scalar_lea.vmem %s3, %s269
        %p271 = pneg %p130
        %p272 = pneg %p127
        %p273 = scmp.lt.s32.totalorder %s23, 1
        %s274 = scalar_select %p273, %s23, 1
        %p275 = scmp.lt.s32.totalorder %s24, 0
        %s276 = scalar_select %p275, %s24, 0
        %s277 = smul.addr %s274, 8
        %s278 = sadd.s32 %s276, %s277
        %s279 = smul.addr %s278, 4
        %s280 = scalar_lea.vmem %s4, %s279
        %p281 = pneg %p158
        %p282 = pneg %p155
        %p283 = pneg %p186
        %p284 = pneg %p183
        %s285 = sand.u32 %s173, 1
        %s286 = scalar_lea.sflag [#allocation3], %s285
        %s287 = sand.u32 %s173, 1
        %s288 = smul.addr %s287, 64
        %s289 = scalar_lea.vmem [#allocation2], %s288
        %p290 = scmp.lt.s32.totalorder %s23, 1
        %s291 = scalar_select %p290, %s23, 1
        %s292 = smul.addr %s291, 72
        %s293 = smul.addr %s292, 4
        %s294 = scalar_lea.vmem %s0, %s293
        %p295 = scmp.lt.s32.totalorder %s24, 0
        %s296 = scalar_select %p295, %s24, 0
        %s297 = smul.addr %s296, 4
        %s298 = scalar_lea.vmem %s1, %s297
        %p299 = scmp.lt.s32.totalorder %s24, 0
        %s300 = scalar_select %p299, %s24, 0
        %s301 = scalar_lea.vmem %s2, %s300
        %p302 = scmp.lt.s32.totalorder %s24, 0
        %s303 = scalar_select %p302, %s24, 0
        %s304 = scalar_lea.vmem %s3, %s303
        %p305 = scmp.lt.s32.totalorder %s23, 1
        %s306 = scalar_select %p305, %s23, 1
        %p307 = scmp.lt.s32.totalorder %s24, 0
        %s308 = scalar_select %p307, %s24, 0
        %s309 = smul.addr %s306, 8
        %s310 = sadd.s32 %s308, %s309
        %s311 = smul.addr %s310, 4
        %s312 = scalar_lea.vmem %s4, %s311
        %v314 = vld [vmem:[%s294] sm:$0xff]
        %v315 = vld [vmem:[%s294 + $0x8] sm:$0xff]
        %v316 = vld [vmem:[%s294 + $0x10] sm:$0xff]
        %v317 = vld [vmem:[%s294 + $0x18] sm:$0xff]
        %v318 = vld [vmem:[%s294 + $0x20] sm:$0xf]
        %v319 = vld [vmem:[%s294 + $0x24] sm:$0xff]
        %v320 = vld [vmem:[%s294 + $0x2c] sm:$0xff]
        %v321 = vld [vmem:[%s294 + $0x34] sm:$0xff]
        %v322 = vld [vmem:[%s294 + $0x3c] sm:$0xff]
        %v323 = vld [vmem:[%s294 + $0x44] sm:$0xf]
        %v324 = vld [vmem:[%s294 + $0x48] sm:$0xff]
        %v325 = vld [vmem:[%s294 + $0x50] sm:$0xff]
        %v326 = vld [vmem:[%s294 + $0x58] sm:$0xff]
        %v327 = vld [vmem:[%s294 + $0x60] sm:$0xff]
        %v328 = vld [vmem:[%s294 + $0x68] sm:$0xf]
        %v329 = vld [vmem:[%s294 + $0x6c] sm:$0xff]
        %v330 = vld [vmem:[%s294 + $0x74] sm:$0xff]
        %v331 = vld [vmem:[%s294 + $0x7c] sm:$0xff]
        %v332 = vld [vmem:[%s294 + $0x84] sm:$0xff]
        %v333 = vld [vmem:[%s294 + $0x8c] sm:$0xf]
        %v334 = vld [vmem:[%s294 + $0x90] sm:$0xff]
        %v335 = vld [vmem:[%s294 + $0x98] sm:$0xff]
        %v336 = vld [vmem:[%s294 + $0xa0] sm:$0xff]
        %v337 = vld [vmem:[%s294 + $0xa8] sm:$0xff]
        %v338 = vld [vmem:[%s294 + $0xb0] sm:$0xf]
        %v339 = vld [vmem:[%s294 + $0xb4] sm:$0xff]
        %v340 = vld [vmem:[%s294 + $0xbc] sm:$0xff]
        %v341 = vld [vmem:[%s294 + $0xc4] sm:$0xff]
        %v342 = vld [vmem:[%s294 + $0xcc] sm:$0xff]
        %v343 = vld [vmem:[%s294 + $0xd4] sm:$0xf]
        %v344 = vld [vmem:[%s294 + $0xd8] sm:$0xff]
        %v345 = vld [vmem:[%s294 + $0xe0] sm:$0xff]
        %v346 = vld [vmem:[%s294 + $0xe8] sm:$0xff]
        %v347 = vld [vmem:[%s294 + $0xf0] sm:$0xff]
        %v348 = vld [vmem:[%s294 + $0xf8] sm:$0xf]
        %v349 = vld [vmem:[%s294 + $0xfc] sm:$0xff]
        %v350 = vld [vmem:[%s294 + $0x104] sm:$0xff]
        %v351 = vld [vmem:[%s294 + $0x10c] sm:$0xff]
        %v352 = vld [vmem:[%s294 + $0x114] sm:$0xff]
        %v353 = vld [vmem:[%s294 + $0x11c] sm:$0xf]
        %v354 = vld [vmem:[%s298] sm:$0xf]
        %v355 = vld [vmem:[%s298 + $0x4] sm:$0xf]
        %v356 = vld [vmem:[%s298 + $0x8] sm:$0xf]
        %v357 = vld [vmem:[%s298 + $0xc] sm:$0xf]
        %v358 = vld [vmem:[%s298 + $0x10] sm:$0xf]
        %v359 = vld [vmem:[%s298 + $0x14] sm:$0xf]
        %v360 = vld [vmem:[%s298 + $0x18] sm:$0xf]
        %v361 = vld [vmem:[%s298 + $0x1c] sm:$0xf]
        %v362 = vld [vmem:[%s298 + $0x20] sm:$0xf]
        %v363 = vld [vmem:[%s298 + $0x24] sm:$0xf]
        %v364 = vld [vmem:[%s298 + $0x28] sm:$0xf]
        %v365 = vld [vmem:[%s298 + $0x2c] sm:$0xf]
        %v366 = vld [vmem:[%s298 + $0x30] sm:$0xf]
        %v367 = vld [vmem:[%s298 + $0x34] sm:$0xf]
        %v368 = vld [vmem:[%s298 + $0x38] sm:$0xf]
        %v369 = vld [vmem:[%s298 + $0x3c] sm:$0xf]
        %v370 = vld [vmem:[%s298 + $0x40] sm:$0xf]
        %v371 = vld [vmem:[%s298 + $0x44] sm:$0xf]
        %v372 = vld [vmem:[%s298 + $0x48] sm:$0xf]
        %v373 = vld [vmem:[%s298 + $0x4c] sm:$0xf]
        %v374 = vld [vmem:[%s298 + $0x50] sm:$0xf]
        %v375 = vld [vmem:[%s298 + $0x54] sm:$0xf]
        %v376 = vld [vmem:[%s298 + $0x58] sm:$0xf]
        %v377 = vld [vmem:[%s298 + $0x5c] sm:$0xf]
        %v378 = vld [vmem:[%s298 + $0x60] sm:$0xf]
        %v379 = vld [vmem:[%s298 + $0x64] sm:$0xf]
        %v380 = vld [vmem:[%s298 + $0x68] sm:$0xf]
        %v381 = vld [vmem:[%s298 + $0x6c] sm:$0xf]
        %v382 = vld [vmem:[%s298 + $0x70] sm:$0xf]
        %v383 = vld [vmem:[%s298 + $0x74] sm:$0xf]
        %v384 = vld [vmem:[%s298 + $0x78] sm:$0xf]
        %v385 = vld [vmem:[%s298 + $0x7c] sm:$0xf]
        %v386 = vld [vmem:[%s298 + $0x80] sm:$0xf]
        %v387 = vld [vmem:[%s298 + $0x84] sm:$0xf]
        %v388 = vld [vmem:[%s298 + $0x88] sm:$0xf]
        %v389 = vld [vmem:[%s298 + $0x8c] sm:$0xf]
        %v390 = vld [vmem:[%s298 + $0x90] sm:$0xf]
        %v391 = vld [vmem:[%s298 + $0x94] sm:$0xf]
        %v392 = vld [vmem:[%s298 + $0x98] sm:$0xf]
        %v393 = vld [vmem:[%s298 + $0x9c] sm:$0xf]
        %v394 = vld [vmem:[%s298 + $0xa0] sm:$0xf]
        %v395 = vld [vmem:[%s298 + $0xa4] sm:$0xf]
        %v396 = vld [vmem:[%s298 + $0xa8] sm:$0xf]
        %v397 = vld [vmem:[%s298 + $0xac] sm:$0xf]
        %v398 = vld [vmem:[%s298 + $0xb0] sm:$0xf]
        %v399 = vld [vmem:[%s298 + $0xb4] sm:$0xf]
        %v400 = vld [vmem:[%s298 + $0xb8] sm:$0xf]
        %v401 = vld [vmem:[%s298 + $0xbc] sm:$0xf]
        %v402 = vld [vmem:[%s298 + $0xc0] sm:$0xf]
        %v403 = vld [vmem:[%s298 + $0xc4] sm:$0xf]
        %v404 = vld [vmem:[%s298 + $0xc8] sm:$0xf]
        %v405 = vld [vmem:[%s298 + $0xcc] sm:$0xf]
        %v406 = vld [vmem:[%s298 + $0xd0] sm:$0xf]
        %v407 = vld [vmem:[%s298 + $0xd4] sm:$0xf]
        %v408 = vld [vmem:[%s298 + $0xd8] sm:$0xf]
        %v409 = vld [vmem:[%s298 + $0xdc] sm:$0xf]
        %v410 = vld [vmem:[%s298 + $0xe0] sm:$0xf]
        %v411 = vld [vmem:[%s298 + $0xe4] sm:$0xf]
        %v412 = vld [vmem:[%s298 + $0xe8] sm:$0xf]
        %v413 = vld [vmem:[%s298 + $0xec] sm:$0xf]
        %v414 = vld [vmem:[%s298 + $0xf0] sm:$0xf]
        %v415 = vld [vmem:[%s298 + $0xf4] sm:$0xf]
        %v416 = vld [vmem:[%s298 + $0xf8] sm:$0xf]
        %v417 = vld [vmem:[%s298 + $0xfc] sm:$0xf]
        %v418 = vld [vmem:[%s298 + $0x100] sm:$0xf]
        %v419 = vld [vmem:[%s298 + $0x104] sm:$0xf]
        %v420 = vld [vmem:[%s298 + $0x108] sm:$0xf]
        %v421 = vld [vmem:[%s298 + $0x10c] sm:$0xf]
        %v422 = vld [vmem:[%s298 + $0x110] sm:$0xf]
        %v423 = vld [vmem:[%s298 + $0x114] sm:$0xf]
        %v424 = vld [vmem:[%s298 + $0x118] sm:$0xf]
        %v425 = vld [vmem:[%s298 + $0x11c] sm:$0xf]
        %v426 = vld [vmem:[%s298 + $0x120] sm:$0xf]
        %v427 = vld [vmem:[%s298 + $0x124] sm:$0xf]
        %v428 = vld [vmem:[%s298 + $0x128] sm:$0xf]
        %v429 = vld [vmem:[%s298 + $0x12c] sm:$0xf]
        %v430 = vld [vmem:[%s298 + $0x130] sm:$0xf]
        %v431 = vld [vmem:[%s298 + $0x134] sm:$0xf]
        %v432 = vld [vmem:[%s298 + $0x138] sm:$0xf]
        %v433 = vld [vmem:[%s298 + $0x13c] sm:$0xf]
        %v434 = vld [vmem:[%s298 + $0x140] sm:$0xf]
        %v435 = vld [vmem:[%s298 + $0x144] sm:$0xf]
        %v436 = vld [vmem:[%s298 + $0x148] sm:$0xf]
        %v437 = vld [vmem:[%s298 + $0x14c] sm:$0xf]
        %v438 = vld [vmem:[%s298 + $0x150] sm:$0xf]
        %v439 = vld [vmem:[%s298 + $0x154] sm:$0xf]
        %v440 = vld [vmem:[%s298 + $0x158] sm:$0xf]
        %v441 = vld [vmem:[%s298 + $0x15c] sm:$0xf]
        %v442 = vld [vmem:[%s298 + $0x160] sm:$0xf]
        %v443 = vld [vmem:[%s298 + $0x164] sm:$0xf]
        %v444 = vld [vmem:[%s298 + $0x168] sm:$0xf]
        %v445 = vld [vmem:[%s298 + $0x16c] sm:$0xf]
        %v446 = vld [vmem:[%s298 + $0x170] sm:$0xf]
        %v447 = vld [vmem:[%s298 + $0x174] sm:$0xf]
        %v448 = vld [vmem:[%s298 + $0x178] sm:$0xf]
        %v449 = vld [vmem:[%s298 + $0x17c] sm:$0xf]
        %v450 = vld [vmem:[%s298 + $0x180] sm:$0xf]
        %v451 = vld [vmem:[%s298 + $0x184] sm:$0xf]
        %v452 = vld [vmem:[%s298 + $0x188] sm:$0xf]
        %v453 = vld [vmem:[%s298 + $0x18c] sm:$0xf]
        %v454 = vld [vmem:[%s298 + $0x190] sm:$0xf]
        %v455 = vld [vmem:[%s298 + $0x194] sm:$0xf]
        %v456 = vld [vmem:[%s298 + $0x198] sm:$0xf]
        %v457 = vld [vmem:[%s298 + $0x19c] sm:$0xf]
        %v458 = vld [vmem:[%s298 + $0x1a0] sm:$0xf]
        %v459 = vld [vmem:[%s298 + $0x1a4] sm:$0xf]
        %v460 = vld [vmem:[%s298 + $0x1a8] sm:$0xf]
        %v461 = vld [vmem:[%s298 + $0x1ac] sm:$0xf]
        %v462 = vld [vmem:[%s298 + $0x1b0] sm:$0xf]
        %v463 = vld [vmem:[%s298 + $0x1b4] sm:$0xf]
        %v464 = vld [vmem:[%s298 + $0x1b8] sm:$0xf]
        %v465 = vld [vmem:[%s298 + $0x1bc] sm:$0xf]
        %v466 = vld [vmem:[%s298 + $0x1c0] sm:$0xf]
        %v467 = vld [vmem:[%s298 + $0x1c4] sm:$0xf]
        %v468 = vld [vmem:[%s298 + $0x1c8] sm:$0xf]
        %v469 = vld [vmem:[%s298 + $0x1cc] sm:$0xf]
        %v470 = vld [vmem:[%s298 + $0x1d0] sm:$0xf]
        %v471 = vld [vmem:[%s298 + $0x1d4] sm:$0xf]
        %v472 = vld [vmem:[%s298 + $0x1d8] sm:$0xf]
        %v473 = vld [vmem:[%s298 + $0x1dc] sm:$0xf]
        %v474 = vld [vmem:[%s298 + $0x1e0] sm:$0xf]
        %v475 = vld [vmem:[%s298 + $0x1e4] sm:$0xf]
        %v476 = vld [vmem:[%s298 + $0x1e8] sm:$0xf]
        %v477 = vld [vmem:[%s298 + $0x1ec] sm:$0xf]
        %v478 = vld [vmem:[%s298 + $0x1f0] sm:$0xf]
        %v479 = vld [vmem:[%s298 + $0x1f4] sm:$0xf]
        %v480 = vld [vmem:[%s298 + $0x1f8] sm:$0xf]
        %v481 = vld [vmem:[%s298 + $0x1fc] sm:$0xf]
        %v482 = vld [vmem:[%s298 + $0x200] sm:$0xf]
        %v483 = vld [vmem:[%s298 + $0x204] sm:$0xf]
        %v484 = vld [vmem:[%s298 + $0x208] sm:$0xf]
        %v485 = vld [vmem:[%s298 + $0x20c] sm:$0xf]
        %v486 = vld [vmem:[%s298 + $0x210] sm:$0xf]
        %v487 = vld [vmem:[%s298 + $0x214] sm:$0xf]
        %v488 = vld [vmem:[%s298 + $0x218] sm:$0xf]
        %v489 = vld [vmem:[%s298 + $0x21c] sm:$0xf]
        %v490 = vld [vmem:[%s298 + $0x220] sm:$0xf]
        %v491 = vld [vmem:[%s298 + $0x224] sm:$0xf]
        %v492 = vld [vmem:[%s298 + $0x228] sm:$0xf]
        %v493 = vld [vmem:[%s298 + $0x22c] sm:$0xf]
        %v494 = vld [vmem:[%s298 + $0x230] sm:$0xf]
        %v495 = vld [vmem:[%s298 + $0x234] sm:$0xf]
        %v496 = vld [vmem:[%s298 + $0x238] sm:$0xf]
        %v497 = vld [vmem:[%s298 + $0x23c] sm:$0xf]
        %v538 = vunpack.c.l.b16 %v314
        %v539 = vunpack.c.h.b16 %v314
        %v540 = vunpack.c.l.b16 %v315
        %v541 = vunpack.c.h.b16 %v315
        %v542 = vunpack.c.l.b16 %v316
        %v543 = vunpack.c.h.b16 %v316
        %v544 = vunpack.c.l.b16 %v317
        %v545 = vunpack.c.h.b16 %v317
        %v546 = vunpack.c.l.b16 %v318
        %v547 = vunpack.c.l.b16 %v319
        %v548 = vunpack.c.h.b16 %v319
        %v549 = vunpack.c.l.b16 %v320
        %v550 = vunpack.c.h.b16 %v320
        %v551 = vunpack.c.l.b16 %v321
        %v552 = vunpack.c.h.b16 %v321
        %v553 = vunpack.c.l.b16 %v322
        %v554 = vunpack.c.h.b16 %v322
        %v555 = vunpack.c.l.b16 %v323
        %v556 = vunpack.c.l.b16 %v324
        %v557 = vunpack.c.h.b16 %v324
        %v558 = vunpack.c.l.b16 %v325
        %v559 = vunpack.c.h.b16 %v325
        %v560 = vunpack.c.l.b16 %v326
        %v561 = vunpack.c.h.b16 %v326
        %v562 = vunpack.c.l.b16 %v327
        %v563 = vunpack.c.h.b16 %v327
        %v564 = vunpack.c.l.b16 %v328
        %v565 = vunpack.c.l.b16 %v329
        %v566 = vunpack.c.h.b16 %v329
        %v567 = vunpack.c.l.b16 %v330
        %v568 = vunpack.c.h.b16 %v330
        %v569 = vunpack.c.l.b16 %v331
        %v570 = vunpack.c.h.b16 %v331
        %v571 = vunpack.c.l.b16 %v332
        %v572 = vunpack.c.h.b16 %v332
        %v573 = vunpack.c.l.b16 %v333
        %v574 = vunpack.c.l.b16 %v334
        %v575 = vunpack.c.h.b16 %v334
        %v576 = vunpack.c.l.b16 %v335
        %v577 = vunpack.c.h.b16 %v335
        %v578 = vunpack.c.l.b16 %v336
        %v579 = vunpack.c.h.b16 %v336
        %v580 = vunpack.c.l.b16 %v337
        %v581 = vunpack.c.h.b16 %v337
        %v582 = vunpack.c.l.b16 %v338
        %v583 = vunpack.c.l.b16 %v339
        %v584 = vunpack.c.h.b16 %v339
        %v585 = vunpack.c.l.b16 %v340
        %v586 = vunpack.c.h.b16 %v340
        %v587 = vunpack.c.l.b16 %v341
        %v588 = vunpack.c.h.b16 %v341
        %v589 = vunpack.c.l.b16 %v342
        %v590 = vunpack.c.h.b16 %v342
        %v591 = vunpack.c.l.b16 %v343
        %v592 = vunpack.c.l.b16 %v344
        %v593 = vunpack.c.h.b16 %v344
        %v594 = vunpack.c.l.b16 %v345
        %v595 = vunpack.c.h.b16 %v345
        %v596 = vunpack.c.l.b16 %v346
        %v597 = vunpack.c.h.b16 %v346
        %v598 = vunpack.c.l.b16 %v347
        %v599 = vunpack.c.h.b16 %v347
        %v600 = vunpack.c.l.b16 %v348
        %v601 = vunpack.c.l.b16 %v349
        %v602 = vunpack.c.h.b16 %v349
        %v603 = vunpack.c.l.b16 %v350
        %v604 = vunpack.c.h.b16 %v350
        %v605 = vunpack.c.l.b16 %v351
        %v606 = vunpack.c.h.b16 %v351
        %v607 = vunpack.c.l.b16 %v352
        %v608 = vunpack.c.h.b16 %v352
        %v609 = vunpack.c.l.b16 %v353
        %v610 = vpack.c.b16 %v547, %v538
        %v611 = vpack.c.b16 %v548, %v539
        %v612 = vpack.c.b16 %v549, %v540
        %v613 = vpack.c.b16 %v550, %v541
        %v614 = vpack.c.b16 %v551, %v542
        %v615 = vpack.c.b16 %v552, %v543
        %v616 = vpack.c.b16 %v553, %v544
        %v617 = vpack.c.b16 %v554, %v545
        %v618 = vpack.c.b16 %v555, %v546
        %v619 = vpack.c.b16 %v565, %v556
        %v620 = vpack.c.b16 %v566, %v557
        %v621 = vpack.c.b16 %v567, %v558
        %v622 = vpack.c.b16 %v568, %v559
        %v623 = vpack.c.b16 %v569, %v560
        %v624 = vpack.c.b16 %v570, %v561
        %v625 = vpack.c.b16 %v571, %v562
        %v626 = vpack.c.b16 %v572, %v563
        %v627 = vpack.c.b16 %v573, %v564
        %v628 = vpack.c.b16 %v583, %v574
        %v629 = vpack.c.b16 %v584, %v575
        %v630 = vpack.c.b16 %v585, %v576
        %v631 = vpack.c.b16 %v586, %v577
        %v632 = vpack.c.b16 %v587, %v578
        %v633 = vpack.c.b16 %v588, %v579
        %v634 = vpack.c.b16 %v589, %v580
        %v635 = vpack.c.b16 %v590, %v581
        %v636 = vpack.c.b16 %v591, %v582
        %v637 = vpack.c.b16 %v601, %v592
        %v638 = vpack.c.b16 %v602, %v593
        %v639 = vpack.c.b16 %v603, %v594
        %v640 = vpack.c.b16 %v604, %v595
        %v641 = vpack.c.b16 %v605, %v596
        %v642 = vpack.c.b16 %v606, %v597
        %v643 = vpack.c.b16 %v607, %v598
        %v644 = vpack.c.b16 %v608, %v599
        %v645 = vpack.c.b16 %v609, %v600
        %v826 = vunpack.c.l.b16 %v354
        %v827 = vunpack.c.l.b16 %v355
        %v828 = vunpack.c.l.b16 %v356
        %v829 = vunpack.c.l.b16 %v357
        %v830 = vunpack.c.l.b16 %v358
        %v831 = vunpack.c.l.b16 %v359
        %v832 = vunpack.c.l.b16 %v360
        %v833 = vunpack.c.l.b16 %v361
        %v834 = vunpack.c.l.b16 %v362
        %v835 = vunpack.c.l.b16 %v363
        %v836 = vunpack.c.l.b16 %v364
        %v837 = vunpack.c.l.b16 %v365
        %v838 = vunpack.c.l.b16 %v366
        %v839 = vunpack.c.l.b16 %v367
        %v840 = vunpack.c.l.b16 %v368
        %v841 = vunpack.c.l.b16 %v369
        %v842 = vunpack.c.l.b16 %v370
        %v843 = vunpack.c.l.b16 %v371
        %v844 = vunpack.c.l.b16 %v372
        %v845 = vunpack.c.l.b16 %v373
        %v846 = vunpack.c.l.b16 %v374
        %v847 = vunpack.c.l.b16 %v375
        %v848 = vunpack.c.l.b16 %v376
        %v849 = vunpack.c.l.b16 %v377
        %v850 = vunpack.c.l.b16 %v378
        %v851 = vunpack.c.l.b16 %v379
        %v852 = vunpack.c.l.b16 %v380
        %v853 = vunpack.c.l.b16 %v381
        %v854 = vunpack.c.l.b16 %v382
        %v855 = vunpack.c.l.b16 %v383
        %v856 = vunpack.c.l.b16 %v384
        %v857 = vunpack.c.l.b16 %v385
        %v858 = vunpack.c.l.b16 %v386
        %v859 = vunpack.c.l.b16 %v387
        %v860 = vunpack.c.l.b16 %v388
        %v861 = vunpack.c.l.b16 %v389
        %v862 = vunpack.c.l.b16 %v390
        %v863 = vunpack.c.l.b16 %v391
        %v864 = vunpack.c.l.b16 %v392
        %v865 = vunpack.c.l.b16 %v393
        %v866 = vunpack.c.l.b16 %v394
        %v867 = vunpack.c.l.b16 %v395
        %v868 = vunpack.c.l.b16 %v396
        %v869 = vunpack.c.l.b16 %v397
        %v870 = vunpack.c.l.b16 %v398
        %v871 = vunpack.c.l.b16 %v399
        %v872 = vunpack.c.l.b16 %v400
        %v873 = vunpack.c.l.b16 %v401
        %v874 = vunpack.c.l.b16 %v402
        %v875 = vunpack.c.l.b16 %v403
        %v876 = vunpack.c.l.b16 %v404
        %v877 = vunpack.c.l.b16 %v405
        %v878 = vunpack.c.l.b16 %v406
        %v879 = vunpack.c.l.b16 %v407
        %v880 = vunpack.c.l.b16 %v408
        %v881 = vunpack.c.l.b16 %v409
        %v882 = vunpack.c.l.b16 %v410
        %v883 = vunpack.c.l.b16 %v411
        %v884 = vunpack.c.l.b16 %v412
        %v885 = vunpack.c.l.b16 %v413
        %v886 = vunpack.c.l.b16 %v414
        %v887 = vunpack.c.l.b16 %v415
        %v888 = vunpack.c.l.b16 %v416
        %v889 = vunpack.c.l.b16 %v417
        %v890 = vunpack.c.l.b16 %v418
        %v891 = vunpack.c.l.b16 %v419
        %v892 = vunpack.c.l.b16 %v420
        %v893 = vunpack.c.l.b16 %v421
        %v894 = vunpack.c.l.b16 %v422
        %v895 = vunpack.c.l.b16 %v423
        %v896 = vunpack.c.l.b16 %v424
        %v897 = vunpack.c.l.b16 %v425
        %v898 = vunpack.c.l.b16 %v426
        %v899 = vunpack.c.l.b16 %v427
        %v900 = vunpack.c.l.b16 %v428
        %v901 = vunpack.c.l.b16 %v429
        %v902 = vunpack.c.l.b16 %v430
        %v903 = vunpack.c.l.b16 %v431
        %v904 = vunpack.c.l.b16 %v432
        %v905 = vunpack.c.l.b16 %v433
        %v906 = vunpack.c.l.b16 %v434
        %v907 = vunpack.c.l.b16 %v435
        %v908 = vunpack.c.l.b16 %v436
        %v909 = vunpack.c.l.b16 %v437
        %v910 = vunpack.c.l.b16 %v438
        %v911 = vunpack.c.l.b16 %v439
        %v912 = vunpack.c.l.b16 %v440
        %v913 = vunpack.c.l.b16 %v441
        %v914 = vunpack.c.l.b16 %v442
        %v915 = vunpack.c.l.b16 %v443
        %v916 = vunpack.c.l.b16 %v444
        %v917 = vunpack.c.l.b16 %v445
        %v918 = vunpack.c.l.b16 %v446
        %v919 = vunpack.c.l.b16 %v447
        %v920 = vunpack.c.l.b16 %v448
        %v921 = vunpack.c.l.b16 %v449
        %v922 = vunpack.c.l.b16 %v450
        %v923 = vunpack.c.l.b16 %v451
        %v924 = vunpack.c.l.b16 %v452
        %v925 = vunpack.c.l.b16 %v453
        %v926 = vunpack.c.l.b16 %v454
        %v927 = vunpack.c.l.b16 %v455
        %v928 = vunpack.c.l.b16 %v456
        %v929 = vunpack.c.l.b16 %v457
        %v930 = vunpack.c.l.b16 %v458
        %v931 = vunpack.c.l.b16 %v459
        %v932 = vunpack.c.l.b16 %v460
        %v933 = vunpack.c.l.b16 %v461
        %v934 = vunpack.c.l.b16 %v462
        %v935 = vunpack.c.l.b16 %v463
        %v936 = vunpack.c.l.b16 %v464
        %v937 = vunpack.c.l.b16 %v465
        %v938 = vunpack.c.l.b16 %v466
        %v939 = vunpack.c.l.b16 %v467
        %v940 = vunpack.c.l.b16 %v468
        %v941 = vunpack.c.l.b16 %v469
        %v942 = vunpack.c.l.b16 %v470
        %v943 = vunpack.c.l.b16 %v471
        %v944 = vunpack.c.l.b16 %v472
        %v945 = vunpack.c.l.b16 %v473
        %v946 = vunpack.c.l.b16 %v474
        %v947 = vunpack.c.l.b16 %v475
        %v948 = vunpack.c.l.b16 %v476
        %v949 = vunpack.c.l.b16 %v477
        %v950 = vunpack.c.l.b16 %v478
        %v951 = vunpack.c.l.b16 %v479
        %v952 = vunpack.c.l.b16 %v480
        %v953 = vunpack.c.l.b16 %v481
        %v954 = vunpack.c.l.b16 %v482
        %v955 = vunpack.c.l.b16 %v483
        %v956 = vunpack.c.l.b16 %v484
        %v957 = vunpack.c.l.b16 %v485
        %v958 = vunpack.c.l.b16 %v486
        %v959 = vunpack.c.l.b16 %v487
        %v960 = vunpack.c.l.b16 %v488
        %v961 = vunpack.c.l.b16 %v489
        %v962 = vunpack.c.l.b16 %v490
        %v963 = vunpack.c.l.b16 %v491
        %v964 = vunpack.c.l.b16 %v492
        %v965 = vunpack.c.l.b16 %v493
        %v966 = vunpack.c.l.b16 %v494
        %v967 = vunpack.c.l.b16 %v495
        %v968 = vunpack.c.l.b16 %v496
        %v969 = vunpack.c.l.b16 %v497
        %v970 = vpack.c.b16 %v827, %v826
        %v971 = vpack.c.b16 %v829, %v828
        %v972 = vpack.c.b16 %v831, %v830
        %v973 = vpack.c.b16 %v833, %v832
        %v974 = vpack.c.b16 %v835, %v834
        %v975 = vpack.c.b16 %v837, %v836
        %v976 = vpack.c.b16 %v839, %v838
        %v977 = vpack.c.b16 %v841, %v840
        %v978 = vpack.c.b16 %v843, %v842
        %v979 = vpack.c.b16 %v845, %v844
        %v980 = vpack.c.b16 %v847, %v846
        %v981 = vpack.c.b16 %v849, %v848
        %v982 = vpack.c.b16 %v851, %v850
        %v983 = vpack.c.b16 %v853, %v852
        %v984 = vpack.c.b16 %v855, %v854
        %v985 = vpack.c.b16 %v857, %v856
        %v986 = vpack.c.b16 %v859, %v858
        %v987 = vpack.c.b16 %v861, %v860
        %v988 = vpack.c.b16 %v863, %v862
        %v989 = vpack.c.b16 %v865, %v864
        %v990 = vpack.c.b16 %v867, %v866
        %v991 = vpack.c.b16 %v869, %v868
        %v992 = vpack.c.b16 %v871, %v870
        %v993 = vpack.c.b16 %v873, %v872
        %v994 = vpack.c.b16 %v875, %v874
        %v995 = vpack.c.b16 %v877, %v876
        %v996 = vpack.c.b16 %v879, %v878
        %v997 = vpack.c.b16 %v881, %v880
        %v998 = vpack.c.b16 %v883, %v882
        %v999 = vpack.c.b16 %v885, %v884
        %v1000 = vpack.c.b16 %v887, %v886
        %v1001 = vpack.c.b16 %v889, %v888
        %v1002 = vpack.c.b16 %v891, %v890
        %v1003 = vpack.c.b16 %v893, %v892
        %v1004 = vpack.c.b16 %v895, %v894
        %v1005 = vpack.c.b16 %v897, %v896
        %v1006 = vpack.c.b16 %v899, %v898
        %v1007 = vpack.c.b16 %v901, %v900
        %v1008 = vpack.c.b16 %v903, %v902
        %v1009 = vpack.c.b16 %v905, %v904
        %v1010 = vpack.c.b16 %v907, %v906
        %v1011 = vpack.c.b16 %v909, %v908
        %v1012 = vpack.c.b16 %v911, %v910
        %v1013 = vpack.c.b16 %v913, %v912
        %v1014 = vpack.c.b16 %v915, %v914
        %v1015 = vpack.c.b16 %v917, %v916
        %v1016 = vpack.c.b16 %v919, %v918
        %v1017 = vpack.c.b16 %v921, %v920
        %v1018 = vpack.c.b16 %v923, %v922
        %v1019 = vpack.c.b16 %v925, %v924
        %v1020 = vpack.c.b16 %v927, %v926
        %v1021 = vpack.c.b16 %v929, %v928
        %v1022 = vpack.c.b16 %v931, %v930
        %v1023 = vpack.c.b16 %v933, %v932
        %v1024 = vpack.c.b16 %v935, %v934
        %v1025 = vpack.c.b16 %v937, %v936
        %v1026 = vpack.c.b16 %v939, %v938
        %v1027 = vpack.c.b16 %v941, %v940
        %v1028 = vpack.c.b16 %v943, %v942
        %v1029 = vpack.c.b16 %v945, %v944
        %v1030 = vpack.c.b16 %v947, %v946
        %v1031 = vpack.c.b16 %v949, %v948
        %v1032 = vpack.c.b16 %v951, %v950
        %v1033 = vpack.c.b16 %v953, %v952
        %v1034 = vpack.c.b16 %v955, %v954
        %v1035 = vpack.c.b16 %v957, %v956
        %v1036 = vpack.c.b16 %v959, %v958
        %v1037 = vpack.c.b16 %v961, %v960
        %v1038 = vpack.c.b16 %v963, %v962
        %v1039 = vpack.c.b16 %v965, %v964
        %v1040 = vpack.c.b16 %v967, %v966
        %v1041 = vpack.c.b16 %v969, %v968
        %1114 = vmatprep.subr.bf16.mxu0 0
        %1115 = vmatpush1.bf16.msra.mxu0 %v977
        %1116 = vmatprep.subr.bf16.mxu0 0
        %1117 = vmatpush1.bf16.msra.mxu0 %v976
        %1118 = vmatprep.subr.bf16.mxu0 0
        %1119 = vmatpush1.bf16.msra.mxu0 %v975
        %1120 = vmatprep.subr.bf16.mxu0 0
        %1121 = vmatpush1.bf16.msra.mxu0 %v974
        %1122 = vmatprep.subr.bf16.mxu0 0
        %1123 = vmatpush1.bf16.msra.mxu0 %v973
        %1124 = vmatprep.subr.bf16.mxu0 0
        %1125 = vmatpush1.bf16.msra.mxu0 %v972
        %1126 = vmatprep.subr.bf16.mxu0 0
        %1127 = vmatpush1.bf16.msra.mxu0 %v971
        %1128 = vmatprep.subr.bf16.mxu0 0
        %1129 = vmatpush1.bf16.msra.mxu0 %v970
        %1130 = vmatprep.subr.bf16.mxu0 0
        %1131 = vmatpush2.bf16.msra.mxu0 %v985
        %1132 = vmatprep.subr.bf16.mxu0 0
        %1133 = vmatpush2.bf16.msra.mxu0 %v984
        %1134 = vmatprep.subr.bf16.mxu0 0
        %1135 = vmatpush2.bf16.msra.mxu0 %v983
        %1136 = vmatprep.subr.bf16.mxu0 0
        %1137 = vmatpush2.bf16.msra.mxu0 %v982
        %1138 = vmatprep.subr.bf16.mxu0 0
        %1139 = vmatpush2.bf16.msra.mxu0 %v981
        %1140 = vmatprep.subr.bf16.mxu0 0
        %1141 = vmatpush2.bf16.msra.mxu0 %v980
        %1142 = vmatprep.subr.bf16.mxu0 0
        %1143 = vmatpush2.bf16.msra.mxu0 %v979
        %1144 = vmatprep.subr.bf16.mxu0 0
        %1145 = vmatpush2.bf16.msra.mxu0 %v978
        %1146 = vmatprep.mubr.bf16.mxu0 %v611
        %1147 = vmatmul.mubr.bf16.gmra.mxu0 %v610
        %v1148 = vpop.f32.mrf.mxu0
        %v1149 = vadd.f32 0.0, %v1148
        %v1150 = vpop.f32.mrf.mxu0
        %v1151 = vpop.f32.mrf.mxu0
        %v1152 = vadd.f32 0.0, %v1151
        %v1153 = vpop.f32.mrf.mxu0
        %1154 = vmatprep.mubr.bf16.mxu0 %v620
        %1155 = vmatmul.mubr.bf16.gmra.mxu0 %v619
        %v1156 = vpop.f32.mrf.mxu0
        %v1157 = vadd.f32 0.0, %v1156
        %v1158 = vpop.f32.mrf.mxu0
        %v1159 = vpop.f32.mrf.mxu0
        %v1160 = vadd.f32 0.0, %v1159
        %v1161 = vpop.f32.mrf.mxu0
        %1162 = vmatprep.mubr.bf16.mxu0 %v629
        %1163 = vmatmul.mubr.bf16.gmra.mxu0 %v628
        %v1164 = vpop.f32.mrf.mxu0
        %v1165 = vadd.f32 0.0, %v1164
        %v1166 = vpop.f32.mrf.mxu0
        %v1167 = vpop.f32.mrf.mxu0
        %v1168 = vadd.f32 0.0, %v1167
        %v1169 = vpop.f32.mrf.mxu0
        %1170 = vmatprep.mubr.bf16.mxu0 %v638
        %1171 = vmatmul.mubr.bf16.gmra.mxu0 %v637
        %v1172 = vpop.f32.mrf.mxu0
        %v1173 = vadd.f32 0.0, %v1172
        %v1174 = vpop.f32.mrf.mxu0
        %v1175 = vpop.f32.mrf.mxu0
        %v1176 = vadd.f32 0.0, %v1175
        %v1177 = vpop.f32.mrf.mxu0
        %1178 = vdwg.mxu0
        %1179 = vmatprep.subr.bf16.mxu0 0
        %1180 = vmatpush1.bf16.msra.mxu0 %v993
        %1181 = vmatprep.subr.bf16.mxu0 0
        %1182 = vmatpush1.bf16.msra.mxu0 %v992
        %1183 = vmatprep.subr.bf16.mxu0 0
        %1184 = vmatpush1.bf16.msra.mxu0 %v991
        %1185 = vmatprep.subr.bf16.mxu0 0
        %1186 = vmatpush1.bf16.msra.mxu0 %v990
        %1187 = vmatprep.subr.bf16.mxu0 0
        %1188 = vmatpush1.bf16.msra.mxu0 %v989
        %1189 = vmatprep.subr.bf16.mxu0 0
        %1190 = vmatpush1.bf16.msra.mxu0 %v988
        %1191 = vmatprep.subr.bf16.mxu0 0
        %1192 = vmatpush1.bf16.msra.mxu0 %v987
        %1193 = vmatprep.subr.bf16.mxu0 0
        %1194 = vmatpush1.bf16.msra.mxu0 %v986
        %1195 = vmatprep.subr.bf16.mxu0 0
        %1196 = vmatpush2.bf16.msra.mxu0 %v1001
        %1197 = vmatprep.subr.bf16.mxu0 0
        %1198 = vmatpush2.bf16.msra.mxu0 %v1000
        %1199 = vmatprep.subr.bf16.mxu0 0
        %1200 = vmatpush2.bf16.msra.mxu0 %v999
        %1201 = vmatprep.subr.bf16.mxu0 0
        %1202 = vmatpush2.bf16.msra.mxu0 %v998
        %1203 = vmatprep.subr.bf16.mxu0 0
        %1204 = vmatpush2.bf16.msra.mxu0 %v997
        %1205 = vmatprep.subr.bf16.mxu0 0
        %1206 = vmatpush2.bf16.msra.mxu0 %v996
        %1207 = vmatprep.subr.bf16.mxu0 0
        %1208 = vmatpush2.bf16.msra.mxu0 %v995
        %1209 = vmatprep.subr.bf16.mxu0 0
        %1210 = vmatpush2.bf16.msra.mxu0 %v994
        %1211 = vmatprep.mubr.bf16.mxu0 %v613
        %1212 = vmatmul.mubr.bf16.gmra.mxu0 %v612
        %v1213 = vpop.f32.mrf.mxu0
        %v1214 = vadd.f32 %v1149, %v1213
        %v1215 = vpop.f32.mrf.mxu0
        %v1216 = vpop.f32.mrf.mxu0
        %v1217 = vadd.f32 %v1152, %v1216
        %v1218 = vpop.f32.mrf.mxu0
        %1219 = vmatprep.mubr.bf16.mxu0 %v622
        %1220 = vmatmul.mubr.bf16.gmra.mxu0 %v621
        %v1221 = vpop.f32.mrf.mxu0
        %v1222 = vadd.f32 %v1157, %v1221
        %v1223 = vpop.f32.mrf.mxu0
        %v1224 = vpop.f32.mrf.mxu0
        %v1225 = vadd.f32 %v1160, %v1224
        %v1226 = vpop.f32.mrf.mxu0
        %1227 = vmatprep.mubr.bf16.mxu0 %v631
        %1228 = vmatmul.mubr.bf16.gmra.mxu0 %v630
        %v1229 = vpop.f32.mrf.mxu0
        %v1230 = vadd.f32 %v1165, %v1229
        %v1231 = vpop.f32.mrf.mxu0
        %v1232 = vpop.f32.mrf.mxu0
        %v1233 = vadd.f32 %v1168, %v1232
        %v1234 = vpop.f32.mrf.mxu0
        %1235 = vmatprep.mubr.bf16.mxu0 %v640
        %1236 = vmatmul.mubr.bf16.gmra.mxu0 %v639
        %v1237 = vpop.f32.mrf.mxu0
        %v1238 = vadd.f32 %v1173, %v1237
        %v1239 = vpop.f32.mrf.mxu0
        %v1240 = vpop.f32.mrf.mxu0
        %v1241 = vadd.f32 %v1176, %v1240
        %v1242 = vpop.f32.mrf.mxu0
        %1243 = vdwg.mxu0
        %1244 = vmatprep.subr.bf16.mxu0 0
        %1245 = vmatpush1.bf16.msra.mxu0 %v1009
        %1246 = vmatprep.subr.bf16.mxu0 0
        %1247 = vmatpush1.bf16.msra.mxu0 %v1008
        %1248 = vmatprep.subr.bf16.mxu0 0
        %1249 = vmatpush1.bf16.msra.mxu0 %v1007
        %1250 = vmatprep.subr.bf16.mxu0 0
        %1251 = vmatpush1.bf16.msra.mxu0 %v1006
        %1252 = vmatprep.subr.bf16.mxu0 0
        %1253 = vmatpush1.bf16.msra.mxu0 %v1005
        %1254 = vmatprep.subr.bf16.mxu0 0
        %1255 = vmatpush1.bf16.msra.mxu0 %v1004
        %1256 = vmatprep.subr.bf16.mxu0 0
        %1257 = vmatpush1.bf16.msra.mxu0 %v1003
        %1258 = vmatprep.subr.bf16.mxu0 0
        %1259 = vmatpush1.bf16.msra.mxu0 %v1002
        %1260 = vmatprep.subr.bf16.mxu0 0
        %1261 = vmatpush2.bf16.msra.mxu0 %v1017
        %1262 = vmatprep.subr.bf16.mxu0 0
        %1263 = vmatpush2.bf16.msra.mxu0 %v1016
        %1264 = vmatprep.subr.bf16.mxu0 0
        %1265 = vmatpush2.bf16.msra.mxu0 %v1015
        %1266 = vmatprep.subr.bf16.mxu0 0
        %1267 = vmatpush2.bf16.msra.mxu0 %v1014
        %1268 = vmatprep.subr.bf16.mxu0 0
        %1269 = vmatpush2.bf16.msra.mxu0 %v1013
        %1270 = vmatprep.subr.bf16.mxu0 0
        %1271 = vmatpush2.bf16.msra.mxu0 %v1012
        %1272 = vmatprep.subr.bf16.mxu0 0
        %1273 = vmatpush2.bf16.msra.mxu0 %v1011
        %1274 = vmatprep.subr.bf16.mxu0 0
        %1275 = vmatpush2.bf16.msra.mxu0 %v1010
        %1276 = vmatprep.mubr.bf16.mxu0 %v615
        %1277 = vmatmul.mubr.bf16.gmra.mxu0 %v614
        %v1278 = vpop.f32.mrf.mxu0
        %v1279 = vadd.f32 %v1214, %v1278
        %v1280 = vpop.f32.mrf.mxu0
        %v1281 = vpop.f32.mrf.mxu0
        %v1282 = vadd.f32 %v1217, %v1281
        %v1283 = vpop.f32.mrf.mxu0
        %1284 = vmatprep.mubr.bf16.mxu0 %v624
        %1285 = vmatmul.mubr.bf16.gmra.mxu0 %v623
        %v1286 = vpop.f32.mrf.mxu0
        %v1287 = vadd.f32 %v1222, %v1286
        %v1288 = vpop.f32.mrf.mxu0
        %v1289 = vpop.f32.mrf.mxu0
        %v1290 = vadd.f32 %v1225, %v1289
        %v1291 = vpop.f32.mrf.mxu0
        %1292 = vmatprep.mubr.bf16.mxu0 %v633
        %1293 = vmatmul.mubr.bf16.gmra.mxu0 %v632
        %v1294 = vpop.f32.mrf.mxu0
        %v1295 = vadd.f32 %v1230, %v1294
        %v1296 = vpop.f32.mrf.mxu0
        %v1297 = vpop.f32.mrf.mxu0
        %v1298 = vadd.f32 %v1233, %v1297
        %v1299 = vpop.f32.mrf.mxu0
        %1300 = vmatprep.mubr.bf16.mxu0 %v642
        %1301 = vmatmul.mubr.bf16.gmra.mxu0 %v641
        %v1302 = vpop.f32.mrf.mxu0
        %v1303 = vadd.f32 %v1238, %v1302
        %v1304 = vpop.f32.mrf.mxu0
        %v1305 = vpop.f32.mrf.mxu0
        %v1306 = vadd.f32 %v1241, %v1305
        %v1307 = vpop.f32.mrf.mxu0
        %1308 = vdwg.mxu0
        %1309 = vmatprep.subr.bf16.mxu0 0
        %1310 = vmatpush1.bf16.msra.mxu0 %v1025
        %1311 = vmatprep.subr.bf16.mxu0 0
        %1312 = vmatpush1.bf16.msra.mxu0 %v1024
        %1313 = vmatprep.subr.bf16.mxu0 0
        %1314 = vmatpush1.bf16.msra.mxu0 %v1023
        %1315 = vmatprep.subr.bf16.mxu0 0
        %1316 = vmatpush1.bf16.msra.mxu0 %v1022
        %1317 = vmatprep.subr.bf16.mxu0 0
        %1318 = vmatpush1.bf16.msra.mxu0 %v1021
        %1319 = vmatprep.subr.bf16.mxu0 0
        %1320 = vmatpush1.bf16.msra.mxu0 %v1020
        %1321 = vmatprep.subr.bf16.mxu0 0
        %1322 = vmatpush1.bf16.msra.mxu0 %v1019
        %1323 = vmatprep.subr.bf16.mxu0 0
        %1324 = vmatpush1.bf16.msra.mxu0 %v1018
        %1325 = vmatprep.subr.bf16.mxu0 0
        %1326 = vmatpush2.bf16.msra.mxu0 %v1033
        %1327 = vmatprep.subr.bf16.mxu0 0
        %1328 = vmatpush2.bf16.msra.mxu0 %v1032
        %1329 = vmatprep.subr.bf16.mxu0 0
        %1330 = vmatpush2.bf16.msra.mxu0 %v1031
        %1331 = vmatprep.subr.bf16.mxu0 0
        %1332 = vmatpush2.bf16.msra.mxu0 %v1030
        %1333 = vmatprep.subr.bf16.mxu0 0
        %1334 = vmatpush2.bf16.msra.mxu0 %v1029
        %1335 = vmatprep.subr.bf16.mxu0 0
        %1336 = vmatpush2.bf16.msra.mxu0 %v1028
        %1337 = vmatprep.subr.bf16.mxu0 0
        %1338 = vmatpush2.bf16.msra.mxu0 %v1027
        %1339 = vmatprep.subr.bf16.mxu0 0
        %1340 = vmatpush2.bf16.msra.mxu0 %v1026
        %1341 = vmatprep.mubr.bf16.mxu0 %v617
        %1342 = vmatmul.mubr.bf16.gmra.mxu0 %v616
        %v1343 = vpop.f32.mrf.mxu0
        %v1344 = vadd.f32 %v1279, %v1343
        %v1345 = vpop.f32.mrf.mxu0
        %v1346 = vpop.f32.mrf.mxu0
        %v1347 = vadd.f32 %v1282, %v1346
        %v1348 = vpop.f32.mrf.mxu0
        %1349 = vmatprep.mubr.bf16.mxu0 %v626
        %1350 = vmatmul.mubr.bf16.gmra.mxu0 %v625
        %v1351 = vpop.f32.mrf.mxu0
        %v1352 = vadd.f32 %v1287, %v1351
        %v1353 = vpop.f32.mrf.mxu0
        %v1354 = vpop.f32.mrf.mxu0
        %v1355 = vadd.f32 %v1290, %v1354
        %v1356 = vpop.f32.mrf.mxu0
        %1357 = vmatprep.mubr.bf16.mxu0 %v635
        %1358 = vmatmul.mubr.bf16.gmra.mxu0 %v634
        %v1359 = vpop.f32.mrf.mxu0
        %v1360 = vadd.f32 %v1295, %v1359
        %v1361 = vpop.f32.mrf.mxu0
        %v1362 = vpop.f32.mrf.mxu0
        %v1363 = vadd.f32 %v1298, %v1362
        %v1364 = vpop.f32.mrf.mxu0
        %1365 = vmatprep.mubr.bf16.mxu0 %v644
        %1366 = vmatmul.mubr.bf16.gmra.mxu0 %v643
        %v1367 = vpop.f32.mrf.mxu0
        %v1368 = vadd.f32 %v1303, %v1367
        %v1369 = vpop.f32.mrf.mxu0
        %v1370 = vpop.f32.mrf.mxu0
        %v1371 = vadd.f32 %v1306, %v1370
        %v1372 = vpop.f32.mrf.mxu0
        %1373 = vdwg.mxu0
        %1374 = vmatprep.subr.bf16.mxu0 0
        %1375 = vmatpush1.bf16.msra.mxu0 %v1041
        %1376 = vmatprep.subr.bf16.mxu0 0
        %1377 = vmatpush1.bf16.msra.mxu0 %v1040
        %1378 = vmatprep.subr.bf16.mxu0 0
        %1379 = vmatpush1.bf16.msra.mxu0 %v1039
        %1380 = vmatprep.subr.bf16.mxu0 0
        %1381 = vmatpush1.bf16.msra.mxu0 %v1038
        %1382 = vmatprep.subr.bf16.mxu0 0
        %1383 = vmatpush1.bf16.msra.mxu0 %v1037
        %1384 = vmatprep.subr.bf16.mxu0 0
        %1385 = vmatpush1.bf16.msra.mxu0 %v1036
        %1386 = vmatprep.subr.bf16.mxu0 0
        %1387 = vmatpush1.bf16.msra.mxu0 %v1035
        %1388 = vmatprep.subr.bf16.mxu0 0
        %1389 = vmatpush1.bf16.msra.mxu0 %v1034
        %1390 = vmatprep.subr.bf16.mxu0 0
        %1391 = vmatpush2.bf16.msra.mxu0 0
        %1392 = vmatprep.subr.bf16.mxu0 0
        %1393 = vmatpush2.bf16.msra.mxu0 0
        %1394 = vmatprep.subr.bf16.mxu0 0
        %1395 = vmatpush2.bf16.msra.mxu0 0
        %1396 = vmatprep.subr.bf16.mxu0 0
        %1397 = vmatpush2.bf16.msra.mxu0 0
        %1398 = vmatprep.subr.bf16.mxu0 0
        %1399 = vmatpush2.bf16.msra.mxu0 0
        %1400 = vmatprep.subr.bf16.mxu0 0
        %1401 = vmatpush2.bf16.msra.mxu0 0
        %1402 = vmatprep.subr.bf16.mxu0 0
        %1403 = vmatpush2.bf16.msra.mxu0 0
        %1404 = vmatprep.subr.bf16.mxu0 0
        %1405 = vmatpush2.bf16.msra.mxu0 0
        %1406 = vmatprep.mubr.bf16.mxu0 0
        %1407 = vmatmul.mubr.bf16.gmra.mxu0 %v618
        %v1408 = vpop.f32.mrf.mxu0
        %v1409 = vadd.f32 %v1344, %v1408
        %v1410 = vpop.f32.mrf.mxu0
        %v1411 = vpop.f32.mrf.mxu0
        %v1412 = vadd.f32 %v1347, %v1411
        %v1413 = vpop.f32.mrf.mxu0
        %1414 = vmatprep.mubr.bf16.mxu0 0
        %1415 = vmatmul.mubr.bf16.gmra.mxu0 %v627
        %v1416 = vpop.f32.mrf.mxu0
        %v1417 = vadd.f32 %v1352, %v1416
        %v1418 = vpop.f32.mrf.mxu0
        %v1419 = vpop.f32.mrf.mxu0
        %v1420 = vadd.f32 %v1355, %v1419
        %v1421 = vpop.f32.mrf.mxu0
        %1422 = vmatprep.mubr.bf16.mxu0 0
        %1423 = vmatmul.mubr.bf16.gmra.mxu0 %v636
        %v1424 = vpop.f32.mrf.mxu0
        %v1425 = vadd.f32 %v1360, %v1424
        %v1426 = vpop.f32.mrf.mxu0
        %v1427 = vpop.f32.mrf.mxu0
        %v1428 = vadd.f32 %v1363, %v1427
        %v1429 = vpop.f32.mrf.mxu0
        %1430 = vmatprep.mubr.bf16.mxu0 0
        %1431 = vmatmul.mubr.bf16.gmra.mxu0 %v645
        %v1432 = vpop.f32.mrf.mxu0
        %v1433 = vadd.f32 %v1368, %v1432
        %v1434 = vpop.f32.mrf.mxu0
        %v1435 = vpop.f32.mrf.mxu0
        %v1436 = vadd.f32 %v1371, %v1435
        %v1437 = vpop.f32.mrf.mxu0
        %1438 = vdwg.mxu0
        %v1439 = vadd.f32 %v1409, %v1412
        %v1440 = vadd.f32 %v1439, %v1417
        %v1441 = vadd.f32 %v1440, %v1420
        %v1442 = vadd.f32 %v1441, %v1425
        %v1443 = vadd.f32 %v1442, %v1428
        %v1444 = vadd.f32 %v1443, %v1433
        %v1445 = vadd.f32 %v1444, %v1436
        %v1446 = vrot.slane %v1445, 4
        %v1447 = vadd.f32 %v1445, %v1446
        %v1448 = vrot.slane %v1447, 2
        %v1449 = vadd.f32 %v1447, %v1448
        %v1450 = vrot.slane %v1449, 1
        %v1451 = vadd.f32 %v1449, %v1450
        %v1452 = vmul.f32 %v1409, %v1409
        %v1453 = vmul.f32 %v1412, %v1412
        %v1454 = vmul.f32 %v1417, %v1417
        %v1455 = vmul.f32 %v1420, %v1420
        %v1456 = vmul.f32 %v1425, %v1425
        %v1457 = vmul.f32 %v1428, %v1428
        %v1458 = vmul.f32 %v1433, %v1433
        %v1459 = vmul.f32 %v1436, %v1436
        %v1460 = vadd.f32 %v1452, %v1453
        %v1461 = vadd.f32 %v1460, %v1454
        %v1462 = vadd.f32 %v1461, %v1455
        %v1463 = vadd.f32 %v1462, %v1456
        %v1464 = vadd.f32 %v1463, %v1457
        %v1465 = vadd.f32 %v1464, %v1458
        %v1466 = vadd.f32 %v1465, %v1459
        %v1467 = vrot.slane %v1466, 4
        %v1468 = vadd.f32 %v1466, %v1467
        %v1469 = vrot.slane %v1468, 2
        %v1470 = vadd.f32 %v1468, %v1469
        %v1471 = vrot.slane %v1470, 1
        %v1472 = vadd.f32 %v1470, %v1471
        %v1473 = vmul.f32 %v1451, 0.015625
        %v1474 = vmul.f32 %v1472, 0.015625
        %v1475 = vmul.f32 %v1473, %v1473
        %v1476 = vsub.f32 %v1474, %v1475
        %v1477 = vmax.f32 %v1476, 0.0
        %v1478 = vld [vmem:[%s301] sm:$0x1]
        %v1479 = vadd.f32 %v1477, 1e-05
        %v1480 = vrsqrt.pop %v1479
        %v1481 = vmul.f32 %v1478, %v1480
        %v1482 = vld [vmem:[%s304] sm:$0x1]
        %v1483 = vmul.f32 %v1473, %v1481
        %v1484 = vsub.f32 %v1482, %v1483
        %v1486 = vlaneseq
        %v1487 = vshrl.u32 %v1486, 7
        %v1488 = vsub.s32 0, %v1487
        %v1489 = vrot.slane %v1481, %v1488
        %v1491 = vmul.f32 %v1409, %v1489
        %v1492 = vmul.f32 %v1412, %v1489
        %v1493 = vmul.f32 %v1417, %v1489
        %v1494 = vmul.f32 %v1420, %v1489
        %v1495 = vmul.f32 %v1425, %v1489
        %v1496 = vmul.f32 %v1428, %v1489
        %v1497 = vmul.f32 %v1433, %v1489
        %v1498 = vmul.f32 %v1436, %v1489
        %v1500 = vlaneseq
        %v1501 = vshrl.u32 %v1500, 7
        %v1502 = vsub.s32 0, %v1501
        %v1503 = vrot.slane %v1484, %v1502
        %v1505 = vadd.f32 %v1491, %v1503
        %v1506 = vadd.f32 %v1492, %v1503
        %v1507 = vadd.f32 %v1493, %v1503
        %v1508 = vadd.f32 %v1494, %v1503
        %v1509 = vadd.f32 %v1495, %v1503
        %v1510 = vadd.f32 %v1496, %v1503
        %v1511 = vadd.f32 %v1497, %v1503
        %v1512 = vadd.f32 %v1498, %v1503
        %v1513 = vld [vmem:[%s312] sm:$0xf]
        %v1514 = vld [vmem:[%s312 + $0x4] sm:$0xf]
        %v1515 = vld [vmem:[%s312 + $0x8] sm:$0xf]
        %v1516 = vld [vmem:[%s312 + $0xc] sm:$0xf]
        %v1517 = vld [vmem:[%s312 + $0x10] sm:$0xf]
        %v1518 = vld [vmem:[%s312 + $0x14] sm:$0xf]
        %v1519 = vld [vmem:[%s312 + $0x18] sm:$0xf]
        %v1520 = vld [vmem:[%s312 + $0x1c] sm:$0xf]
        %v1521 = vunpack.c.l.bf16 %v1513
        %v1522 = vunpack.c.l.bf16 %v1514
        %v1523 = vunpack.c.l.bf16 %v1515
        %v1524 = vunpack.c.l.bf16 %v1516
        %v1525 = vunpack.c.l.bf16 %v1517
        %v1526 = vunpack.c.l.bf16 %v1518
        %v1527 = vunpack.c.l.bf16 %v1519
        %v1528 = vunpack.c.l.bf16 %v1520
        %v1529 = vadd.f32 %v1505, %v1521
        %v1530 = vadd.f32 %v1506, %v1522
        %v1531 = vadd.f32 %v1507, %v1523
        %v1532 = vadd.f32 %v1508, %v1524
        %v1533 = vadd.f32 %v1509, %v1525
        %v1534 = vadd.f32 %v1510, %v1526
        %v1535 = vadd.f32 %v1511, %v1527
        %v1536 = vadd.f32 %v1512, %v1528
        %v1537 = vmax.f32 %v1529, 0.0
        %v1538 = vmax.f32 %v1530, 0.0
        %v1539 = vmax.f32 %v1531, 0.0
        %v1540 = vmax.f32 %v1532, 0.0
        %v1541 = vmax.f32 %v1533, 0.0
        %v1542 = vmax.f32 %v1534, 0.0
        %v1543 = vmax.f32 %v1535, 0.0
        %v1544 = vmax.f32 %v1536, 0.0
        %1545 = vst [vmem:[%s289] sm:$0xff] %v1537
        %1546 = vst [vmem:[%s289 + $0x8] sm:$0xff] %v1538
        %1547 = vst [vmem:[%s289 + $0x10] sm:$0xff] %v1539
        %1548 = vst [vmem:[%s289 + $0x18] sm:$0xff] %v1540
        %1549 = vst [vmem:[%s289 + $0x20] sm:$0xff] %v1541
        %1550 = vst [vmem:[%s289 + $0x28] sm:$0xff] %v1542
        %1551 = vst [vmem:[%s289 + $0x30] sm:$0xff] %v1543
        %1552 = vst [vmem:[%s289 + $0x38] sm:$0xff] %v1544
        %s1553 = sand.u32 %s173, 1
        %s1554 = scalar_lea.sflag [#allocation3], %s1553
        %s1555 = sand.u32 %s173, 1
        %s1556 = smul.addr %s1555, 64
        %s1557 = scalar_lea.vmem [#allocation2], %s1556
        // Predicated region
        $region41: #{basic_block_ap_forward.5} parent=39 // pred_check
          %p1558 = pneg %p183
        $region42: #{basic_block_ap_forward.5} parent=39 // pred_check_branch
          %1560 = sbr.rel (%p1558) target = $region44
        $region43: #{basic_block_ap_forward.5} parent=39 // pred_region
          %s1562 = ssub.s32 1024, 1024
          %1563 = vsyncadd %s1554, %s1562
          %s1564 = smul.addr %s23, 8
          %s1565 = sadd.s32 %s24, %s1564
          %s1566 = smul.addr %s1565, 128
          %s1567 = scalar_lea.hbm %s5, %s1566
          %s1568 = sshll.u32 %s1557, 4
          %s1569 = int_to_ptr.vmem [resolvable:$true] %s1568
          %1574 = dma.vmem_to_hbm [thread:$0]  %s1569, 1024, %s1567, %s1554, 128, 128, 8
        $region44: #{basic_block_ap_forward.5} parent=39 // pred_fallthru
          _
      $region40: #{basic_block_ap_forward.5} parent=5 // pred_fallthru
        _
      %p1575 = scmp.le.s32.totalorder 2, %s14
      // Predicated region
      $region45: #{basic_block_ap_forward.5} parent=5 // pred_check
        %p1576 = pneg %p1575
      $region46: #{basic_block_ap_forward.5} parent=5 // pred_check_branch
        %1578 = sbr.rel (%p1576) target = $region48
      $region47: #{basic_block_ap_forward.5} parent=5 // pred_region
        %s1579 = ssub.s32 %s14, 2
        // Predicated region
        $region49: #{basic_block_ap_forward.5} parent=47 // pred_check
          %p1580 = pneg %p189
        $region50: #{basic_block_ap_forward.5} parent=47 // pred_check_branch
          %1582 = sbr.rel (%p1580) target = $region52
        $region51: #{basic_block_ap_forward.5} parent=47 // pred_region
          %s1583 = sand.u32 %s174, 1
          %s1584 = scalar_lea.sflag [#allocation3], %s1583
          %s1585 = sand.u32 %s174, 1
          %s1586 = smul.addr %s1585, 64
          %s1587 = scalar_lea.vmem [#allocation2], %s1586
          %1588 = dma.done %s1584, 1024
        $region52: #{basic_block_ap_forward.5} parent=47 // pred_fallthru
          _
      $region48: #{basic_block_ap_forward.5} parent=5 // pred_fallthru
        _
    $region6: #{basic_block_ap_forward.5} parent=1 // loop_footer
      %s18 = sadd.s32 1, %s14
    $region7: #{basic_block_ap_forward.5} parent=1 // loop_footer_branch
      %13 = sbr.rel target = $region3
    $region8: #{basic_block_ap_forward.5} parent=1 // loop_exit
      _
    %1589 = vsyncpa [#allocation3], 1
    %s1590 = scalar_lea.sflag [#allocation3], 1
    %1591 = vsyncpa %s1590, 1

</llo_original>
